<compile_context>
chip_gen: v7x
topology: tpu7x:2x2x1
jax: 0.10.0
libtpu: 0.0.40
codegen_flags: <defaults>
</compile_context>

<pallas_src>
import jax
import jax.numpy as jnp
from jax.experimental import pallas as pl
from jax.experimental.pallas import tpu as pltpu

HIDDEN_DIM = 128
INPUT_DIM = 28
LAYER_DIM = 1          # only 1 layer supported in this kernel (matches module)
OUTPUT_DIM = 10


def rnn_fc_kernel(x_ref, wih_ref, whh_ref, b_ref, wfc_ref, bfc_ref,
                  out_ref, h_ref, pre_ref):
    """One grid step == one time chunk of Tc steps.

    x_ref   : (Tc*Bp, Din)  time-major, batch flattened into rows
    pre_ref : (Tc*Bp, H)    VMEM scratch for the hoisted input projection
    h_ref   : (Bp, H)       VMEM scratch, persists across chunks
    """
    c = pl.program_id(0)
    n_rows, _ = pre_ref.shape
    bp = h_ref.shape[0]
    tc = n_rows // bp

    @pl.when(c == 0)
    def _():
        h_ref[...] = jnp.zeros_like(h_ref)

    # Hoisted input projection: one big GEMM per chunk (not on the serial
    # critical path per-step), with the folded bias broadcast exactly once.
    pre_ref[...] = (jnp.dot(x_ref[...], wih_ref[...],
                            preferred_element_type=jnp.float32)
                    + b_ref[...])

    def step(t, h):
        r = pl.multiple_of(t * bp, bp)
        p_t = pre_ref[pl.ds(r, bp), :]                       # (Bp, H)
        return jnp.maximum(
            p_t + jnp.dot(h, whh_ref[...],
                          preferred_element_type=jnp.float32),
            0.0)                                             # relu

    h_ref[...] = jax.lax.fori_loop(0, tc, step, h_ref[...], unroll=True)

    @pl.when(c == pl.num_programs(0) - 1)
    def _():
        # Final FC head fused on the last chunk only (output block is written
        # exactly once; constant out index_map defers writeback to the end).
        out_ref[...] = (jnp.dot(h_ref[...], wfc_ref[...],
                                preferred_element_type=jnp.float32)
                        + bfc_ref[...]).astype(out_ref.dtype)


def _pick_time_chunk(T, max_tc):
    if T <= max_tc:
        return T
    for tc in range(max_tc, 0, -1):
        if T % tc == 0:
            return tc
    return 1


def rnn_imc_forward(x_btd, params, *, max_time_chunk=32):
    """x_btd: (B, T, D_in) float32 (batch_first, like PyTorch)."""
    w_ih, w_hh, b_ih, b_hh, w_fc, b_fc = params
    B, T, Din = x_btd.shape
    H = w_ih.shape[0]
    O = w_fc.shape[0]

    # Pad batch up to a sublane multiple (>= 8); padded rows dropped at the end.
    Bp = max(8, ((B + 7) // 8) * 8)
    if Bp != B:
        x_btd = jnp.pad(x_btd, ((0, Bp - B), (0, 0), (0, 0)))

    Tc = _pick_time_chunk(T, max_time_chunk)
    n_chunks = T // Tc

    # Time-major, batch flattened: (T*Bp, Din). Chunk c owns rows
    # [c*Tc*Bp, (c+1)*Tc*Bp).  All reshapes/transposes live in the wrapper.
    x_flat = jnp.transpose(x_btd, (1, 0, 2)).reshape(T * Bp, Din)

    wih_t = w_ih.T                                   # (D_in, H)
    whh_t = w_hh.T                                   # (H, H)
    b_sum = (b_ih + b_hh).reshape(1, H)              # (1, H)  (fold both biases)
    wfc_t = w_fc.T                                   # (H, O)
    bfc = b_fc.reshape(1, O)                         # (1, O)

    out_p = pl.pallas_call(
        rnn_fc_kernel,
        out_shape=jax.ShapeDtypeStruct((Bp, O), jnp.float32),
        grid_spec=pltpu.PrefetchScalarGridSpec(
            num_scalar_prefetch=0,
            grid=(n_chunks,),
            in_specs=[
                pl.BlockSpec((Tc * Bp, Din), lambda c: (c, 0)),   # x chunk
                pl.BlockSpec((Din, H), lambda c: (0, 0)),         # W_ih^T
                pl.BlockSpec((H, H), lambda c: (0, 0)),           # W_hh^T
                pl.BlockSpec((1, H), lambda c: (0, 0)),           # b_ih + b_hh
                pl.BlockSpec((H, O), lambda c: (0, 0)),           # W_fc^T
                pl.BlockSpec((1, O), lambda c: (0, 0)),           # b_fc
            ],
            out_specs=pl.BlockSpec((Bp, O), lambda c: (0, 0)),
            scratch_shapes=[
                pltpu.VMEM((Bp, H), jnp.float32),         # hidden state h
                pltpu.VMEM((Tc * Bp, H), jnp.float32),    # pre-activation chunk
            ],
        ),
        compiler_params=pltpu.CompilerParams(
            dimension_semantics=("arbitrary",)),   # sequential over time chunks
    )(x_flat, wih_t, whh_t, b_sum, wfc_t, bfc)

    return out_p[:B]


def init_params(key, input_dim=INPUT_DIM, hidden_dim=HIDDEN_DIM,
                output_dim=OUTPUT_DIM):
    ks = jax.random.split(key, 6)
    k_rnn = 1.0 / jnp.sqrt(hidden_dim)
    k_fc = 1.0 / jnp.sqrt(hidden_dim)
    w_ih = jax.random.uniform(ks[0], (hidden_dim, input_dim),
                              minval=-k_rnn, maxval=k_rnn, dtype=jnp.float32)
    w_hh = jax.random.uniform(ks[1], (hidden_dim, hidden_dim),
                              minval=-k_rnn, maxval=k_rnn, dtype=jnp.float32)
    b_ih = jax.random.uniform(ks[2], (hidden_dim,),
                              minval=-k_rnn, maxval=k_rnn, dtype=jnp.float32)
    b_hh = jax.random.uniform(ks[3], (hidden_dim,),
                              minval=-k_rnn, maxval=k_rnn, dtype=jnp.float32)
    w_fc = jax.random.uniform(ks[4], (output_dim, hidden_dim),
                              minval=-k_fc, maxval=k_fc, dtype=jnp.float32)
    b_fc = jax.random.uniform(ks[5], (output_dim,),
                              minval=-k_fc, maxval=k_fc, dtype=jnp.float32)
    return (w_ih, w_hh, b_ih, b_hh, w_fc, b_fc)


def reference_forward(x_btd, params):
    """Pure-JAX reference of the PyTorch forward pass (for verification)."""
    w_ih, w_hh, b_ih, b_hh, w_fc, b_fc = params
    B, T, _ = x_btd.shape
    H = w_ih.shape[0]
    h = jnp.zeros((B, H), jnp.float32)

    def step(h, x_t):
        h_new = jnp.maximum(x_t @ w_ih.T + b_ih + h @ w_hh.T + b_hh, 0.0)
        return h_new, None

    h_last, _ = jax.lax.scan(step, h, jnp.transpose(x_btd, (1, 0, 2)))
    return h_last @ w_fc.T + b_fc


if __name__ == "__main__":
    key = jax.random.PRNGKey(0)
    k_x, k_p = jax.random.split(key)

    B, T = 2, 28                                  # e.g. 28 rows of a 28-px image
    x = jax.random.normal(k_x, (B, T, INPUT_DIM), dtype=jnp.float32)
    params = init_params(k_p)

    out = rnn_imc_forward(x, params)
    out = jax.block_until_ready(out)

    ref = jax.block_until_ready(reference_forward(x, params))
    assert out.shape == (B, OUTPUT_DIM)
    assert jnp.allclose(out, ref, atol=1e-4, rtol=1e-4), "mismatch vs reference"

    print("KERNEL_OK")
</pallas_src>

<mosaic_0001>
module attributes {stable_mosaic.version = 11 : i64} {
  func.func @rnn_fc_kernel(%arg0: i32, %arg1: memref<224x28xf32, #tpu.memory_space<vmem>>, %arg2: memref<28x128xf32, #tpu.memory_space<vmem>>, %arg3: memref<128x128xf32, #tpu.memory_space<vmem>>, %arg4: memref<1x128xf32, #tpu.memory_space<vmem>>, %arg5: memref<128x10xf32, #tpu.memory_space<vmem>>, %arg6: memref<1x10xf32, #tpu.memory_space<vmem>>, %arg7: memref<8x10xf32, #tpu.memory_space<vmem>>, %arg8: memref<8x128xf32, #tpu.memory_space<vmem>>, %arg9: memref<224x128xf32, #tpu.memory_space<vmem>>) attributes {dimension_semantics = [#tpu.dimension_semantics<arbitrary>], iteration_bounds = array<i64: 1>, scalar_prefetch = 0 : i64, scratch_operands = 2 : i64, tpu.core_type = #tpu.core_type<tc>, window_params = [{transform_indices = @transform_0, window_bounds = array<i64: 224, 28>}, {pipeline_mode = #tpu.pipeline_mode<synchronous>, transform_indices = @transform_1, window_bounds = array<i64: 28, 128>}, {pipeline_mode = #tpu.pipeline_mode<synchronous>, transform_indices = @transform_2, window_bounds = array<i64: 128, 128>}, {pipeline_mode = #tpu.pipeline_mode<synchronous>, transform_indices = @transform_3, window_bounds = array<i64: 1, 128>}, {pipeline_mode = #tpu.pipeline_mode<synchronous>, transform_indices = @transform_4, window_bounds = array<i64: 128, 10>}, {pipeline_mode = #tpu.pipeline_mode<synchronous>, transform_indices = @transform_5, window_bounds = array<i64: 1, 10>}, {pipeline_mode = #tpu.pipeline_mode<synchronous>, transform_indices = @transform_6, window_bounds = array<i64: 8, 10>}]} {
    %c0_i32 = arith.constant 0 : i32
    %0 = arith.cmpi eq, %arg0, %c0_i32 : i32
    %1 = arith.extui %0 : i1 to i32
    %c0_i32_0 = arith.constant 0 : i32
    %2 = arith.cmpi ne, %1, %c0_i32_0 : i32
    scf.if %2 {
      %cst_183 = arith.constant 0.000000e+00 : f32
      %267 = vector.broadcast %cst_183 : f32 to vector<8x128xf32>
      %c0_184 = arith.constant 0 : index
      %c0_185 = arith.constant 0 : index
      %268 = vector.load %arg8[%c0_184, %c0_185] : memref<8x128xf32, #tpu.memory_space<vmem>>, vector<8x128xf32>
      tpu.vector_store %arg8[%c0_184, %c0_185], %267 {strides = array<i32>} : memref<8x128xf32, #tpu.memory_space<vmem>>, vector<8x128xf32>,
    } else {
    }
    %c0 = arith.constant 0 : index
    %c0_1 = arith.constant 0 : index
    %3 = vector.load %arg1[%c0, %c0_1] : memref<224x28xf32, #tpu.memory_space<vmem>>, vector<224x28xf32>
    %c0_2 = arith.constant 0 : index
    %c0_3 = arith.constant 0 : index
    %4 = vector.load %arg2[%c0_2, %c0_3] : memref<28x128xf32, #tpu.memory_space<vmem>>, vector<28x128xf32>
    %cst = arith.constant dense<0.000000e+00> : vector<224x128xf32>
    %5 = tpu.matmul %3, %4, %cst {dimension_numbers = #tpu.dot_dimension_numbers<[1], [0], [0], [1], [0, 0, 1, 1], [], []>} : vector<224x28xf32>, vector<28x128xf32>, vector<224x128xf32> -> vector<224x128xf32>
    %c0_4 = arith.constant 0 : index
    %c0_5 = arith.constant 0 : index
    %6 = vector.load %arg4[%c0_4, %c0_5] : memref<1x128xf32, #tpu.memory_space<vmem>>, vector<1x128xf32>
    %7 = vector.broadcast %6 : vector<1x128xf32> to vector<224x128xf32>
    %8 = arith.addf %5, %7 : vector<224x128xf32>
    %c0_6 = arith.constant 0 : index
    %c0_7 = arith.constant 0 : index
    %9 = vector.load %arg9[%c0_6, %c0_7] : memref<224x128xf32, #tpu.memory_space<vmem>>, vector<224x128xf32>
    tpu.vector_store %arg9[%c0_6, %c0_7], %8 {strides = array<i32>} : memref<224x128xf32, #tpu.memory_space<vmem>>, vector<224x128xf32>,
    %c0_8 = arith.constant 0 : index
    %c0_9 = arith.constant 0 : index
    %10 = vector.load %arg8[%c0_8, %c0_9] : memref<8x128xf32, #tpu.memory_space<vmem>>, vector<8x128xf32>
    %c0_i32_10 = arith.constant 0 : i32
    %c8_i32 = arith.constant 8 : i32
    %11 = arith.muli %c0_i32_10, %c8_i32 : i32
    %12 = tpu.assume_multiple %11, 8 : i32
    %13 = arith.index_cast %12 : i32 to index
    %c0_11 = arith.constant 0 : index
    %14 = vector.load %arg9[%13, %c0_11] : memref<224x128xf32, #tpu.memory_space<vmem>>, vector<8x128xf32>
    %c0_12 = arith.constant 0 : index
    %c0_13 = arith.constant 0 : index
    %15 = vector.load %arg3[%c0_12, %c0_13] : memref<128x128xf32, #tpu.memory_space<vmem>>, vector<128x128xf32>
    %cst_14 = arith.constant dense<0.000000e+00> : vector<8x128xf32>
    %16 = tpu.matmul %10, %15, %cst_14 {dimension_numbers = #tpu.dot_dimension_numbers<[1], [0], [0], [1], [0, 0, 1, 1], [], []>} : vector<8x128xf32>, vector<128x128xf32>, vector<8x128xf32> -> vector<8x128xf32>
    %17 = arith.addf %14, %16 : vector<8x128xf32>
    %cst_15 = arith.constant 0.000000e+00 : f32
    %18 = vector.broadcast %cst_15 : f32 to vector<8x128xf32>
    %19 = arith.maximumf %17, %18 : vector<8x128xf32>
    %c1_i32 = arith.constant 1 : i32
    %c8_i32_16 = arith.constant 8 : i32
    %20 = arith.muli %c1_i32, %c8_i32_16 : i32
    %21 = tpu.assume_multiple %20, 8 : i32
    %22 = arith.index_cast %21 : i32 to index
    %c0_17 = arith.constant 0 : index
    %23 = vector.load %arg9[%22, %c0_17] : memref<224x128xf32, #tpu.memory_space<vmem>>, vector<8x128xf32>
    %c0_18 = arith.constant 0 : index
    %c0_19 = arith.constant 0 : index
    %24 = vector.load %arg3[%c0_18, %c0_19] : memref<128x128xf32, #tpu.memory_space<vmem>>, vector<128x128xf32>
    %cst_20 = arith.constant dense<0.000000e+00> : vector<8x128xf32>
    %25 = tpu.matmul %19, %24, %cst_20 {dimension_numbers = #tpu.dot_dimension_numbers<[1], [0], [0], [1], [0, 0, 1, 1], [], []>} : vector<8x128xf32>, vector<128x128xf32>, vector<8x128xf32> -> vector<8x128xf32>
    %26 = arith.addf %23, %25 : vector<8x128xf32>
    %cst_21 = arith.constant 0.000000e+00 : f32
    %27 = vector.broadcast %cst_21 : f32 to vector<8x128xf32>
    %28 = arith.maximumf %26, %27 : vector<8x128xf32>
    %c2_i32 = arith.constant 2 : i32
    %c8_i32_22 = arith.constant 8 : i32
    %29 = arith.muli %c2_i32, %c8_i32_22 : i32
    %30 = tpu.assume_multiple %29, 8 : i32
    %31 = arith.index_cast %30 : i32 to index
    %c0_23 = arith.constant 0 : index
    %32 = vector.load %arg9[%31, %c0_23] : memref<224x128xf32, #tpu.memory_space<vmem>>, vector<8x128xf32>
    %c0_24 = arith.constant 0 : index
    %c0_25 = arith.constant 0 : index
    %33 = vector.load %arg3[%c0_24, %c0_25] : memref<128x128xf32, #tpu.memory_space<vmem>>, vector<128x128xf32>
    %cst_26 = arith.constant dense<0.000000e+00> : vector<8x128xf32>
    %34 = tpu.matmul %28, %33, %cst_26 {dimension_numbers = #tpu.dot_dimension_numbers<[1], [0], [0], [1], [0, 0, 1, 1], [], []>} : vector<8x128xf32>, vector<128x128xf32>, vector<8x128xf32> -> vector<8x128xf32>
    %35 = arith.addf %32, %34 : vector<8x128xf32>
    %cst_27 = arith.constant 0.000000e+00 : f32
    %36 = vector.broadcast %cst_27 : f32 to vector<8x128xf32>
    %37 = arith.maximumf %35, %36 : vector<8x128xf32>
    %c3_i32 = arith.constant 3 : i32
    %c8_i32_28 = arith.constant 8 : i32
    %38 = arith.muli %c3_i32, %c8_i32_28 : i32
    %39 = tpu.assume_multiple %38, 8 : i32
    %40 = arith.index_cast %39 : i32 to index
    %c0_29 = arith.constant 0 : index
    %41 = vector.load %arg9[%40, %c0_29] : memref<224x128xf32, #tpu.memory_space<vmem>>, vector<8x128xf32>
    %c0_30 = arith.constant 0 : index
    %c0_31 = arith.constant 0 : index
    %42 = vector.load %arg3[%c0_30, %c0_31] : memref<128x128xf32, #tpu.memory_space<vmem>>, vector<128x128xf32>
    %cst_32 = arith.constant dense<0.000000e+00> : vector<8x128xf32>
    %43 = tpu.matmul %37, %42, %cst_32 {dimension_numbers = #tpu.dot_dimension_numbers<[1], [0], [0], [1], [0, 0, 1, 1], [], []>} : vector<8x128xf32>, vector<128x128xf32>, vector<8x128xf32> -> vector<8x128xf32>
    %44 = arith.addf %41, %43 : vector<8x128xf32>
    %cst_33 = arith.constant 0.000000e+00 : f32
    %45 = vector.broadcast %cst_33 : f32 to vector<8x128xf32>
    %46 = arith.maximumf %44, %45 : vector<8x128xf32>
    %c4_i32 = arith.constant 4 : i32
    %c8_i32_34 = arith.constant 8 : i32
    %47 = arith.muli %c4_i32, %c8_i32_34 : i32
    %48 = tpu.assume_multiple %47, 8 : i32
    %49 = arith.index_cast %48 : i32 to index
    %c0_35 = arith.constant 0 : index
    %50 = vector.load %arg9[%49, %c0_35] : memref<224x128xf32, #tpu.memory_space<vmem>>, vector<8x128xf32>
    %c0_36 = arith.constant 0 : index
    %c0_37 = arith.constant 0 : index
    %51 = vector.load %arg3[%c0_36, %c0_37] : memref<128x128xf32, #tpu.memory_space<vmem>>, vector<128x128xf32>
    %cst_38 = arith.constant dense<0.000000e+00> : vector<8x128xf32>
    %52 = tpu.matmul %46, %51, %cst_38 {dimension_numbers = #tpu.dot_dimension_numbers<[1], [0], [0], [1], [0, 0, 1, 1], [], []>} : vector<8x128xf32>, vector<128x128xf32>, vector<8x128xf32> -> vector<8x128xf32>
    %53 = arith.addf %50, %52 : vector<8x128xf32>
    %cst_39 = arith.constant 0.000000e+00 : f32
    %54 = vector.broadcast %cst_39 : f32 to vector<8x128xf32>
    %55 = arith.maximumf %53, %54 : vector<8x128xf32>
    %c5_i32 = arith.constant 5 : i32
    %c8_i32_40 = arith.constant 8 : i32
    %56 = arith.muli %c5_i32, %c8_i32_40 : i32
    %57 = tpu.assume_multiple %56, 8 : i32
    %58 = arith.index_cast %57 : i32 to index
    %c0_41 = arith.constant 0 : index
    %59 = vector.load %arg9[%58, %c0_41] : memref<224x128xf32, #tpu.memory_space<vmem>>, vector<8x128xf32>
    %c0_42 = arith.constant 0 : index
    %c0_43 = arith.constant 0 : index
    %60 = vector.load %arg3[%c0_42, %c0_43] : memref<128x128xf32, #tpu.memory_space<vmem>>, vector<128x128xf32>
    %cst_44 = arith.constant dense<0.000000e+00> : vector<8x128xf32>
    %61 = tpu.matmul %55, %60, %cst_44 {dimension_numbers = #tpu.dot_dimension_numbers<[1], [0], [0], [1], [0, 0, 1, 1], [], []>} : vector<8x128xf32>, vector<128x128xf32>, vector<8x128xf32> -> vector<8x128xf32>
    %62 = arith.addf %59, %61 : vector<8x128xf32>
    %cst_45 = arith.constant 0.000000e+00 : f32
    %63 = vector.broadcast %cst_45 : f32 to vector<8x128xf32>
    %64 = arith.maximumf %62, %63 : vector<8x128xf32>
    %c6_i32 = arith.constant 6 : i32
    %c8_i32_46 = arith.constant 8 : i32
    %65 = arith.muli %c6_i32, %c8_i32_46 : i32
    %66 = tpu.assume_multiple %65, 8 : i32
    %67 = arith.index_cast %66 : i32 to index
    %c0_47 = arith.constant 0 : index
    %68 = vector.load %arg9[%67, %c0_47] : memref<224x128xf32, #tpu.memory_space<vmem>>, vector<8x128xf32>
    %c0_48 = arith.constant 0 : index
    %c0_49 = arith.constant 0 : index
    %69 = vector.load %arg3[%c0_48, %c0_49] : memref<128x128xf32, #tpu.memory_space<vmem>>, vector<128x128xf32>
    %cst_50 = arith.constant dense<0.000000e+00> : vector<8x128xf32>
    %70 = tpu.matmul %64, %69, %cst_50 {dimension_numbers = #tpu.dot_dimension_numbers<[1], [0], [0], [1], [0, 0, 1, 1], [], []>} : vector<8x128xf32>, vector<128x128xf32>, vector<8x128xf32> -> vector<8x128xf32>
    %71 = arith.addf %68, %70 : vector<8x128xf32>
    %cst_51 = arith.constant 0.000000e+00 : f32
    %72 = vector.broadcast %cst_51 : f32 to vector<8x128xf32>
    %73 = arith.maximumf %71, %72 : vector<8x128xf32>
    %c7_i32 = arith.constant 7 : i32
    %c8_i32_52 = arith.constant 8 : i32
    %74 = arith.muli %c7_i32, %c8_i32_52 : i32
    %75 = tpu.assume_multiple %74, 8 : i32
    %76 = arith.index_cast %75 : i32 to index
    %c0_53 = arith.constant 0 : index
    %77 = vector.load %arg9[%76, %c0_53] : memref<224x128xf32, #tpu.memory_space<vmem>>, vector<8x128xf32>
    %c0_54 = arith.constant 0 : index
    %c0_55 = arith.constant 0 : index
    %78 = vector.load %arg3[%c0_54, %c0_55] : memref<128x128xf32, #tpu.memory_space<vmem>>, vector<128x128xf32>
    %cst_56 = arith.constant dense<0.000000e+00> : vector<8x128xf32>
    %79 = tpu.matmul %73, %78, %cst_56 {dimension_numbers = #tpu.dot_dimension_numbers<[1], [0], [0], [1], [0, 0, 1, 1], [], []>} : vector<8x128xf32>, vector<128x128xf32>, vector<8x128xf32> -> vector<8x128xf32>
    %80 = arith.addf %77, %79 : vector<8x128xf32>
    %cst_57 = arith.constant 0.000000e+00 : f32
    %81 = vector.broadcast %cst_57 : f32 to vector<8x128xf32>
    %82 = arith.maximumf %80, %81 : vector<8x128xf32>
    %c8_i32_58 = arith.constant 8 : i32
    %c8_i32_59 = arith.constant 8 : i32
    %83 = arith.muli %c8_i32_58, %c8_i32_59 : i32
    %84 = tpu.assume_multiple %83, 8 : i32
    %85 = arith.index_cast %84 : i32 to index
    %c0_60 = arith.constant 0 : index
    %86 = vector.load %arg9[%85, %c0_60] : memref<224x128xf32, #tpu.memory_space<vmem>>, vector<8x128xf32>
    %c0_61 = arith.constant 0 : index
    %c0_62 = arith.constant 0 : index
    %87 = vector.load %arg3[%c0_61, %c0_62] : memref<128x128xf32, #tpu.memory_space<vmem>>, vector<128x128xf32>
    %cst_63 = arith.constant dense<0.000000e+00> : vector<8x128xf32>
    %88 = tpu.matmul %82, %87, %cst_63 {dimension_numbers = #tpu.dot_dimension_numbers<[1], [0], [0], [1], [0, 0, 1, 1], [], []>} : vector<8x128xf32>, vector<128x128xf32>, vector<8x128xf32> -> vector<8x128xf32>
    %89 = arith.addf %86, %88 : vector<8x128xf32>
    %cst_64 = arith.constant 0.000000e+00 : f32
    %90 = vector.broadcast %cst_64 : f32 to vector<8x128xf32>
    %91 = arith.maximumf %89, %90 : vector<8x128xf32>
    %c9_i32 = arith.constant 9 : i32
    %c8_i32_65 = arith.constant 8 : i32
    %92 = arith.muli %c9_i32, %c8_i32_65 : i32
    %93 = tpu.assume_multiple %92, 8 : i32
    %94 = arith.index_cast %93 : i32 to index
    %c0_66 = arith.constant 0 : index
    %95 = vector.load %arg9[%94, %c0_66] : memref<224x128xf32, #tpu.memory_space<vmem>>, vector<8x128xf32>
    %c0_67 = arith.constant 0 : index
    %c0_68 = arith.constant 0 : index
    %96 = vector.load %arg3[%c0_67, %c0_68] : memref<128x128xf32, #tpu.memory_space<vmem>>, vector<128x128xf32>
    %cst_69 = arith.constant dense<0.000000e+00> : vector<8x128xf32>
    %97 = tpu.matmul %91, %96, %cst_69 {dimension_numbers = #tpu.dot_dimension_numbers<[1], [0], [0], [1], [0, 0, 1, 1], [], []>} : vector<8x128xf32>, vector<128x128xf32>, vector<8x128xf32> -> vector<8x128xf32>
    %98 = arith.addf %95, %97 : vector<8x128xf32>
    %cst_70 = arith.constant 0.000000e+00 : f32
    %99 = vector.broadcast %cst_70 : f32 to vector<8x128xf32>
    %100 = arith.maximumf %98, %99 : vector<8x128xf32>
    %c10_i32 = arith.constant 10 : i32
    %c8_i32_71 = arith.constant 8 : i32
    %101 = arith.muli %c10_i32, %c8_i32_71 : i32
    %102 = tpu.assume_multiple %101, 8 : i32
    %103 = arith.index_cast %102 : i32 to index
    %c0_72 = arith.constant 0 : index
    %104 = vector.load %arg9[%103, %c0_72] : memref<224x128xf32, #tpu.memory_space<vmem>>, vector<8x128xf32>
    %c0_73 = arith.constant 0 : index
    %c0_74 = arith.constant 0 : index
    %105 = vector.load %arg3[%c0_73, %c0_74] : memref<128x128xf32, #tpu.memory_space<vmem>>, vector<128x128xf32>
    %cst_75 = arith.constant dense<0.000000e+00> : vector<8x128xf32>
    %106 = tpu.matmul %100, %105, %cst_75 {dimension_numbers = #tpu.dot_dimension_numbers<[1], [0], [0], [1], [0, 0, 1, 1], [], []>} : vector<8x128xf32>, vector<128x128xf32>, vector<8x128xf32> -> vector<8x128xf32>
    %107 = arith.addf %104, %106 : vector<8x128xf32>
    %cst_76 = arith.constant 0.000000e+00 : f32
    %108 = vector.broadcast %cst_76 : f32 to vector<8x128xf32>
    %109 = arith.maximumf %107, %108 : vector<8x128xf32>
    %c11_i32 = arith.constant 11 : i32
    %c8_i32_77 = arith.constant 8 : i32
    %110 = arith.muli %c11_i32, %c8_i32_77 : i32
    %111 = tpu.assume_multiple %110, 8 : i32
    %112 = arith.index_cast %111 : i32 to index
    %c0_78 = arith.constant 0 : index
    %113 = vector.load %arg9[%112, %c0_78] : memref<224x128xf32, #tpu.memory_space<vmem>>, vector<8x128xf32>
    %c0_79 = arith.constant 0 : index
    %c0_80 = arith.constant 0 : index
    %114 = vector.load %arg3[%c0_79, %c0_80] : memref<128x128xf32, #tpu.memory_space<vmem>>, vector<128x128xf32>
    %cst_81 = arith.constant dense<0.000000e+00> : vector<8x128xf32>
    %115 = tpu.matmul %109, %114, %cst_81 {dimension_numbers = #tpu.dot_dimension_numbers<[1], [0], [0], [1], [0, 0, 1, 1], [], []>} : vector<8x128xf32>, vector<128x128xf32>, vector<8x128xf32> -> vector<8x128xf32>
    %116 = arith.addf %113, %115 : vector<8x128xf32>
    %cst_82 = arith.constant 0.000000e+00 : f32
    %117 = vector.broadcast %cst_82 : f32 to vector<8x128xf32>
    %118 = arith.maximumf %116, %117 : vector<8x128xf32>
    %c12_i32 = arith.constant 12 : i32
    %c8_i32_83 = arith.constant 8 : i32
    %119 = arith.muli %c12_i32, %c8_i32_83 : i32
    %120 = tpu.assume_multiple %119, 8 : i32
    %121 = arith.index_cast %120 : i32 to index
    %c0_84 = arith.constant 0 : index
    %122 = vector.load %arg9[%121, %c0_84] : memref<224x128xf32, #tpu.memory_space<vmem>>, vector<8x128xf32>
    %c0_85 = arith.constant 0 : index
    %c0_86 = arith.constant 0 : index
    %123 = vector.load %arg3[%c0_85, %c0_86] : memref<128x128xf32, #tpu.memory_space<vmem>>, vector<128x128xf32>
    %cst_87 = arith.constant dense<0.000000e+00> : vector<8x128xf32>
    %124 = tpu.matmul %118, %123, %cst_87 {dimension_numbers = #tpu.dot_dimension_numbers<[1], [0], [0], [1], [0, 0, 1, 1], [], []>} : vector<8x128xf32>, vector<128x128xf32>, vector<8x128xf32> -> vector<8x128xf32>
    %125 = arith.addf %122, %124 : vector<8x128xf32>
    %cst_88 = arith.constant 0.000000e+00 : f32
    %126 = vector.broadcast %cst_88 : f32 to vector<8x128xf32>
    %127 = arith.maximumf %125, %126 : vector<8x128xf32>
    %c13_i32 = arith.constant 13 : i32
    %c8_i32_89 = arith.constant 8 : i32
    %128 = arith.muli %c13_i32, %c8_i32_89 : i32
    %129 = tpu.assume_multiple %128, 8 : i32
    %130 = arith.index_cast %129 : i32 to index
    %c0_90 = arith.constant 0 : index
    %131 = vector.load %arg9[%130, %c0_90] : memref<224x128xf32, #tpu.memory_space<vmem>>, vector<8x128xf32>
    %c0_91 = arith.constant 0 : index
    %c0_92 = arith.constant 0 : index
    %132 = vector.load %arg3[%c0_91, %c0_92] : memref<128x128xf32, #tpu.memory_space<vmem>>, vector<128x128xf32>
    %cst_93 = arith.constant dense<0.000000e+00> : vector<8x128xf32>
    %133 = tpu.matmul %127, %132, %cst_93 {dimension_numbers = #tpu.dot_dimension_numbers<[1], [0], [0], [1], [0, 0, 1, 1], [], []>} : vector<8x128xf32>, vector<128x128xf32>, vector<8x128xf32> -> vector<8x128xf32>
    %134 = arith.addf %131, %133 : vector<8x128xf32>
    %cst_94 = arith.constant 0.000000e+00 : f32
    %135 = vector.broadcast %cst_94 : f32 to vector<8x128xf32>
    %136 = arith.maximumf %134, %135 : vector<8x128xf32>
    %c14_i32 = arith.constant 14 : i32
    %c8_i32_95 = arith.constant 8 : i32
    %137 = arith.muli %c14_i32, %c8_i32_95 : i32
    %138 = tpu.assume_multiple %137, 8 : i32
    %139 = arith.index_cast %138 : i32 to index
    %c0_96 = arith.constant 0 : index
    %140 = vector.load %arg9[%139, %c0_96] : memref<224x128xf32, #tpu.memory_space<vmem>>, vector<8x128xf32>
    %c0_97 = arith.constant 0 : index
    %c0_98 = arith.constant 0 : index
    %141 = vector.load %arg3[%c0_97, %c0_98] : memref<128x128xf32, #tpu.memory_space<vmem>>, vector<128x128xf32>
    %cst_99 = arith.constant dense<0.000000e+00> : vector<8x128xf32>
    %142 = tpu.matmul %136, %141, %cst_99 {dimension_numbers = #tpu.dot_dimension_numbers<[1], [0], [0], [1], [0, 0, 1, 1], [], []>} : vector<8x128xf32>, vector<128x128xf32>, vector<8x128xf32> -> vector<8x128xf32>
    %143 = arith.addf %140, %142 : vector<8x128xf32>
    %cst_100 = arith.constant 0.000000e+00 : f32
    %144 = vector.broadcast %cst_100 : f32 to vector<8x128xf32>
    %145 = arith.maximumf %143, %144 : vector<8x128xf32>
    %c15_i32 = arith.constant 15 : i32
    %c8_i32_101 = arith.constant 8 : i32
    %146 = arith.muli %c15_i32, %c8_i32_101 : i32
    %147 = tpu.assume_multiple %146, 8 : i32
    %148 = arith.index_cast %147 : i32 to index
    %c0_102 = arith.constant 0 : index
    %149 = vector.load %arg9[%148, %c0_102] : memref<224x128xf32, #tpu.memory_space<vmem>>, vector<8x128xf32>
    %c0_103 = arith.constant 0 : index
    %c0_104 = arith.constant 0 : index
    %150 = vector.load %arg3[%c0_103, %c0_104] : memref<128x128xf32, #tpu.memory_space<vmem>>, vector<128x128xf32>
    %cst_105 = arith.constant dense<0.000000e+00> : vector<8x128xf32>
    %151 = tpu.matmul %145, %150, %cst_105 {dimension_numbers = #tpu.dot_dimension_numbers<[1], [0], [0], [1], [0, 0, 1, 1], [], []>} : vector<8x128xf32>, vector<128x128xf32>, vector<8x128xf32> -> vector<8x128xf32>
    %152 = arith.addf %149, %151 : vector<8x128xf32>
    %cst_106 = arith.constant 0.000000e+00 : f32
    %153 = vector.broadcast %cst_106 : f32 to vector<8x128xf32>
    %154 = arith.maximumf %152, %153 : vector<8x128xf32>
    %c16_i32 = arith.constant 16 : i32
    %c8_i32_107 = arith.constant 8 : i32
    %155 = arith.muli %c16_i32, %c8_i32_107 : i32
    %156 = tpu.assume_multiple %155, 8 : i32
    %157 = arith.index_cast %156 : i32 to index
    %c0_108 = arith.constant 0 : index
    %158 = vector.load %arg9[%157, %c0_108] : memref<224x128xf32, #tpu.memory_space<vmem>>, vector<8x128xf32>
    %c0_109 = arith.constant 0 : index
    %c0_110 = arith.constant 0 : index
    %159 = vector.load %arg3[%c0_109, %c0_110] : memref<128x128xf32, #tpu.memory_space<vmem>>, vector<128x128xf32>
    %cst_111 = arith.constant dense<0.000000e+00> : vector<8x128xf32>
    %160 = tpu.matmul %154, %159, %cst_111 {dimension_numbers = #tpu.dot_dimension_numbers<[1], [0], [0], [1], [0, 0, 1, 1], [], []>} : vector<8x128xf32>, vector<128x128xf32>, vector<8x128xf32> -> vector<8x128xf32>
    %161 = arith.addf %158, %160 : vector<8x128xf32>
    %cst_112 = arith.constant 0.000000e+00 : f32
    %162 = vector.broadcast %cst_112 : f32 to vector<8x128xf32>
    %163 = arith.maximumf %161, %162 : vector<8x128xf32>
    %c17_i32 = arith.constant 17 : i32
    %c8_i32_113 = arith.constant 8 : i32
    %164 = arith.muli %c17_i32, %c8_i32_113 : i32
    %165 = tpu.assume_multiple %164, 8 : i32
    %166 = arith.index_cast %165 : i32 to index
    %c0_114 = arith.constant 0 : index
    %167 = vector.load %arg9[%166, %c0_114] : memref<224x128xf32, #tpu.memory_space<vmem>>, vector<8x128xf32>
    %c0_115 = arith.constant 0 : index
    %c0_116 = arith.constant 0 : index
    %168 = vector.load %arg3[%c0_115, %c0_116] : memref<128x128xf32, #tpu.memory_space<vmem>>, vector<128x128xf32>
    %cst_117 = arith.constant dense<0.000000e+00> : vector<8x128xf32>
    %169 = tpu.matmul %163, %168, %cst_117 {dimension_numbers = #tpu.dot_dimension_numbers<[1], [0], [0], [1], [0, 0, 1, 1], [], []>} : vector<8x128xf32>, vector<128x128xf32>, vector<8x128xf32> -> vector<8x128xf32>
    %170 = arith.addf %167, %169 : vector<8x128xf32>
    %cst_118 = arith.constant 0.000000e+00 : f32
    %171 = vector.broadcast %cst_118 : f32 to vector<8x128xf32>
    %172 = arith.maximumf %170, %171 : vector<8x128xf32>
    %c18_i32 = arith.constant 18 : i32
    %c8_i32_119 = arith.constant 8 : i32
    %173 = arith.muli %c18_i32, %c8_i32_119 : i32
    %174 = tpu.assume_multiple %173, 8 : i32
    %175 = arith.index_cast %174 : i32 to index
    %c0_120 = arith.constant 0 : index
    %176 = vector.load %arg9[%175, %c0_120] : memref<224x128xf32, #tpu.memory_space<vmem>>, vector<8x128xf32>
    %c0_121 = arith.constant 0 : index
    %c0_122 = arith.constant 0 : index
    %177 = vector.load %arg3[%c0_121, %c0_122] : memref<128x128xf32, #tpu.memory_space<vmem>>, vector<128x128xf32>
    %cst_123 = arith.constant dense<0.000000e+00> : vector<8x128xf32>
    %178 = tpu.matmul %172, %177, %cst_123 {dimension_numbers = #tpu.dot_dimension_numbers<[1], [0], [0], [1], [0, 0, 1, 1], [], []>} : vector<8x128xf32>, vector<128x128xf32>, vector<8x128xf32> -> vector<8x128xf32>
    %179 = arith.addf %176, %178 : vector<8x128xf32>
    %cst_124 = arith.constant 0.000000e+00 : f32
    %180 = vector.broadcast %cst_124 : f32 to vector<8x128xf32>
    %181 = arith.maximumf %179, %180 : vector<8x128xf32>
    %c19_i32 = arith.constant 19 : i32
    %c8_i32_125 = arith.constant 8 : i32
    %182 = arith.muli %c19_i32, %c8_i32_125 : i32
    %183 = tpu.assume_multiple %182, 8 : i32
    %184 = arith.index_cast %183 : i32 to index
    %c0_126 = arith.constant 0 : index
    %185 = vector.load %arg9[%184, %c0_126] : memref<224x128xf32, #tpu.memory_space<vmem>>, vector<8x128xf32>
    %c0_127 = arith.constant 0 : index
    %c0_128 = arith.constant 0 : index
    %186 = vector.load %arg3[%c0_127, %c0_128] : memref<128x128xf32, #tpu.memory_space<vmem>>, vector<128x128xf32>
    %cst_129 = arith.constant dense<0.000000e+00> : vector<8x128xf32>
    %187 = tpu.matmul %181, %186, %cst_129 {dimension_numbers = #tpu.dot_dimension_numbers<[1], [0], [0], [1], [0, 0, 1, 1], [], []>} : vector<8x128xf32>, vector<128x128xf32>, vector<8x128xf32> -> vector<8x128xf32>
    %188 = arith.addf %185, %187 : vector<8x128xf32>
    %cst_130 = arith.constant 0.000000e+00 : f32
    %189 = vector.broadcast %cst_130 : f32 to vector<8x128xf32>
    %190 = arith.maximumf %188, %189 : vector<8x128xf32>
    %c20_i32 = arith.constant 20 : i32
    %c8_i32_131 = arith.constant 8 : i32
    %191 = arith.muli %c20_i32, %c8_i32_131 : i32
    %192 = tpu.assume_multiple %191, 8 : i32
    %193 = arith.index_cast %192 : i32 to index
    %c0_132 = arith.constant 0 : index
    %194 = vector.load %arg9[%193, %c0_132] : memref<224x128xf32, #tpu.memory_space<vmem>>, vector<8x128xf32>
    %c0_133 = arith.constant 0 : index
    %c0_134 = arith.constant 0 : index
    %195 = vector.load %arg3[%c0_133, %c0_134] : memref<128x128xf32, #tpu.memory_space<vmem>>, vector<128x128xf32>
    %cst_135 = arith.constant dense<0.000000e+00> : vector<8x128xf32>
    %196 = tpu.matmul %190, %195, %cst_135 {dimension_numbers = #tpu.dot_dimension_numbers<[1], [0], [0], [1], [0, 0, 1, 1], [], []>} : vector<8x128xf32>, vector<128x128xf32>, vector<8x128xf32> -> vector<8x128xf32>
    %197 = arith.addf %194, %196 : vector<8x128xf32>
    %cst_136 = arith.constant 0.000000e+00 : f32
    %198 = vector.broadcast %cst_136 : f32 to vector<8x128xf32>
    %199 = arith.maximumf %197, %198 : vector<8x128xf32>
    %c21_i32 = arith.constant 21 : i32
    %c8_i32_137 = arith.constant 8 : i32
    %200 = arith.muli %c21_i32, %c8_i32_137 : i32
    %201 = tpu.assume_multiple %200, 8 : i32
    %202 = arith.index_cast %201 : i32 to index
    %c0_138 = arith.constant 0 : index
    %203 = vector.load %arg9[%202, %c0_138] : memref<224x128xf32, #tpu.memory_space<vmem>>, vector<8x128xf32>
    %c0_139 = arith.constant 0 : index
    %c0_140 = arith.constant 0 : index
    %204 = vector.load %arg3[%c0_139, %c0_140] : memref<128x128xf32, #tpu.memory_space<vmem>>, vector<128x128xf32>
    %cst_141 = arith.constant dense<0.000000e+00> : vector<8x128xf32>
    %205 = tpu.matmul %199, %204, %cst_141 {dimension_numbers = #tpu.dot_dimension_numbers<[1], [0], [0], [1], [0, 0, 1, 1], [], []>} : vector<8x128xf32>, vector<128x128xf32>, vector<8x128xf32> -> vector<8x128xf32>
    %206 = arith.addf %203, %205 : vector<8x128xf32>
    %cst_142 = arith.constant 0.000000e+00 : f32
    %207 = vector.broadcast %cst_142 : f32 to vector<8x128xf32>
    %208 = arith.maximumf %206, %207 : vector<8x128xf32>
    %c22_i32 = arith.constant 22 : i32
    %c8_i32_143 = arith.constant 8 : i32
    %209 = arith.muli %c22_i32, %c8_i32_143 : i32
    %210 = tpu.assume_multiple %209, 8 : i32
    %211 = arith.index_cast %210 : i32 to index
    %c0_144 = arith.constant 0 : index
    %212 = vector.load %arg9[%211, %c0_144] : memref<224x128xf32, #tpu.memory_space<vmem>>, vector<8x128xf32>
    %c0_145 = arith.constant 0 : index
    %c0_146 = arith.constant 0 : index
    %213 = vector.load %arg3[%c0_145, %c0_146] : memref<128x128xf32, #tpu.memory_space<vmem>>, vector<128x128xf32>
    %cst_147 = arith.constant dense<0.000000e+00> : vector<8x128xf32>
    %214 = tpu.matmul %208, %213, %cst_147 {dimension_numbers = #tpu.dot_dimension_numbers<[1], [0], [0], [1], [0, 0, 1, 1], [], []>} : vector<8x128xf32>, vector<128x128xf32>, vector<8x128xf32> -> vector<8x128xf32>
    %215 = arith.addf %212, %214 : vector<8x128xf32>
    %cst_148 = arith.constant 0.000000e+00 : f32
    %216 = vector.broadcast %cst_148 : f32 to vector<8x128xf32>
    %217 = arith.maximumf %215, %216 : vector<8x128xf32>
    %c23_i32 = arith.constant 23 : i32
    %c8_i32_149 = arith.constant 8 : i32
    %218 = arith.muli %c23_i32, %c8_i32_149 : i32
    %219 = tpu.assume_multiple %218, 8 : i32
    %220 = arith.index_cast %219 : i32 to index
    %c0_150 = arith.constant 0 : index
    %221 = vector.load %arg9[%220, %c0_150] : memref<224x128xf32, #tpu.memory_space<vmem>>, vector<8x128xf32>
    %c0_151 = arith.constant 0 : index
    %c0_152 = arith.constant 0 : index
    %222 = vector.load %arg3[%c0_151, %c0_152] : memref<128x128xf32, #tpu.memory_space<vmem>>, vector<128x128xf32>
    %cst_153 = arith.constant dense<0.000000e+00> : vector<8x128xf32>
    %223 = tpu.matmul %217, %222, %cst_153 {dimension_numbers = #tpu.dot_dimension_numbers<[1], [0], [0], [1], [0, 0, 1, 1], [], []>} : vector<8x128xf32>, vector<128x128xf32>, vector<8x128xf32> -> vector<8x128xf32>
    %224 = arith.addf %221, %223 : vector<8x128xf32>
    %cst_154 = arith.constant 0.000000e+00 : f32
    %225 = vector.broadcast %cst_154 : f32 to vector<8x128xf32>
    %226 = arith.maximumf %224, %225 : vector<8x128xf32>
    %c24_i32 = arith.constant 24 : i32
    %c8_i32_155 = arith.constant 8 : i32
    %227 = arith.muli %c24_i32, %c8_i32_155 : i32
    %228 = tpu.assume_multiple %227, 8 : i32
    %229 = arith.index_cast %228 : i32 to index
    %c0_156 = arith.constant 0 : index
    %230 = vector.load %arg9[%229, %c0_156] : memref<224x128xf32, #tpu.memory_space<vmem>>, vector<8x128xf32>
    %c0_157 = arith.constant 0 : index
    %c0_158 = arith.constant 0 : index
    %231 = vector.load %arg3[%c0_157, %c0_158] : memref<128x128xf32, #tpu.memory_space<vmem>>, vector<128x128xf32>
    %cst_159 = arith.constant dense<0.000000e+00> : vector<8x128xf32>
    %232 = tpu.matmul %226, %231, %cst_159 {dimension_numbers = #tpu.dot_dimension_numbers<[1], [0], [0], [1], [0, 0, 1, 1], [], []>} : vector<8x128xf32>, vector<128x128xf32>, vector<8x128xf32> -> vector<8x128xf32>
    %233 = arith.addf %230, %232 : vector<8x128xf32>
    %cst_160 = arith.constant 0.000000e+00 : f32
    %234 = vector.broadcast %cst_160 : f32 to vector<8x128xf32>
    %235 = arith.maximumf %233, %234 : vector<8x128xf32>
    %c25_i32 = arith.constant 25 : i32
    %c8_i32_161 = arith.constant 8 : i32
    %236 = arith.muli %c25_i32, %c8_i32_161 : i32
    %237 = tpu.assume_multiple %236, 8 : i32
    %238 = arith.index_cast %237 : i32 to index
    %c0_162 = arith.constant 0 : index
    %239 = vector.load %arg9[%238, %c0_162] : memref<224x128xf32, #tpu.memory_space<vmem>>, vector<8x128xf32>
    %c0_163 = arith.constant 0 : index
    %c0_164 = arith.constant 0 : index
    %240 = vector.load %arg3[%c0_163, %c0_164] : memref<128x128xf32, #tpu.memory_space<vmem>>, vector<128x128xf32>
    %cst_165 = arith.constant dense<0.000000e+00> : vector<8x128xf32>
    %241 = tpu.matmul %235, %240, %cst_165 {dimension_numbers = #tpu.dot_dimension_numbers<[1], [0], [0], [1], [0, 0, 1, 1], [], []>} : vector<8x128xf32>, vector<128x128xf32>, vector<8x128xf32> -> vector<8x128xf32>
    %242 = arith.addf %239, %241 : vector<8x128xf32>
    %cst_166 = arith.constant 0.000000e+00 : f32
    %243 = vector.broadcast %cst_166 : f32 to vector<8x128xf32>
    %244 = arith.maximumf %242, %243 : vector<8x128xf32>
    %c26_i32 = arith.constant 26 : i32
    %c8_i32_167 = arith.constant 8 : i32
    %245 = arith.muli %c26_i32, %c8_i32_167 : i32
    %246 = tpu.assume_multiple %245, 8 : i32
    %247 = arith.index_cast %246 : i32 to index
    %c0_168 = arith.constant 0 : index
    %248 = vector.load %arg9[%247, %c0_168] : memref<224x128xf32, #tpu.memory_space<vmem>>, vector<8x128xf32>
    %c0_169 = arith.constant 0 : index
    %c0_170 = arith.constant 0 : index
    %249 = vector.load %arg3[%c0_169, %c0_170] : memref<128x128xf32, #tpu.memory_space<vmem>>, vector<128x128xf32>
    %cst_171 = arith.constant dense<0.000000e+00> : vector<8x128xf32>
    %250 = tpu.matmul %244, %249, %cst_171 {dimension_numbers = #tpu.dot_dimension_numbers<[1], [0], [0], [1], [0, 0, 1, 1], [], []>} : vector<8x128xf32>, vector<128x128xf32>, vector<8x128xf32> -> vector<8x128xf32>
    %251 = arith.addf %248, %250 : vector<8x128xf32>
    %cst_172 = arith.constant 0.000000e+00 : f32
    %252 = vector.broadcast %cst_172 : f32 to vector<8x128xf32>
    %253 = arith.maximumf %251, %252 : vector<8x128xf32>
    %c27_i32 = arith.constant 27 : i32
    %c8_i32_173 = arith.constant 8 : i32
    %254 = arith.muli %c27_i32, %c8_i32_173 : i32
    %255 = tpu.assume_multiple %254, 8 : i32
    %256 = arith.index_cast %255 : i32 to index
    %c0_174 = arith.constant 0 : index
    %257 = vector.load %arg9[%256, %c0_174] : memref<224x128xf32, #tpu.memory_space<vmem>>, vector<8x128xf32>
    %c0_175 = arith.constant 0 : index
    %c0_176 = arith.constant 0 : index
    %258 = vector.load %arg3[%c0_175, %c0_176] : memref<128x128xf32, #tpu.memory_space<vmem>>, vector<128x128xf32>
    %cst_177 = arith.constant dense<0.000000e+00> : vector<8x128xf32>
    %259 = tpu.matmul %253, %258, %cst_177 {dimension_numbers = #tpu.dot_dimension_numbers<[1], [0], [0], [1], [0, 0, 1, 1], [], []>} : vector<8x128xf32>, vector<128x128xf32>, vector<8x128xf32> -> vector<8x128xf32>
    %260 = arith.addf %257, %259 : vector<8x128xf32>
    %cst_178 = arith.constant 0.000000e+00 : f32
    %261 = vector.broadcast %cst_178 : f32 to vector<8x128xf32>
    %262 = arith.maximumf %260, %261 : vector<8x128xf32>
    %c28_i32 = arith.constant 28 : i32
    %c0_179 = arith.constant 0 : index
    %c0_180 = arith.constant 0 : index
    %263 = vector.load %arg8[%c0_179, %c0_180] : memref<8x128xf32, #tpu.memory_space<vmem>>, vector<8x128xf32>
    tpu.vector_store %arg8[%c0_179, %c0_180], %262 {strides = array<i32>} : memref<8x128xf32, #tpu.memory_space<vmem>>, vector<8x128xf32>,
    %c0_i32_181 = arith.constant 0 : i32
    %264 = arith.cmpi eq, %arg0, %c0_i32_181 : i32
    %265 = arith.extui %264 : i1 to i32
    %c0_i32_182 = arith.constant 0 : i32
    %266 = arith.cmpi ne, %265, %c0_i32_182 : i32
    scf.if %266 {
      %c0_183 = arith.constant 0 : index
      %c0_184 = arith.constant 0 : index
      %267 = vector.load %arg8[%c0_183, %c0_184] : memref<8x128xf32, #tpu.memory_space<vmem>>, vector<8x128xf32>
      %c0_185 = arith.constant 0 : index
      %c0_186 = arith.constant 0 : index
      %268 = vector.load %arg5[%c0_185, %c0_186] : memref<128x10xf32, #tpu.memory_space<vmem>>, vector<128x10xf32>
      %cst_187 = arith.constant dense<0.000000e+00> : vector<8x10xf32>
      %269 = tpu.matmul %267, %268, %cst_187 {dimension_numbers = #tpu.dot_dimension_numbers<[1], [0], [0], [1], [0, 0, 1, 1], [], []>} : vector<8x128xf32>, vector<128x10xf32>, vector<8x10xf32> -> vector<8x10xf32>
      %c0_188 = arith.constant 0 : index
      %c0_189 = arith.constant 0 : index
      %270 = vector.load %arg6[%c0_188, %c0_189] : memref<1x10xf32, #tpu.memory_space<vmem>>, vector<1x10xf32>
      %271 = vector.broadcast %270 : vector<1x10xf32> to vector<8x10xf32>
      %272 = arith.addf %269, %271 : vector<8x10xf32>
      %c0_190 = arith.constant 0 : index
      %c0_191 = arith.constant 0 : index
      %273 = vector.load %arg7[%c0_190, %c0_191] : memref<8x10xf32, #tpu.memory_space<vmem>>, vector<8x10xf32>
      tpu.vector_store %arg7[%c0_190, %c0_191], %272 {strides = array<i32>} : memref<8x10xf32, #tpu.memory_space<vmem>>, vector<8x10xf32>,
    } else {
    }
    return
  }
  func.func @transform_0(%arg0: i32) -> (i32, i32) {
    %c0_i32 = arith.constant 0 : i32
    %c0_i32_0 = arith.constant 0 : i32
    return %arg0, %c0_i32 : i32, i32
  }
  func.func @transform_1(%arg0: i32) -> (i32, i32) {
    %c0_i32 = arith.constant 0 : i32
    %c0_i32_0 = arith.constant 0 : i32
    %c0_i32_1 = arith.constant 0 : i32
    return %c0_i32, %c0_i32_0 : i32, i32
  }
  func.func @transform_2(%arg0: i32) -> (i32, i32) {
    %c0_i32 = arith.constant 0 : i32
    %c0_i32_0 = arith.constant 0 : i32
    %c0_i32_1 = arith.constant 0 : i32
    return %c0_i32, %c0_i32_0 : i32, i32
  }
  func.func @transform_3(%arg0: i32) -> (i32, i32) {
    %c0_i32 = arith.constant 0 : i32
    %c0_i32_0 = arith.constant 0 : i32
    %c0_i32_1 = arith.constant 0 : i32
    return %c0_i32, %c0_i32_0 : i32, i32
  }
  func.func @transform_4(%arg0: i32) -> (i32, i32) {
    %c0_i32 = arith.constant 0 : i32
    %c0_i32_0 = arith.constant 0 : i32
    %c0_i32_1 = arith.constant 0 : i32
    return %c0_i32, %c0_i32_0 : i32, i32
  }
  func.func @transform_5(%arg0: i32) -> (i32, i32) {
    %c0_i32 = arith.constant 0 : i32
    %c0_i32_0 = arith.constant 0 : i32
    %c0_i32_1 = arith.constant 0 : i32
    return %c0_i32, %c0_i32_0 : i32, i32
  }
  func.func @transform_6(%arg0: i32) -> (i32, i32) {
    %c0_i32 = arith.constant 0 : i32
    %c0_i32_0 = arith.constant 0 : i32
    %c0_i32_1 = arith.constant 0 : i32
    return %c0_i32, %c0_i32_0 : i32, i32
  }
}

</mosaic_0001>

<llo_original>
// kernel: tpu_custom_call.1
$region0: #{tpu_custom_call.1}
  #allocation0 [shape = 'u32[]', space=smem, size = 0x4, offset = 0x4, fixed_abs, tag = 'smem constant byte address 0x4 - core index']
  #allocation1 [shape = 'u32[144,128]{1,0:T(1,128)}', space=vmem, size = 0x12000, scoped, tag = 'internal scratch']
  #allocation2 [shape = 'f32[8,128]{1,0:T(8,128)}', space=vmem, size = 0x1000, scoped, tag = 'scratch operand']
  #allocation3 [shape = 'f32[224,128]{1,0:T(8,128)}', space=vmem, size = 0x1c000, scoped, tag = 'scratch operand']
  %s0 = inlined_call_operand.vmem [shape: f32[224,28], index: 0, kind: input, shape index: {}]
  %s1 = inlined_call_operand.vmem [shape: f32[28,128], index: 1, kind: input, shape index: {}]
  %s2 = inlined_call_operand.vmem [shape: f32[128,128], index: 2, kind: input, shape index: {}]
  %s3 = inlined_call_operand.vmem [shape: f32[1,128], index: 3, kind: input, shape index: {}]
  %s4 = inlined_call_operand.vmem [shape: f32[128,10], index: 4, kind: input, shape index: {}]
  %s5 = inlined_call_operand.vmem [shape: f32[1,10], index: 5, kind: input, shape index: {}]
  %s6 = inlined_call_operand.hbm [shape: f32[8,10], index: 6, kind: output, shape index: {}]
  %s7 = sld [smem:[#allocation0]]
  $region42: #{tpu_custom_call.1} parent=0
    _
  %s9 = ssub.s32 1, %s7
  %s10 = scalar_select 0, %s9, %s7
  $region1: #{tpu_custom_call.1} parent=0
    #allocation4 [shape = 'u8[4096]{0}', space=vmem, size = 0x1000, scoped, tag = 'output window, operand 0, single buffered']
    #allocation5 [shape = 's32[1]{0}', space=sflag, size = 0x4, scoped, tag = 'scoped memory for tpu_custom_call.1']
    %11 = vsyncpa [#allocation5], 0
    // Predicated region
    $region2: #{tpu_custom_call.1} parent=1 // pred_check
      _
    $region3: #{tpu_custom_call.1} parent=1 // pred_check_branch
      %13 = sbr.rel (0) target = $region5
    $region4: #{tpu_custom_call.1} parent=1 // pred_region
      _
    $region5: #{tpu_custom_call.1} parent=1 // pred_fallthru
      _
    // Predicated region
    $region6: #{tpu_custom_call.1} parent=1 // pred_check
      _
    $region7: #{tpu_custom_call.1} parent=1 // pred_check_branch
      %15 = sbr.rel (0) target = $region9
    $region8: #{tpu_custom_call.1} parent=1 // pred_region
      _
    $region9: #{tpu_custom_call.1} parent=1 // pred_fallthru
      _
    // Predicated region
    $region10: #{tpu_custom_call.1} parent=1 // pred_check
      _
    $region11: #{tpu_custom_call.1} parent=1 // pred_check_branch
      %17 = sbr.rel (0) target = $region13
    $region12: #{tpu_custom_call.1} parent=1 // pred_region
      _
    $region13: #{tpu_custom_call.1} parent=1 // pred_fallthru
      _
    // Predicated region
    $region14: #{tpu_custom_call.1} parent=1 // pred_check
      _
    $region15: #{tpu_custom_call.1} parent=1 // pred_check_branch
      %19 = sbr.rel (0) target = $region17
    $region16: #{tpu_custom_call.1} parent=1 // pred_region
      _
    $region17: #{tpu_custom_call.1} parent=1 // pred_fallthru
      _
    // Predicated region
    $region18: #{tpu_custom_call.1} parent=1 // pred_check
      _
    $region19: #{tpu_custom_call.1} parent=1 // pred_check_branch
      %21 = sbr.rel (0) target = $region21
    $region20: #{tpu_custom_call.1} parent=1 // pred_region
      _
    $region21: #{tpu_custom_call.1} parent=1 // pred_fallthru
      _
    // Predicated region
    $region22: #{tpu_custom_call.1} parent=1 // pred_check
      _
    $region23: #{tpu_custom_call.1} parent=1 // pred_check_branch
      %23 = sbr.rel (0) target = $region25
    $region24: #{tpu_custom_call.1} parent=1 // pred_region
      _
    $region25: #{tpu_custom_call.1} parent=1 // pred_fallthru
      _
    %p24 = scmp.eq.s32.totalorder 0, 0
    // Predicated region
    $region26: #{tpu_custom_call.1} parent=1 // pred_check
      %p25 = pneg %p24
    $region27: #{tpu_custom_call.1} parent=1 // pred_check_branch
      %27 = sbr.rel (%p25) target = $region29
    $region28: #{tpu_custom_call.1} parent=1 // pred_region
      %28 = vst [vmem:[#allocation2] sm:$0xff] 0.0
    $region29: #{tpu_custom_call.1} parent=1 // pred_fallthru
      _
    %v29 = vld [vmem:[%s0] sm:$0xff]
    %v30 = vld [vmem:[%s0 + $0x8] sm:$0xff]
    %v31 = vld [vmem:[%s0 + $0x10] sm:$0xff]
    %v32 = vld [vmem:[%s0 + $0x18] sm:$0xff]
    %v33 = vld [vmem:[%s0 + $0x20] sm:$0xff]
    %v34 = vld [vmem:[%s0 + $0x28] sm:$0xff]
    %v35 = vld [vmem:[%s0 + $0x30] sm:$0xff]
    %v36 = vld [vmem:[%s0 + $0x38] sm:$0xff]
    %v37 = vld [vmem:[%s0 + $0x40] sm:$0xff]
    %v38 = vld [vmem:[%s0 + $0x48] sm:$0xff]
    %v39 = vld [vmem:[%s0 + $0x50] sm:$0xff]
    %v40 = vld [vmem:[%s0 + $0x58] sm:$0xff]
    %v41 = vld [vmem:[%s0 + $0x60] sm:$0xff]
    %v42 = vld [vmem:[%s0 + $0x68] sm:$0xff]
    %v43 = vld [vmem:[%s0 + $0x70] sm:$0xff]
    %v44 = vld [vmem:[%s0 + $0x78] sm:$0xff]
    %v45 = vld [vmem:[%s0 + $0x80] sm:$0xff]
    %v46 = vld [vmem:[%s0 + $0x88] sm:$0xff]
    %v47 = vld [vmem:[%s0 + $0x90] sm:$0xff]
    %v48 = vld [vmem:[%s0 + $0x98] sm:$0xff]
    %v49 = vld [vmem:[%s0 + $0xa0] sm:$0xff]
    %v50 = vld [vmem:[%s0 + $0xa8] sm:$0xff]
    %v51 = vld [vmem:[%s0 + $0xb0] sm:$0xff]
    %v52 = vld [vmem:[%s0 + $0xb8] sm:$0xff]
    %v53 = vld [vmem:[%s0 + $0xc0] sm:$0xff]
    %v54 = vld [vmem:[%s0 + $0xc8] sm:$0xff]
    %v55 = vld [vmem:[%s0 + $0xd0] sm:$0xff]
    %v56 = vld [vmem:[%s0 + $0xd8] sm:$0xff]
    %v57 = vld [vmem:[%s1] sm:$0xff]
    %v58 = vld [vmem:[%s1 + $0x8] sm:$0xff]
    %v59 = vld [vmem:[%s1 + $0x10] sm:$0xff]
    %v60 = vld [vmem:[%s1 + $0x18] sm:$0xf]
    %v61 = vld [vmem:[%s3] sm:$0x1]
    %v63 = vlaneseq
    %v64 = vshrl.u32 %v63, 7
    %v65 = vsub.s32 0, %v64
    %v66 = vrot.slane %v61, %v65
    %vm68 = vcmask 228352
    %v70 = vsel %vm68, %v29, 0
    %v73 = vsel %vm68, %v30, 0
    %v76 = vsel %vm68, %v31, 0
    %v79 = vsel %vm68, %v32, 0
    %v82 = vsel %vm68, %v33, 0
    %v85 = vsel %vm68, %v34, 0
    %v88 = vsel %vm68, %v35, 0
    %v91 = vsel %vm68, %v36, 0
    %v94 = vsel %vm68, %v37, 0
    %v97 = vsel %vm68, %v38, 0
    %v100 = vsel %vm68, %v39, 0
    %v103 = vsel %vm68, %v40, 0
    %v106 = vsel %vm68, %v41, 0
    %v109 = vsel %vm68, %v42, 0
    %v112 = vsel %vm68, %v43, 0
    %v115 = vsel %vm68, %v44, 0
    %v118 = vsel %vm68, %v45, 0
    %v121 = vsel %vm68, %v46, 0
    %v124 = vsel %vm68, %v47, 0
    %v127 = vsel %vm68, %v48, 0
    %v130 = vsel %vm68, %v49, 0
    %v133 = vsel %vm68, %v50, 0
    %v136 = vsel %vm68, %v51, 0
    %v139 = vsel %vm68, %v52, 0
    %v142 = vsel %vm68, %v53, 0
    %v145 = vsel %vm68, %v54, 0
    %v148 = vsel %vm68, %v55, 0
    %v151 = vsel %vm68, %v56, 0
    %vm153 = vcmask 1043456
    %v155 = vsel %vm153, %v60, 0
    %157 = vmatprep.subr.mxu0 0.0
    %158 = vmatpush1.msra.mxu0 %v57
    %159 = vmatprep.subr.mxu0 0.0
    %160 = vmatpush1.msra.mxu0 %v58
    %161 = vmatprep.subr.mxu0 0.0
    %162 = vmatpush1.msra.mxu0 %v59
    %163 = vmatprep.subr.mxu0 0.0
    %164 = vmatpush1.msra.mxu0 %v155
    %165 = vmatprep.subr.mxu0 0.0
    %166 = vmatpush1.msra.mxu0 0.0
    %167 = vmatprep.subr.mxu0 0.0
    %168 = vmatpush1.msra.mxu0 0.0
    %169 = vmatprep.subr.mxu0 0.0
    %170 = vmatpush1.msra.mxu0 0.0
    %171 = vmatprep.subr.mxu0 0.0
    %172 = vmatpush1.msra.mxu0 0.0
    %173 = vmatprep.subr.mxu0 0.0
    %174 = vmatpush1.msra.mxu0 0.0
    %175 = vmatprep.subr.mxu0 0.0
    %176 = vmatpush1.msra.mxu0 0.0
    %177 = vmatprep.subr.mxu0 0.0
    %178 = vmatpush1.msra.mxu0 0.0
    %179 = vmatprep.subr.mxu0 0.0
    %180 = vmatpush1.msra.mxu0 0.0
    %181 = vmatprep.subr.mxu0 0.0
    %182 = vmatpush1.msra.mxu0 0.0
    %183 = vmatprep.subr.mxu0 0.0
    %184 = vmatpush1.msra.mxu0 0.0
    %185 = vmatprep.subr.mxu0 0.0
    %186 = vmatpush1.msra.mxu0 0.0
    %187 = vmatprep.subr.mxu0 0.0
    %188 = vmatpush1.msra.mxu0 0.0
    %189 = vmatprep.subr.mxu0 0.0
    %190 = vmatpush1.msra.mxu0 0.0
    %191 = vmatprep.subr.mxu0 0.0
    %192 = vmatpush1.msra.mxu0 0.0
    %193 = vmatprep.subr.mxu0 0.0
    %194 = vmatpush1.msra.mxu0 0.0
    %195 = vmatprep.subr.mxu0 0.0
    %196 = vmatpush1.msra.mxu0 0.0
    %197 = vmatprep.subr.mxu0 0.0
    %198 = vmatpush1.msra.mxu0 0.0
    %199 = vmatprep.subr.mxu0 0.0
    %200 = vmatpush1.msra.mxu0 0.0
    %201 = vmatprep.subr.mxu0 0.0
    %202 = vmatpush1.msra.mxu0 0.0
    %203 = vmatprep.subr.mxu0 0.0
    %204 = vmatpush1.msra.mxu0 0.0
    %205 = vmatprep.subr.mxu0 0.0
    %206 = vmatpush1.msra.mxu0 0.0
    %207 = vmatprep.subr.mxu0 0.0
    %208 = vmatpush1.msra.mxu0 0.0
    %209 = vmatprep.subr.mxu0 0.0
    %210 = vmatpush1.msra.mxu0 0.0
    %211 = vmatprep.subr.mxu0 0.0
    %212 = vmatpush1.msra.mxu0 0.0
    %213 = vmatprep.subr.mxu0 0.0
    %214 = vmatpush1.msra.mxu0 0.0
    %215 = vmatprep.subr.mxu0 0.0
    %216 = vmatpush1.msra.mxu0 0.0
    %217 = vmatprep.subr.mxu0 0.0
    %218 = vmatpush1.msra.mxu0 0.0
    %219 = vmatprep.subr.mxu0 0.0
    %220 = vmatpush1.msra.mxu0 0.0
    %221 = vmatprep.mubr.f32.mxu0 0.0
    %222 = vmatmul.mubr.f32.gmra.mrb[0].mxu0 %v70
    %v223 = vpop.f32.mrb[0].mxu0
    %v224 = vadd.f32 %v66, %v223
    %v225 = vpop.f32.mrb[0].mxu0
    %226 = vmatprep.mubr.f32.mxu0 0.0
    %227 = vmatmul.mubr.f32.gmra.mrb[0].mxu0 %v73
    %v228 = vpop.f32.mrb[0].mxu0
    %v229 = vadd.f32 %v66, %v228
    %v230 = vpop.f32.mrb[0].mxu0
    %231 = vmatprep.mubr.f32.mxu0 0.0
    %232 = vmatmul.mubr.f32.gmra.mrb[0].mxu0 %v76
    %v233 = vpop.f32.mrb[0].mxu0
    %v234 = vadd.f32 %v66, %v233
    %v235 = vpop.f32.mrb[0].mxu0
    %236 = vmatprep.mubr.f32.mxu0 0.0
    %237 = vmatmul.mubr.f32.gmra.mrb[0].mxu0 %v79
    %v238 = vpop.f32.mrb[0].mxu0
    %v239 = vadd.f32 %v66, %v238
    %v240 = vpop.f32.mrb[0].mxu0
    %241 = vmatprep.mubr.f32.mxu0 0.0
    %242 = vmatmul.mubr.f32.gmra.mrb[0].mxu0 %v82
    %v243 = vpop.f32.mrb[0].mxu0
    %v244 = vadd.f32 %v66, %v243
    %v245 = vpop.f32.mrb[0].mxu0
    %246 = vmatprep.mubr.f32.mxu0 0.0
    %247 = vmatmul.mubr.f32.gmra.mrb[0].mxu0 %v85
    %v248 = vpop.f32.mrb[0].mxu0
    %v249 = vadd.f32 %v66, %v248
    %v250 = vpop.f32.mrb[0].mxu0
    %251 = vmatprep.mubr.f32.mxu0 0.0
    %252 = vmatmul.mubr.f32.gmra.mrb[0].mxu0 %v88
    %v253 = vpop.f32.mrb[0].mxu0
    %v254 = vadd.f32 %v66, %v253
    %v255 = vpop.f32.mrb[0].mxu0
    %256 = vmatprep.mubr.f32.mxu0 0.0
    %257 = vmatmul.mubr.f32.gmra.mrb[0].mxu0 %v91
    %v258 = vpop.f32.mrb[0].mxu0
    %v259 = vadd.f32 %v66, %v258
    %v260 = vpop.f32.mrb[0].mxu0
    %261 = vmatprep.mubr.f32.mxu0 0.0
    %262 = vmatmul.mubr.f32.gmra.mrb[0].mxu0 %v94
    %v263 = vpop.f32.mrb[0].mxu0
    %v264 = vadd.f32 %v66, %v263
    %v265 = vpop.f32.mrb[0].mxu0
    %266 = vmatprep.mubr.f32.mxu0 0.0
    %267 = vmatmul.mubr.f32.gmra.mrb[0].mxu0 %v97
    %v268 = vpop.f32.mrb[0].mxu0
    %v269 = vadd.f32 %v66, %v268
    %v270 = vpop.f32.mrb[0].mxu0
    %271 = vmatprep.mubr.f32.mxu0 0.0
    %272 = vmatmul.mubr.f32.gmra.mrb[0].mxu0 %v100
    %v273 = vpop.f32.mrb[0].mxu0
    %v274 = vadd.f32 %v66, %v273
    %v275 = vpop.f32.mrb[0].mxu0
    %276 = vmatprep.mubr.f32.mxu0 0.0
    %277 = vmatmul.mubr.f32.gmra.mrb[0].mxu0 %v103
    %v278 = vpop.f32.mrb[0].mxu0
    %v279 = vadd.f32 %v66, %v278
    %v280 = vpop.f32.mrb[0].mxu0
    %281 = vmatprep.mubr.f32.mxu0 0.0
    %282 = vmatmul.mubr.f32.gmra.mrb[0].mxu0 %v106
    %v283 = vpop.f32.mrb[0].mxu0
    %v284 = vadd.f32 %v66, %v283
    %v285 = vpop.f32.mrb[0].mxu0
    %286 = vmatprep.mubr.f32.mxu0 0.0
    %287 = vmatmul.mubr.f32.gmra.mrb[0].mxu0 %v109
    %v288 = vpop.f32.mrb[0].mxu0
    %v289 = vadd.f32 %v66, %v288
    %v290 = vpop.f32.mrb[0].mxu0
    %291 = vmatprep.mubr.f32.mxu0 0.0
    %292 = vmatmul.mubr.f32.gmra.mrb[0].mxu0 %v112
    %v293 = vpop.f32.mrb[0].mxu0
    %v294 = vadd.f32 %v66, %v293
    %v295 = vpop.f32.mrb[0].mxu0
    %296 = vmatprep.mubr.f32.mxu0 0.0
    %297 = vmatmul.mubr.f32.gmra.mrb[0].mxu0 %v115
    %v298 = vpop.f32.mrb[0].mxu0
    %v299 = vadd.f32 %v66, %v298
    %v300 = vpop.f32.mrb[0].mxu0
    %301 = vmatprep.mubr.f32.mxu0 0.0
    %302 = vmatmul.mubr.f32.gmra.mrb[0].mxu0 %v118
    %v303 = vpop.f32.mrb[0].mxu0
    %v304 = vadd.f32 %v66, %v303
    %v305 = vpop.f32.mrb[0].mxu0
    %306 = vmatprep.mubr.f32.mxu0 0.0
    %307 = vmatmul.mubr.f32.gmra.mrb[0].mxu0 %v121
    %v308 = vpop.f32.mrb[0].mxu0
    %v309 = vadd.f32 %v66, %v308
    %v310 = vpop.f32.mrb[0].mxu0
    %311 = vmatprep.mubr.f32.mxu0 0.0
    %312 = vmatmul.mubr.f32.gmra.mrb[0].mxu0 %v124
    %v313 = vpop.f32.mrb[0].mxu0
    %v314 = vadd.f32 %v66, %v313
    %v315 = vpop.f32.mrb[0].mxu0
    %316 = vmatprep.mubr.f32.mxu0 0.0
    %317 = vmatmul.mubr.f32.gmra.mrb[0].mxu0 %v127
    %v318 = vpop.f32.mrb[0].mxu0
    %v319 = vadd.f32 %v66, %v318
    %v320 = vpop.f32.mrb[0].mxu0
    %321 = vmatprep.mubr.f32.mxu0 0.0
    %322 = vmatmul.mubr.f32.gmra.mrb[0].mxu0 %v130
    %v323 = vpop.f32.mrb[0].mxu0
    %v324 = vadd.f32 %v66, %v323
    %v325 = vpop.f32.mrb[0].mxu0
    %326 = vmatprep.mubr.f32.mxu0 0.0
    %327 = vmatmul.mubr.f32.gmra.mrb[0].mxu0 %v133
    %v328 = vpop.f32.mrb[0].mxu0
    %v329 = vadd.f32 %v66, %v328
    %v330 = vpop.f32.mrb[0].mxu0
    %331 = vmatprep.mubr.f32.mxu0 0.0
    %332 = vmatmul.mubr.f32.gmra.mrb[0].mxu0 %v136
    %v333 = vpop.f32.mrb[0].mxu0
    %v334 = vadd.f32 %v66, %v333
    %v335 = vpop.f32.mrb[0].mxu0
    %336 = vmatprep.mubr.f32.mxu0 0.0
    %337 = vmatmul.mubr.f32.gmra.mrb[0].mxu0 %v139
    %v338 = vpop.f32.mrb[0].mxu0
    %v339 = vadd.f32 %v66, %v338
    %v340 = vpop.f32.mrb[0].mxu0
    %341 = vmatprep.mubr.f32.mxu0 0.0
    %342 = vmatmul.mubr.f32.gmra.mrb[0].mxu0 %v142
    %v343 = vpop.f32.mrb[0].mxu0
    %v344 = vadd.f32 %v66, %v343
    %v345 = vpop.f32.mrb[0].mxu0
    %346 = vmatprep.mubr.f32.mxu0 0.0
    %347 = vmatmul.mubr.f32.gmra.mrb[0].mxu0 %v145
    %v348 = vpop.f32.mrb[0].mxu0
    %v349 = vadd.f32 %v66, %v348
    %v350 = vpop.f32.mrb[0].mxu0
    %351 = vmatprep.mubr.f32.mxu0 0.0
    %352 = vmatmul.mubr.f32.gmra.mrb[0].mxu0 %v148
    %v353 = vpop.f32.mrb[0].mxu0
    %v354 = vadd.f32 %v66, %v353
    %v355 = vpop.f32.mrb[0].mxu0
    %356 = vmatprep.mubr.f32.mxu0 0.0
    %357 = vmatmul.mubr.f32.gmra.mrb[0].mxu0 %v151
    %v358 = vpop.f32.mrb[0].mxu0
    %v359 = vadd.f32 %v66, %v358
    %v360 = vpop.f32.mrb[0].mxu0
    %361 = vdwg.mxu0
    %362 = vst [vmem:[#allocation3] sm:$0xff] %v224
    %363 = vst [vmem:[#allocation3 + $0x8] sm:$0xff] %v229
    %364 = vst [vmem:[#allocation3 + $0x10] sm:$0xff] %v234
    %365 = vst [vmem:[#allocation3 + $0x18] sm:$0xff] %v239
    %366 = vst [vmem:[#allocation3 + $0x20] sm:$0xff] %v244
    %367 = vst [vmem:[#allocation3 + $0x28] sm:$0xff] %v249
    %368 = vst [vmem:[#allocation3 + $0x30] sm:$0xff] %v254
    %369 = vst [vmem:[#allocation3 + $0x38] sm:$0xff] %v259
    %370 = vst [vmem:[#allocation3 + $0x40] sm:$0xff] %v264
    %371 = vst [vmem:[#allocation3 + $0x48] sm:$0xff] %v269
    %372 = vst [vmem:[#allocation3 + $0x50] sm:$0xff] %v274
    %373 = vst [vmem:[#allocation3 + $0x58] sm:$0xff] %v279
    %374 = vst [vmem:[#allocation3 + $0x60] sm:$0xff] %v284
    %375 = vst [vmem:[#allocation3 + $0x68] sm:$0xff] %v289
    %376 = vst [vmem:[#allocation3 + $0x70] sm:$0xff] %v294
    %377 = vst [vmem:[#allocation3 + $0x78] sm:$0xff] %v299
    %378 = vst [vmem:[#allocation3 + $0x80] sm:$0xff] %v304
    %379 = vst [vmem:[#allocation3 + $0x88] sm:$0xff] %v309
    %380 = vst [vmem:[#allocation3 + $0x90] sm:$0xff] %v314
    %381 = vst [vmem:[#allocation3 + $0x98] sm:$0xff] %v319
    %382 = vst [vmem:[#allocation3 + $0xa0] sm:$0xff] %v324
    %383 = vst [vmem:[#allocation3 + $0xa8] sm:$0xff] %v329
    %384 = vst [vmem:[#allocation3 + $0xb0] sm:$0xff] %v334
    %385 = vst [vmem:[#allocation3 + $0xb8] sm:$0xff] %v339
    %386 = vst [vmem:[#allocation3 + $0xc0] sm:$0xff] %v344
    %387 = vst [vmem:[#allocation3 + $0xc8] sm:$0xff] %v349
    %388 = vst [vmem:[#allocation3 + $0xd0] sm:$0xff] %v354
    %389 = vst [vmem:[#allocation3 + $0xd8] sm:$0xff] %v359
    %v390 = vld [vmem:[#allocation2] sm:$0xff]
    %v391 = vld [vmem:[#allocation3] sm:$0xff]
    %v392 = vld [vmem:[%s2] sm:$0xff]
    %v393 = vld [vmem:[%s2 + $0x8] sm:$0xff]
    %v394 = vld [vmem:[%s2 + $0x10] sm:$0xff]
    %v395 = vld [vmem:[%s2 + $0x18] sm:$0xff]
    %v396 = vld [vmem:[%s2 + $0x20] sm:$0xff]
    %v397 = vld [vmem:[%s2 + $0x28] sm:$0xff]
    %v398 = vld [vmem:[%s2 + $0x30] sm:$0xff]
    %v399 = vld [vmem:[%s2 + $0x38] sm:$0xff]
    %v400 = vld [vmem:[%s2 + $0x40] sm:$0xff]
    %v401 = vld [vmem:[%s2 + $0x48] sm:$0xff]
    %v402 = vld [vmem:[%s2 + $0x50] sm:$0xff]
    %v403 = vld [vmem:[%s2 + $0x58] sm:$0xff]
    %v404 = vld [vmem:[%s2 + $0x60] sm:$0xff]
    %v405 = vld [vmem:[%s2 + $0x68] sm:$0xff]
    %v406 = vld [vmem:[%s2 + $0x70] sm:$0xff]
    %v407 = vld [vmem:[%s2 + $0x78] sm:$0xff]
    %408 = vmatprep.subr.mxu0 0.0
    %409 = vmatpush1.msra.mxu0 %v392
    %410 = vmatprep.subr.mxu0 0.0
    %411 = vmatpush1.msra.mxu0 %v393
    %412 = vmatprep.subr.mxu0 0.0
    %413 = vmatpush1.msra.mxu0 %v394
    %414 = vmatprep.subr.mxu0 0.0
    %415 = vmatpush1.msra.mxu0 %v395
    %416 = vmatprep.subr.mxu0 0.0
    %417 = vmatpush1.msra.mxu0 %v396
    %418 = vmatprep.subr.mxu0 0.0
    %419 = vmatpush1.msra.mxu0 %v397
    %420 = vmatprep.subr.mxu0 0.0
    %421 = vmatpush1.msra.mxu0 %v398
    %422 = vmatprep.subr.mxu0 0.0
    %423 = vmatpush1.msra.mxu0 %v399
    %424 = vmatprep.subr.mxu0 0.0
    %425 = vmatpush1.msra.mxu0 %v400
    %426 = vmatprep.subr.mxu0 0.0
    %427 = vmatpush1.msra.mxu0 %v401
    %428 = vmatprep.subr.mxu0 0.0
    %429 = vmatpush1.msra.mxu0 %v402
    %430 = vmatprep.subr.mxu0 0.0
    %431 = vmatpush1.msra.mxu0 %v403
    %432 = vmatprep.subr.mxu0 0.0
    %433 = vmatpush1.msra.mxu0 %v404
    %434 = vmatprep.subr.mxu0 0.0
    %435 = vmatpush1.msra.mxu0 %v405
    %436 = vmatprep.subr.mxu0 0.0
    %437 = vmatpush1.msra.mxu0 %v406
    %438 = vmatprep.subr.mxu0 0.0
    %439 = vmatpush1.msra.mxu0 %v407
    %440 = vmatprep.subr.mxu0 0.0
    %441 = vmatpush1.msra.mxu0 0.0
    %442 = vmatprep.subr.mxu0 0.0
    %443 = vmatpush1.msra.mxu0 0.0
    %444 = vmatprep.subr.mxu0 0.0
    %445 = vmatpush1.msra.mxu0 0.0
    %446 = vmatprep.subr.mxu0 0.0
    %447 = vmatpush1.msra.mxu0 0.0
    %448 = vmatprep.subr.mxu0 0.0
    %449 = vmatpush1.msra.mxu0 0.0
    %450 = vmatprep.subr.mxu0 0.0
    %451 = vmatpush1.msra.mxu0 0.0
    %452 = vmatprep.subr.mxu0 0.0
    %453 = vmatpush1.msra.mxu0 0.0
    %454 = vmatprep.subr.mxu0 0.0
    %455 = vmatpush1.msra.mxu0 0.0
    %456 = vmatprep.subr.mxu0 0.0
    %457 = vmatpush1.msra.mxu0 0.0
    %458 = vmatprep.subr.mxu0 0.0
    %459 = vmatpush1.msra.mxu0 0.0
    %460 = vmatprep.subr.mxu0 0.0
    %461 = vmatpush1.msra.mxu0 0.0
    %462 = vmatprep.subr.mxu0 0.0
    %463 = vmatpush1.msra.mxu0 0.0
    %464 = vmatprep.subr.mxu0 0.0
    %465 = vmatpush1.msra.mxu0 0.0
    %466 = vmatprep.subr.mxu0 0.0
    %467 = vmatpush1.msra.mxu0 0.0
    %468 = vmatprep.subr.mxu0 0.0
    %469 = vmatpush1.msra.mxu0 0.0
    %470 = vmatprep.subr.mxu0 0.0
    %471 = vmatpush1.msra.mxu0 0.0
    %472 = vmatprep.mubr.f32.mxu0 0.0
    %473 = vmatmul.mubr.f32.gmra.mrb[0].mxu0 %v390
    %v474 = vpop.f32.mrb[0].mxu0
    %v475 = vadd.f32 0.0, %v474
    %v476 = vpop.f32.mrb[0].mxu0
    %477 = vdwg.mxu0
    %v478 = vadd.f32 %v391, %v475
    %v479 = vmax.f32 %v478, 0.0
    %s480 = scalar_lea.vmem [#allocation3], 8
    %v481 = vld [vmem:[%s480] sm:$0xff]
    %482 = vmatprep.subr.mxu0 0.0
    %483 = vmatpush1.msra.mxu0 %v392
    %484 = vmatprep.subr.mxu0 0.0
    %485 = vmatpush1.msra.mxu0 %v393
    %486 = vmatprep.subr.mxu0 0.0
    %487 = vmatpush1.msra.mxu0 %v394
    %488 = vmatprep.subr.mxu0 0.0
    %489 = vmatpush1.msra.mxu0 %v395
    %490 = vmatprep.subr.mxu0 0.0
    %491 = vmatpush1.msra.mxu0 %v396
    %492 = vmatprep.subr.mxu0 0.0
    %493 = vmatpush1.msra.mxu0 %v397
    %494 = vmatprep.subr.mxu0 0.0
    %495 = vmatpush1.msra.mxu0 %v398
    %496 = vmatprep.subr.mxu0 0.0
    %497 = vmatpush1.msra.mxu0 %v399
    %498 = vmatprep.subr.mxu0 0.0
    %499 = vmatpush1.msra.mxu0 %v400
    %500 = vmatprep.subr.mxu0 0.0
    %501 = vmatpush1.msra.mxu0 %v401
    %502 = vmatprep.subr.mxu0 0.0
    %503 = vmatpush1.msra.mxu0 %v402
    %504 = vmatprep.subr.mxu0 0.0
    %505 = vmatpush1.msra.mxu0 %v403
    %506 = vmatprep.subr.mxu0 0.0
    %507 = vmatpush1.msra.mxu0 %v404
    %508 = vmatprep.subr.mxu0 0.0
    %509 = vmatpush1.msra.mxu0 %v405
    %510 = vmatprep.subr.mxu0 0.0
    %511 = vmatpush1.msra.mxu0 %v406
    %512 = vmatprep.subr.mxu0 0.0
    %513 = vmatpush1.msra.mxu0 %v407
    %514 = vmatprep.subr.mxu0 0.0
    %515 = vmatpush1.msra.mxu0 0.0
    %516 = vmatprep.subr.mxu0 0.0
    %517 = vmatpush1.msra.mxu0 0.0
    %518 = vmatprep.subr.mxu0 0.0
    %519 = vmatpush1.msra.mxu0 0.0
    %520 = vmatprep.subr.mxu0 0.0
    %521 = vmatpush1.msra.mxu0 0.0
    %522 = vmatprep.subr.mxu0 0.0
    %523 = vmatpush1.msra.mxu0 0.0
    %524 = vmatprep.subr.mxu0 0.0
    %525 = vmatpush1.msra.mxu0 0.0
    %526 = vmatprep.subr.mxu0 0.0
    %527 = vmatpush1.msra.mxu0 0.0
    %528 = vmatprep.subr.mxu0 0.0
    %529 = vmatpush1.msra.mxu0 0.0
    %530 = vmatprep.subr.mxu0 0.0
    %531 = vmatpush1.msra.mxu0 0.0
    %532 = vmatprep.subr.mxu0 0.0
    %533 = vmatpush1.msra.mxu0 0.0
    %534 = vmatprep.subr.mxu0 0.0
    %535 = vmatpush1.msra.mxu0 0.0
    %536 = vmatprep.subr.mxu0 0.0
    %537 = vmatpush1.msra.mxu0 0.0
    %538 = vmatprep.subr.mxu0 0.0
    %539 = vmatpush1.msra.mxu0 0.0
    %540 = vmatprep.subr.mxu0 0.0
    %541 = vmatpush1.msra.mxu0 0.0
    %542 = vmatprep.subr.mxu0 0.0
    %543 = vmatpush1.msra.mxu0 0.0
    %544 = vmatprep.subr.mxu0 0.0
    %545 = vmatpush1.msra.mxu0 0.0
    %546 = vmatprep.mubr.f32.mxu0 0.0
    %547 = vmatmul.mubr.f32.gmra.mrb[0].mxu0 %v479
    %v548 = vpop.f32.mrb[0].mxu0
    %v549 = vadd.f32 0.0, %v548
    %v550 = vpop.f32.mrb[0].mxu0
    %551 = vdwg.mxu0
    %v552 = vadd.f32 %v481, %v549
    %v553 = vmax.f32 %v552, 0.0
    %s554 = scalar_lea.vmem [#allocation3], 16
    %v555 = vld [vmem:[%s554] sm:$0xff]
    %556 = vmatprep.subr.mxu0 0.0
    %557 = vmatpush1.msra.mxu0 %v392
    %558 = vmatprep.subr.mxu0 0.0
    %559 = vmatpush1.msra.mxu0 %v393
    %560 = vmatprep.subr.mxu0 0.0
    %561 = vmatpush1.msra.mxu0 %v394
    %562 = vmatprep.subr.mxu0 0.0
    %563 = vmatpush1.msra.mxu0 %v395
    %564 = vmatprep.subr.mxu0 0.0
    %565 = vmatpush1.msra.mxu0 %v396
    %566 = vmatprep.subr.mxu0 0.0
    %567 = vmatpush1.msra.mxu0 %v397
    %568 = vmatprep.subr.mxu0 0.0
    %569 = vmatpush1.msra.mxu0 %v398
    %570 = vmatprep.subr.mxu0 0.0
    %571 = vmatpush1.msra.mxu0 %v399
    %572 = vmatprep.subr.mxu0 0.0
    %573 = vmatpush1.msra.mxu0 %v400
    %574 = vmatprep.subr.mxu0 0.0
    %575 = vmatpush1.msra.mxu0 %v401
    %576 = vmatprep.subr.mxu0 0.0
    %577 = vmatpush1.msra.mxu0 %v402
    %578 = vmatprep.subr.mxu0 0.0
    %579 = vmatpush1.msra.mxu0 %v403
    %580 = vmatprep.subr.mxu0 0.0
    %581 = vmatpush1.msra.mxu0 %v404
    %582 = vmatprep.subr.mxu0 0.0
    %583 = vmatpush1.msra.mxu0 %v405
    %584 = vmatprep.subr.mxu0 0.0
    %585 = vmatpush1.msra.mxu0 %v406
    %586 = vmatprep.subr.mxu0 0.0
    %587 = vmatpush1.msra.mxu0 %v407
    %588 = vmatprep.subr.mxu0 0.0
    %589 = vmatpush1.msra.mxu0 0.0
    %590 = vmatprep.subr.mxu0 0.0
    %591 = vmatpush1.msra.mxu0 0.0
    %592 = vmatprep.subr.mxu0 0.0
    %593 = vmatpush1.msra.mxu0 0.0
    %594 = vmatprep.subr.mxu0 0.0
    %595 = vmatpush1.msra.mxu0 0.0
    %596 = vmatprep.subr.mxu0 0.0
    %597 = vmatpush1.msra.mxu0 0.0
    %598 = vmatprep.subr.mxu0 0.0
    %599 = vmatpush1.msra.mxu0 0.0
    %600 = vmatprep.subr.mxu0 0.0
    %601 = vmatpush1.msra.mxu0 0.0
    %602 = vmatprep.subr.mxu0 0.0
    %603 = vmatpush1.msra.mxu0 0.0
    %604 = vmatprep.subr.mxu0 0.0
    %605 = vmatpush1.msra.mxu0 0.0
    %606 = vmatprep.subr.mxu0 0.0
    %607 = vmatpush1.msra.mxu0 0.0
    %608 = vmatprep.subr.mxu0 0.0
    %609 = vmatpush1.msra.mxu0 0.0
    %610 = vmatprep.subr.mxu0 0.0
    %611 = vmatpush1.msra.mxu0 0.0
    %612 = vmatprep.subr.mxu0 0.0
    %613 = vmatpush1.msra.mxu0 0.0
    %614 = vmatprep.subr.mxu0 0.0
    %615 = vmatpush1.msra.mxu0 0.0
    %616 = vmatprep.subr.mxu0 0.0
    %617 = vmatpush1.msra.mxu0 0.0
    %618 = vmatprep.subr.mxu0 0.0
    %619 = vmatpush1.msra.mxu0 0.0
    %620 = vmatprep.mubr.f32.mxu0 0.0
    %621 = vmatmul.mubr.f32.gmra.mrb[0].mxu0 %v553
    %v622 = vpop.f32.mrb[0].mxu0
    %v623 = vadd.f32 0.0, %v622
    %v624 = vpop.f32.mrb[0].mxu0
    %625 = vdwg.mxu0
    %v626 = vadd.f32 %v555, %v623
    %v627 = vmax.f32 %v626, 0.0
    %s628 = scalar_lea.vmem [#allocation3], 24
    %v629 = vld [vmem:[%s628] sm:$0xff]
    %630 = vmatprep.subr.mxu0 0.0
    %631 = vmatpush1.msra.mxu0 %v392
    %632 = vmatprep.subr.mxu0 0.0
    %633 = vmatpush1.msra.mxu0 %v393
    %634 = vmatprep.subr.mxu0 0.0
    %635 = vmatpush1.msra.mxu0 %v394
    %636 = vmatprep.subr.mxu0 0.0
    %637 = vmatpush1.msra.mxu0 %v395
    %638 = vmatprep.subr.mxu0 0.0
    %639 = vmatpush1.msra.mxu0 %v396
    %640 = vmatprep.subr.mxu0 0.0
    %641 = vmatpush1.msra.mxu0 %v397
    %642 = vmatprep.subr.mxu0 0.0
    %643 = vmatpush1.msra.mxu0 %v398
    %644 = vmatprep.subr.mxu0 0.0
    %645 = vmatpush1.msra.mxu0 %v399
    %646 = vmatprep.subr.mxu0 0.0
    %647 = vmatpush1.msra.mxu0 %v400
    %648 = vmatprep.subr.mxu0 0.0
    %649 = vmatpush1.msra.mxu0 %v401
    %650 = vmatprep.subr.mxu0 0.0
    %651 = vmatpush1.msra.mxu0 %v402
    %652 = vmatprep.subr.mxu0 0.0
    %653 = vmatpush1.msra.mxu0 %v403
    %654 = vmatprep.subr.mxu0 0.0
    %655 = vmatpush1.msra.mxu0 %v404
    %656 = vmatprep.subr.mxu0 0.0
    %657 = vmatpush1.msra.mxu0 %v405
    %658 = vmatprep.subr.mxu0 0.0
    %659 = vmatpush1.msra.mxu0 %v406
    %660 = vmatprep.subr.mxu0 0.0
    %661 = vmatpush1.msra.mxu0 %v407
    %662 = vmatprep.subr.mxu0 0.0
    %663 = vmatpush1.msra.mxu0 0.0
    %664 = vmatprep.subr.mxu0 0.0
    %665 = vmatpush1.msra.mxu0 0.0
    %666 = vmatprep.subr.mxu0 0.0
    %667 = vmatpush1.msra.mxu0 0.0
    %668 = vmatprep.subr.mxu0 0.0
    %669 = vmatpush1.msra.mxu0 0.0
    %670 = vmatprep.subr.mxu0 0.0
    %671 = vmatpush1.msra.mxu0 0.0
    %672 = vmatprep.subr.mxu0 0.0
    %673 = vmatpush1.msra.mxu0 0.0
    %674 = vmatprep.subr.mxu0 0.0
    %675 = vmatpush1.msra.mxu0 0.0
    %676 = vmatprep.subr.mxu0 0.0
    %677 = vmatpush1.msra.mxu0 0.0
    %678 = vmatprep.subr.mxu0 0.0
    %679 = vmatpush1.msra.mxu0 0.0
    %680 = vmatprep.subr.mxu0 0.0
    %681 = vmatpush1.msra.mxu0 0.0
    %682 = vmatprep.subr.mxu0 0.0
    %683 = vmatpush1.msra.mxu0 0.0
    %684 = vmatprep.subr.mxu0 0.0
    %685 = vmatpush1.msra.mxu0 0.0
    %686 = vmatprep.subr.mxu0 0.0
    %687 = vmatpush1.msra.mxu0 0.0
    %688 = vmatprep.subr.mxu0 0.0
    %689 = vmatpush1.msra.mxu0 0.0
    %690 = vmatprep.subr.mxu0 0.0
    %691 = vmatpush1.msra.mxu0 0.0
    %692 = vmatprep.subr.mxu0 0.0
    %693 = vmatpush1.msra.mxu0 0.0
    %694 = vmatprep.mubr.f32.mxu0 0.0
    %695 = vmatmul.mubr.f32.gmra.mrb[0].mxu0 %v627
    %v696 = vpop.f32.mrb[0].mxu0
    %v697 = vadd.f32 0.0, %v696
    %v698 = vpop.f32.mrb[0].mxu0
    %699 = vdwg.mxu0
    %v700 = vadd.f32 %v629, %v697
    %v701 = vmax.f32 %v700, 0.0
    %s702 = scalar_lea.vmem [#allocation3], 32
    %v703 = vld [vmem:[%s702] sm:$0xff]
    %704 = vmatprep.subr.mxu0 0.0
    %705 = vmatpush1.msra.mxu0 %v392
    %706 = vmatprep.subr.mxu0 0.0
    %707 = vmatpush1.msra.mxu0 %v393
    %708 = vmatprep.subr.mxu0 0.0
    %709 = vmatpush1.msra.mxu0 %v394
    %710 = vmatprep.subr.mxu0 0.0
    %711 = vmatpush1.msra.mxu0 %v395
    %712 = vmatprep.subr.mxu0 0.0
    %713 = vmatpush1.msra.mxu0 %v396
    %714 = vmatprep.subr.mxu0 0.0
    %715 = vmatpush1.msra.mxu0 %v397
    %716 = vmatprep.subr.mxu0 0.0
    %717 = vmatpush1.msra.mxu0 %v398
    %718 = vmatprep.subr.mxu0 0.0
    %719 = vmatpush1.msra.mxu0 %v399
    %720 = vmatprep.subr.mxu0 0.0
    %721 = vmatpush1.msra.mxu0 %v400
    %722 = vmatprep.subr.mxu0 0.0
    %723 = vmatpush1.msra.mxu0 %v401
    %724 = vmatprep.subr.mxu0 0.0
    %725 = vmatpush1.msra.mxu0 %v402
    %726 = vmatprep.subr.mxu0 0.0
    %727 = vmatpush1.msra.mxu0 %v403
    %728 = vmatprep.subr.mxu0 0.0
    %729 = vmatpush1.msra.mxu0 %v404
    %730 = vmatprep.subr.mxu0 0.0
    %731 = vmatpush1.msra.mxu0 %v405
    %732 = vmatprep.subr.mxu0 0.0
    %733 = vmatpush1.msra.mxu0 %v406
    %734 = vmatprep.subr.mxu0 0.0
    %735 = vmatpush1.msra.mxu0 %v407
    %736 = vmatprep.subr.mxu0 0.0
    %737 = vmatpush1.msra.mxu0 0.0
    %738 = vmatprep.subr.mxu0 0.0
    %739 = vmatpush1.msra.mxu0 0.0
    %740 = vmatprep.subr.mxu0 0.0
    %741 = vmatpush1.msra.mxu0 0.0
    %742 = vmatprep.subr.mxu0 0.0
    %743 = vmatpush1.msra.mxu0 0.0
    %744 = vmatprep.subr.mxu0 0.0
    %745 = vmatpush1.msra.mxu0 0.0
    %746 = vmatprep.subr.mxu0 0.0
    %747 = vmatpush1.msra.mxu0 0.0
    %748 = vmatprep.subr.mxu0 0.0
    %749 = vmatpush1.msra.mxu0 0.0
    %750 = vmatprep.subr.mxu0 0.0
    %751 = vmatpush1.msra.mxu0 0.0
    %752 = vmatprep.subr.mxu0 0.0
    %753 = vmatpush1.msra.mxu0 0.0
    %754 = vmatprep.subr.mxu0 0.0
    %755 = vmatpush1.msra.mxu0 0.0
    %756 = vmatprep.subr.mxu0 0.0
    %757 = vmatpush1.msra.mxu0 0.0
    %758 = vmatprep.subr.mxu0 0.0
    %759 = vmatpush1.msra.mxu0 0.0
    %760 = vmatprep.subr.mxu0 0.0
    %761 = vmatpush1.msra.mxu0 0.0
    %762 = vmatprep.subr.mxu0 0.0
    %763 = vmatpush1.msra.mxu0 0.0
    %764 = vmatprep.subr.mxu0 0.0
    %765 = vmatpush1.msra.mxu0 0.0
    %766 = vmatprep.subr.mxu0 0.0
    %767 = vmatpush1.msra.mxu0 0.0
    %768 = vmatprep.mubr.f32.mxu0 0.0
    %769 = vmatmul.mubr.f32.gmra.mrb[0].mxu0 %v701
    %v770 = vpop.f32.mrb[0].mxu0
    %v771 = vadd.f32 0.0, %v770
    %v772 = vpop.f32.mrb[0].mxu0
    %773 = vdwg.mxu0
    %v774 = vadd.f32 %v703, %v771
    %v775 = vmax.f32 %v774, 0.0
    %s776 = scalar_lea.vmem [#allocation3], 40
    %v777 = vld [vmem:[%s776] sm:$0xff]
    %778 = vmatprep.subr.mxu0 0.0
    %779 = vmatpush1.msra.mxu0 %v392
    %780 = vmatprep.subr.mxu0 0.0
    %781 = vmatpush1.msra.mxu0 %v393
    %782 = vmatprep.subr.mxu0 0.0
    %783 = vmatpush1.msra.mxu0 %v394
    %784 = vmatprep.subr.mxu0 0.0
    %785 = vmatpush1.msra.mxu0 %v395
    %786 = vmatprep.subr.mxu0 0.0
    %787 = vmatpush1.msra.mxu0 %v396
    %788 = vmatprep.subr.mxu0 0.0
    %789 = vmatpush1.msra.mxu0 %v397
    %790 = vmatprep.subr.mxu0 0.0
    %791 = vmatpush1.msra.mxu0 %v398
    %792 = vmatprep.subr.mxu0 0.0
    %793 = vmatpush1.msra.mxu0 %v399
    %794 = vmatprep.subr.mxu0 0.0
    %795 = vmatpush1.msra.mxu0 %v400
    %796 = vmatprep.subr.mxu0 0.0
    %797 = vmatpush1.msra.mxu0 %v401
    %798 = vmatprep.subr.mxu0 0.0
    %799 = vmatpush1.msra.mxu0 %v402
    %800 = vmatprep.subr.mxu0 0.0
    %801 = vmatpush1.msra.mxu0 %v403
    %802 = vmatprep.subr.mxu0 0.0
    %803 = vmatpush1.msra.mxu0 %v404
    %804 = vmatprep.subr.mxu0 0.0
    %805 = vmatpush1.msra.mxu0 %v405
    %806 = vmatprep.subr.mxu0 0.0
    %807 = vmatpush1.msra.mxu0 %v406
    %808 = vmatprep.subr.mxu0 0.0
    %809 = vmatpush1.msra.mxu0 %v407
    %810 = vmatprep.subr.mxu0 0.0
    %811 = vmatpush1.msra.mxu0 0.0
    %812 = vmatprep.subr.mxu0 0.0
    %813 = vmatpush1.msra.mxu0 0.0
    %814 = vmatprep.subr.mxu0 0.0
    %815 = vmatpush1.msra.mxu0 0.0
    %816 = vmatprep.subr.mxu0 0.0
    %817 = vmatpush1.msra.mxu0 0.0
    %818 = vmatprep.subr.mxu0 0.0
    %819 = vmatpush1.msra.mxu0 0.0
    %820 = vmatprep.subr.mxu0 0.0
    %821 = vmatpush1.msra.mxu0 0.0
    %822 = vmatprep.subr.mxu0 0.0
    %823 = vmatpush1.msra.mxu0 0.0
    %824 = vmatprep.subr.mxu0 0.0
    %825 = vmatpush1.msra.mxu0 0.0
    %826 = vmatprep.subr.mxu0 0.0
    %827 = vmatpush1.msra.mxu0 0.0
    %828 = vmatprep.subr.mxu0 0.0
    %829 = vmatpush1.msra.mxu0 0.0
    %830 = vmatprep.subr.mxu0 0.0
    %831 = vmatpush1.msra.mxu0 0.0
    %832 = vmatprep.subr.mxu0 0.0
    %833 = vmatpush1.msra.mxu0 0.0
    %834 = vmatprep.subr.mxu0 0.0
    %835 = vmatpush1.msra.mxu0 0.0
    %836 = vmatprep.subr.mxu0 0.0
    %837 = vmatpush1.msra.mxu0 0.0
    %838 = vmatprep.subr.mxu0 0.0
    %839 = vmatpush1.msra.mxu0 0.0
    %840 = vmatprep.subr.mxu0 0.0
    %841 = vmatpush1.msra.mxu0 0.0
    %842 = vmatprep.mubr.f32.mxu0 0.0
    %843 = vmatmul.mubr.f32.gmra.mrb[0].mxu0 %v775
    %v844 = vpop.f32.mrb[0].mxu0
    %v845 = vadd.f32 0.0, %v844
    %v846 = vpop.f32.mrb[0].mxu0
    %847 = vdwg.mxu0
    %v848 = vadd.f32 %v777, %v845
    %v849 = vmax.f32 %v848, 0.0
    %s850 = scalar_lea.vmem [#allocation3], 48
    %v851 = vld [vmem:[%s850] sm:$0xff]
    %852 = vmatprep.subr.mxu0 0.0
    %853 = vmatpush1.msra.mxu0 %v392
    %854 = vmatprep.subr.mxu0 0.0
    %855 = vmatpush1.msra.mxu0 %v393
    %856 = vmatprep.subr.mxu0 0.0
    %857 = vmatpush1.msra.mxu0 %v394
    %858 = vmatprep.subr.mxu0 0.0
    %859 = vmatpush1.msra.mxu0 %v395
    %860 = vmatprep.subr.mxu0 0.0
    %861 = vmatpush1.msra.mxu0 %v396
    %862 = vmatprep.subr.mxu0 0.0
    %863 = vmatpush1.msra.mxu0 %v397
    %864 = vmatprep.subr.mxu0 0.0
    %865 = vmatpush1.msra.mxu0 %v398
    %866 = vmatprep.subr.mxu0 0.0
    %867 = vmatpush1.msra.mxu0 %v399
    %868 = vmatprep.subr.mxu0 0.0
    %869 = vmatpush1.msra.mxu0 %v400
    %870 = vmatprep.subr.mxu0 0.0
    %871 = vmatpush1.msra.mxu0 %v401
    %872 = vmatprep.subr.mxu0 0.0
    %873 = vmatpush1.msra.mxu0 %v402
    %874 = vmatprep.subr.mxu0 0.0
    %875 = vmatpush1.msra.mxu0 %v403
    %876 = vmatprep.subr.mxu0 0.0
    %877 = vmatpush1.msra.mxu0 %v404
    %878 = vmatprep.subr.mxu0 0.0
    %879 = vmatpush1.msra.mxu0 %v405
    %880 = vmatprep.subr.mxu0 0.0
    %881 = vmatpush1.msra.mxu0 %v406
    %882 = vmatprep.subr.mxu0 0.0
    %883 = vmatpush1.msra.mxu0 %v407
    %884 = vmatprep.subr.mxu0 0.0
    %885 = vmatpush1.msra.mxu0 0.0
    %886 = vmatprep.subr.mxu0 0.0
    %887 = vmatpush1.msra.mxu0 0.0
    %888 = vmatprep.subr.mxu0 0.0
    %889 = vmatpush1.msra.mxu0 0.0
    %890 = vmatprep.subr.mxu0 0.0
    %891 = vmatpush1.msra.mxu0 0.0
    %892 = vmatprep.subr.mxu0 0.0
    %893 = vmatpush1.msra.mxu0 0.0
    %894 = vmatprep.subr.mxu0 0.0
    %895 = vmatpush1.msra.mxu0 0.0
    %896 = vmatprep.subr.mxu0 0.0
    %897 = vmatpush1.msra.mxu0 0.0
    %898 = vmatprep.subr.mxu0 0.0
    %899 = vmatpush1.msra.mxu0 0.0
    %900 = vmatprep.subr.mxu0 0.0
    %901 = vmatpush1.msra.mxu0 0.0
    %902 = vmatprep.subr.mxu0 0.0
    %903 = vmatpush1.msra.mxu0 0.0
    %904 = vmatprep.subr.mxu0 0.0
    %905 = vmatpush1.msra.mxu0 0.0
    %906 = vmatprep.subr.mxu0 0.0
    %907 = vmatpush1.msra.mxu0 0.0
    %908 = vmatprep.subr.mxu0 0.0
    %909 = vmatpush1.msra.mxu0 0.0
    %910 = vmatprep.subr.mxu0 0.0
    %911 = vmatpush1.msra.mxu0 0.0
    %912 = vmatprep.subr.mxu0 0.0
    %913 = vmatpush1.msra.mxu0 0.0
    %914 = vmatprep.subr.mxu0 0.0
    %915 = vmatpush1.msra.mxu0 0.0
    %916 = vmatprep.mubr.f32.mxu0 0.0
    %917 = vmatmul.mubr.f32.gmra.mrb[0].mxu0 %v849
    %v918 = vpop.f32.mrb[0].mxu0
    %v919 = vadd.f32 0.0, %v918
    %v920 = vpop.f32.mrb[0].mxu0
    %921 = vdwg.mxu0
    %v922 = vadd.f32 %v851, %v919
    %v923 = vmax.f32 %v922, 0.0
    %s924 = scalar_lea.vmem [#allocation3], 56
    %v925 = vld [vmem:[%s924] sm:$0xff]
    %926 = vmatprep.subr.mxu0 0.0
    %927 = vmatpush1.msra.mxu0 %v392
    %928 = vmatprep.subr.mxu0 0.0
    %929 = vmatpush1.msra.mxu0 %v393
    %930 = vmatprep.subr.mxu0 0.0
    %931 = vmatpush1.msra.mxu0 %v394
    %932 = vmatprep.subr.mxu0 0.0
    %933 = vmatpush1.msra.mxu0 %v395
    %934 = vmatprep.subr.mxu0 0.0
    %935 = vmatpush1.msra.mxu0 %v396
    %936 = vmatprep.subr.mxu0 0.0
    %937 = vmatpush1.msra.mxu0 %v397
    %938 = vmatprep.subr.mxu0 0.0
    %939 = vmatpush1.msra.mxu0 %v398
    %940 = vmatprep.subr.mxu0 0.0
    %941 = vmatpush1.msra.mxu0 %v399
    %942 = vmatprep.subr.mxu0 0.0
    %943 = vmatpush1.msra.mxu0 %v400
    %944 = vmatprep.subr.mxu0 0.0
    %945 = vmatpush1.msra.mxu0 %v401
    %946 = vmatprep.subr.mxu0 0.0
    %947 = vmatpush1.msra.mxu0 %v402
    %948 = vmatprep.subr.mxu0 0.0
    %949 = vmatpush1.msra.mxu0 %v403
    %950 = vmatprep.subr.mxu0 0.0
    %951 = vmatpush1.msra.mxu0 %v404
    %952 = vmatprep.subr.mxu0 0.0
    %953 = vmatpush1.msra.mxu0 %v405
    %954 = vmatprep.subr.mxu0 0.0
    %955 = vmatpush1.msra.mxu0 %v406
    %956 = vmatprep.subr.mxu0 0.0
    %957 = vmatpush1.msra.mxu0 %v407
    %958 = vmatprep.subr.mxu0 0.0
    %959 = vmatpush1.msra.mxu0 0.0
    %960 = vmatprep.subr.mxu0 0.0
    %961 = vmatpush1.msra.mxu0 0.0
    %962 = vmatprep.subr.mxu0 0.0
    %963 = vmatpush1.msra.mxu0 0.0
    %964 = vmatprep.subr.mxu0 0.0
    %965 = vmatpush1.msra.mxu0 0.0
    %966 = vmatprep.subr.mxu0 0.0
    %967 = vmatpush1.msra.mxu0 0.0
    %968 = vmatprep.subr.mxu0 0.0
    %969 = vmatpush1.msra.mxu0 0.0
    %970 = vmatprep.subr.mxu0 0.0
    %971 = vmatpush1.msra.mxu0 0.0
    %972 = vmatprep.subr.mxu0 0.0
    %973 = vmatpush1.msra.mxu0 0.0
    %974 = vmatprep.subr.mxu0 0.0
    %975 = vmatpush1.msra.mxu0 0.0
    %976 = vmatprep.subr.mxu0 0.0
    %977 = vmatpush1.msra.mxu0 0.0
    %978 = vmatprep.subr.mxu0 0.0
    %979 = vmatpush1.msra.mxu0 0.0
    %980 = vmatprep.subr.mxu0 0.0
    %981 = vmatpush1.msra.mxu0 0.0
    %982 = vmatprep.subr.mxu0 0.0
    %983 = vmatpush1.msra.mxu0 0.0
    %984 = vmatprep.subr.mxu0 0.0
    %985 = vmatpush1.msra.mxu0 0.0
    %986 = vmatprep.subr.mxu0 0.0
    %987 = vmatpush1.msra.mxu0 0.0
    %988 = vmatprep.subr.mxu0 0.0
    %989 = vmatpush1.msra.mxu0 0.0
    %990 = vmatprep.mubr.f32.mxu0 0.0
    %991 = vmatmul.mubr.f32.gmra.mrb[0].mxu0 %v923
    %v992 = vpop.f32.mrb[0].mxu0
    %v993 = vadd.f32 0.0, %v992
    %v994 = vpop.f32.mrb[0].mxu0
    %995 = vdwg.mxu0
    %v996 = vadd.f32 %v925, %v993
    %v997 = vmax.f32 %v996, 0.0
    %s998 = scalar_lea.vmem [#allocation3], 64
    %v999 = vld [vmem:[%s998] sm:$0xff]
    %1000 = vmatprep.subr.mxu0 0.0
    %1001 = vmatpush1.msra.mxu0 %v392
    %1002 = vmatprep.subr.mxu0 0.0
    %1003 = vmatpush1.msra.mxu0 %v393
    %1004 = vmatprep.subr.mxu0 0.0
    %1005 = vmatpush1.msra.mxu0 %v394
    %1006 = vmatprep.subr.mxu0 0.0
    %1007 = vmatpush1.msra.mxu0 %v395
    %1008 = vmatprep.subr.mxu0 0.0
    %1009 = vmatpush1.msra.mxu0 %v396
    %1010 = vmatprep.subr.mxu0 0.0
    %1011 = vmatpush1.msra.mxu0 %v397
    %1012 = vmatprep.subr.mxu0 0.0
    %1013 = vmatpush1.msra.mxu0 %v398
    %1014 = vmatprep.subr.mxu0 0.0
    %1015 = vmatpush1.msra.mxu0 %v399
    %1016 = vmatprep.subr.mxu0 0.0
    %1017 = vmatpush1.msra.mxu0 %v400
    %1018 = vmatprep.subr.mxu0 0.0
    %1019 = vmatpush1.msra.mxu0 %v401
    %1020 = vmatprep.subr.mxu0 0.0
    %1021 = vmatpush1.msra.mxu0 %v402
    %1022 = vmatprep.subr.mxu0 0.0
    %1023 = vmatpush1.msra.mxu0 %v403
    %1024 = vmatprep.subr.mxu0 0.0
    %1025 = vmatpush1.msra.mxu0 %v404
    %1026 = vmatprep.subr.mxu0 0.0
    %1027 = vmatpush1.msra.mxu0 %v405
    %1028 = vmatprep.subr.mxu0 0.0
    %1029 = vmatpush1.msra.mxu0 %v406
    %1030 = vmatprep.subr.mxu0 0.0
    %1031 = vmatpush1.msra.mxu0 %v407
    %1032 = vmatprep.subr.mxu0 0.0
    %1033 = vmatpush1.msra.mxu0 0.0
    %1034 = vmatprep.subr.mxu0 0.0
    %1035 = vmatpush1.msra.mxu0 0.0
    %1036 = vmatprep.subr.mxu0 0.0
    %1037 = vmatpush1.msra.mxu0 0.0
    %1038 = vmatprep.subr.mxu0 0.0
    %1039 = vmatpush1.msra.mxu0 0.0
    %1040 = vmatprep.subr.mxu0 0.0
    %1041 = vmatpush1.msra.mxu0 0.0
    %1042 = vmatprep.subr.mxu0 0.0
    %1043 = vmatpush1.msra.mxu0 0.0
    %1044 = vmatprep.subr.mxu0 0.0
    %1045 = vmatpush1.msra.mxu0 0.0
    %1046 = vmatprep.subr.mxu0 0.0
    %1047 = vmatpush1.msra.mxu0 0.0
    %1048 = vmatprep.subr.mxu0 0.0
    %1049 = vmatpush1.msra.mxu0 0.0
    %1050 = vmatprep.subr.mxu0 0.0
    %1051 = vmatpush1.msra.mxu0 0.0
    %1052 = vmatprep.subr.mxu0 0.0
    %1053 = vmatpush1.msra.mxu0 0.0
    %1054 = vmatprep.subr.mxu0 0.0
    %1055 = vmatpush1.msra.mxu0 0.0
    %1056 = vmatprep.subr.mxu0 0.0
    %1057 = vmatpush1.msra.mxu0 0.0
    %1058 = vmatprep.subr.mxu0 0.0
    %1059 = vmatpush1.msra.mxu0 0.0
    %1060 = vmatprep.subr.mxu0 0.0
    %1061 = vmatpush1.msra.mxu0 0.0
    %1062 = vmatprep.subr.mxu0 0.0
    %1063 = vmatpush1.msra.mxu0 0.0
    %1064 = vmatprep.mubr.f32.mxu0 0.0
    %1065 = vmatmul.mubr.f32.gmra.mrb[0].mxu0 %v997
    %v1066 = vpop.f32.mrb[0].mxu0
    %v1067 = vadd.f32 0.0, %v1066
    %v1068 = vpop.f32.mrb[0].mxu0
    %1069 = vdwg.mxu0
    %v1070 = vadd.f32 %v999, %v1067
    %v1071 = vmax.f32 %v1070, 0.0
    %s1072 = scalar_lea.vmem [#allocation3], 72
    %v1073 = vld [vmem:[%s1072] sm:$0xff]
    %1074 = vmatprep.subr.mxu0 0.0
    %1075 = vmatpush1.msra.mxu0 %v392
    %1076 = vmatprep.subr.mxu0 0.0
    %1077 = vmatpush1.msra.mxu0 %v393
    %1078 = vmatprep.subr.mxu0 0.0
    %1079 = vmatpush1.msra.mxu0 %v394
    %1080 = vmatprep.subr.mxu0 0.0
    %1081 = vmatpush1.msra.mxu0 %v395
    %1082 = vmatprep.subr.mxu0 0.0
    %1083 = vmatpush1.msra.mxu0 %v396
    %1084 = vmatprep.subr.mxu0 0.0
    %1085 = vmatpush1.msra.mxu0 %v397
    %1086 = vmatprep.subr.mxu0 0.0
    %1087 = vmatpush1.msra.mxu0 %v398
    %1088 = vmatprep.subr.mxu0 0.0
    %1089 = vmatpush1.msra.mxu0 %v399
    %1090 = vmatprep.subr.mxu0 0.0
    %1091 = vmatpush1.msra.mxu0 %v400
    %1092 = vmatprep.subr.mxu0 0.0
    %1093 = vmatpush1.msra.mxu0 %v401
    %1094 = vmatprep.subr.mxu0 0.0
    %1095 = vmatpush1.msra.mxu0 %v402
    %1096 = vmatprep.subr.mxu0 0.0
    %1097 = vmatpush1.msra.mxu0 %v403
    %1098 = vmatprep.subr.mxu0 0.0
    %1099 = vmatpush1.msra.mxu0 %v404
    %1100 = vmatprep.subr.mxu0 0.0
    %1101 = vmatpush1.msra.mxu0 %v405
    %1102 = vmatprep.subr.mxu0 0.0
    %1103 = vmatpush1.msra.mxu0 %v406
    %1104 = vmatprep.subr.mxu0 0.0
    %1105 = vmatpush1.msra.mxu0 %v407
    %1106 = vmatprep.subr.mxu0 0.0
    %1107 = vmatpush1.msra.mxu0 0.0
    %1108 = vmatprep.subr.mxu0 0.0
    %1109 = vmatpush1.msra.mxu0 0.0
    %1110 = vmatprep.subr.mxu0 0.0
    %1111 = vmatpush1.msra.mxu0 0.0
    %1112 = vmatprep.subr.mxu0 0.0
    %1113 = vmatpush1.msra.mxu0 0.0
    %1114 = vmatprep.subr.mxu0 0.0
    %1115 = vmatpush1.msra.mxu0 0.0
    %1116 = vmatprep.subr.mxu0 0.0
    %1117 = vmatpush1.msra.mxu0 0.0
    %1118 = vmatprep.subr.mxu0 0.0
    %1119 = vmatpush1.msra.mxu0 0.0
    %1120 = vmatprep.subr.mxu0 0.0
    %1121 = vmatpush1.msra.mxu0 0.0
    %1122 = vmatprep.subr.mxu0 0.0
    %1123 = vmatpush1.msra.mxu0 0.0
    %1124 = vmatprep.subr.mxu0 0.0
    %1125 = vmatpush1.msra.mxu0 0.0
    %1126 = vmatprep.subr.mxu0 0.0
    %1127 = vmatpush1.msra.mxu0 0.0
    %1128 = vmatprep.subr.mxu0 0.0
    %1129 = vmatpush1.msra.mxu0 0.0
    %1130 = vmatprep.subr.mxu0 0.0
    %1131 = vmatpush1.msra.mxu0 0.0
    %1132 = vmatprep.subr.mxu0 0.0
    %1133 = vmatpush1.msra.mxu0 0.0
    %1134 = vmatprep.subr.mxu0 0.0
    %1135 = vmatpush1.msra.mxu0 0.0
    %1136 = vmatprep.subr.mxu0 0.0
    %1137 = vmatpush1.msra.mxu0 0.0
    %1138 = vmatprep.mubr.f32.mxu0 0.0
    %1139 = vmatmul.mubr.f32.gmra.mrb[0].mxu0 %v1071
    %v1140 = vpop.f32.mrb[0].mxu0
    %v1141 = vadd.f32 0.0, %v1140
    %v1142 = vpop.f32.mrb[0].mxu0
    %1143 = vdwg.mxu0
    %v1144 = vadd.f32 %v1073, %v1141
    %v1145 = vmax.f32 %v1144, 0.0
    %s1146 = scalar_lea.vmem [#allocation3], 80
    %v1147 = vld [vmem:[%s1146] sm:$0xff]
    %1148 = vmatprep.subr.mxu0 0.0
    %1149 = vmatpush1.msra.mxu0 %v392
    %1150 = vmatprep.subr.mxu0 0.0
    %1151 = vmatpush1.msra.mxu0 %v393
    %1152 = vmatprep.subr.mxu0 0.0
    %1153 = vmatpush1.msra.mxu0 %v394
    %1154 = vmatprep.subr.mxu0 0.0
    %1155 = vmatpush1.msra.mxu0 %v395
    %1156 = vmatprep.subr.mxu0 0.0
    %1157 = vmatpush1.msra.mxu0 %v396
    %1158 = vmatprep.subr.mxu0 0.0
    %1159 = vmatpush1.msra.mxu0 %v397
    %1160 = vmatprep.subr.mxu0 0.0
    %1161 = vmatpush1.msra.mxu0 %v398
    %1162 = vmatprep.subr.mxu0 0.0
    %1163 = vmatpush1.msra.mxu0 %v399
    %1164 = vmatprep.subr.mxu0 0.0
    %1165 = vmatpush1.msra.mxu0 %v400
    %1166 = vmatprep.subr.mxu0 0.0
    %1167 = vmatpush1.msra.mxu0 %v401
    %1168 = vmatprep.subr.mxu0 0.0
    %1169 = vmatpush1.msra.mxu0 %v402
    %1170 = vmatprep.subr.mxu0 0.0
    %1171 = vmatpush1.msra.mxu0 %v403
    %1172 = vmatprep.subr.mxu0 0.0
    %1173 = vmatpush1.msra.mxu0 %v404
    %1174 = vmatprep.subr.mxu0 0.0
    %1175 = vmatpush1.msra.mxu0 %v405
    %1176 = vmatprep.subr.mxu0 0.0
    %1177 = vmatpush1.msra.mxu0 %v406
    %1178 = vmatprep.subr.mxu0 0.0
    %1179 = vmatpush1.msra.mxu0 %v407
    %1180 = vmatprep.subr.mxu0 0.0
    %1181 = vmatpush1.msra.mxu0 0.0
    %1182 = vmatprep.subr.mxu0 0.0
    %1183 = vmatpush1.msra.mxu0 0.0
    %1184 = vmatprep.subr.mxu0 0.0
    %1185 = vmatpush1.msra.mxu0 0.0
    %1186 = vmatprep.subr.mxu0 0.0
    %1187 = vmatpush1.msra.mxu0 0.0
    %1188 = vmatprep.subr.mxu0 0.0
    %1189 = vmatpush1.msra.mxu0 0.0
    %1190 = vmatprep.subr.mxu0 0.0
    %1191 = vmatpush1.msra.mxu0 0.0
    %1192 = vmatprep.subr.mxu0 0.0
    %1193 = vmatpush1.msra.mxu0 0.0
    %1194 = vmatprep.subr.mxu0 0.0
    %1195 = vmatpush1.msra.mxu0 0.0
    %1196 = vmatprep.subr.mxu0 0.0
    %1197 = vmatpush1.msra.mxu0 0.0
    %1198 = vmatprep.subr.mxu0 0.0
    %1199 = vmatpush1.msra.mxu0 0.0
    %1200 = vmatprep.subr.mxu0 0.0
    %1201 = vmatpush1.msra.mxu0 0.0
    %1202 = vmatprep.subr.mxu0 0.0
    %1203 = vmatpush1.msra.mxu0 0.0
    %1204 = vmatprep.subr.mxu0 0.0
    %1205 = vmatpush1.msra.mxu0 0.0
    %1206 = vmatprep.subr.mxu0 0.0
    %1207 = vmatpush1.msra.mxu0 0.0
    %1208 = vmatprep.subr.mxu0 0.0
    %1209 = vmatpush1.msra.mxu0 0.0
    %1210 = vmatprep.subr.mxu0 0.0
    %1211 = vmatpush1.msra.mxu0 0.0
    %1212 = vmatprep.mubr.f32.mxu0 0.0
    %1213 = vmatmul.mubr.f32.gmra.mrb[0].mxu0 %v1145
    %v1214 = vpop.f32.mrb[0].mxu0
    %v1215 = vadd.f32 0.0, %v1214
    %v1216 = vpop.f32.mrb[0].mxu0
    %1217 = vdwg.mxu0
    %v1218 = vadd.f32 %v1147, %v1215
    %v1219 = vmax.f32 %v1218, 0.0
    %s1220 = scalar_lea.vmem [#allocation3], 88
    %v1221 = vld [vmem:[%s1220] sm:$0xff]
    %1222 = vmatprep.subr.mxu0 0.0
    %1223 = vmatpush1.msra.mxu0 %v392
    %1224 = vmatprep.subr.mxu0 0.0
    %1225 = vmatpush1.msra.mxu0 %v393
    %1226 = vmatprep.subr.mxu0 0.0
    %1227 = vmatpush1.msra.mxu0 %v394
    %1228 = vmatprep.subr.mxu0 0.0
    %1229 = vmatpush1.msra.mxu0 %v395
    %1230 = vmatprep.subr.mxu0 0.0
    %1231 = vmatpush1.msra.mxu0 %v396
    %1232 = vmatprep.subr.mxu0 0.0
    %1233 = vmatpush1.msra.mxu0 %v397
    %1234 = vmatprep.subr.mxu0 0.0
    %1235 = vmatpush1.msra.mxu0 %v398
    %1236 = vmatprep.subr.mxu0 0.0
    %1237 = vmatpush1.msra.mxu0 %v399
    %1238 = vmatprep.subr.mxu0 0.0
    %1239 = vmatpush1.msra.mxu0 %v400
    %1240 = vmatprep.subr.mxu0 0.0
    %1241 = vmatpush1.msra.mxu0 %v401
    %1242 = vmatprep.subr.mxu0 0.0
    %1243 = vmatpush1.msra.mxu0 %v402
    %1244 = vmatprep.subr.mxu0 0.0
    %1245 = vmatpush1.msra.mxu0 %v403
    %1246 = vmatprep.subr.mxu0 0.0
    %1247 = vmatpush1.msra.mxu0 %v404
    %1248 = vmatprep.subr.mxu0 0.0
    %1249 = vmatpush1.msra.mxu0 %v405
    %1250 = vmatprep.subr.mxu0 0.0
    %1251 = vmatpush1.msra.mxu0 %v406
    %1252 = vmatprep.subr.mxu0 0.0
    %1253 = vmatpush1.msra.mxu0 %v407
    %1254 = vmatprep.subr.mxu0 0.0
    %1255 = vmatpush1.msra.mxu0 0.0
    %1256 = vmatprep.subr.mxu0 0.0
    %1257 = vmatpush1.msra.mxu0 0.0
    %1258 = vmatprep.subr.mxu0 0.0
    %1259 = vmatpush1.msra.mxu0 0.0
    %1260 = vmatprep.subr.mxu0 0.0
    %1261 = vmatpush1.msra.mxu0 0.0
    %1262 = vmatprep.subr.mxu0 0.0
    %1263 = vmatpush1.msra.mxu0 0.0
    %1264 = vmatprep.subr.mxu0 0.0
    %1265 = vmatpush1.msra.mxu0 0.0
    %1266 = vmatprep.subr.mxu0 0.0
    %1267 = vmatpush1.msra.mxu0 0.0
    %1268 = vmatprep.subr.mxu0 0.0
    %1269 = vmatpush1.msra.mxu0 0.0
    %1270 = vmatprep.subr.mxu0 0.0
    %1271 = vmatpush1.msra.mxu0 0.0
    %1272 = vmatprep.subr.mxu0 0.0
    %1273 = vmatpush1.msra.mxu0 0.0
    %1274 = vmatprep.subr.mxu0 0.0
    %1275 = vmatpush1.msra.mxu0 0.0
    %1276 = vmatprep.subr.mxu0 0.0
    %1277 = vmatpush1.msra.mxu0 0.0
    %1278 = vmatprep.subr.mxu0 0.0
    %1279 = vmatpush1.msra.mxu0 0.0
    %1280 = vmatprep.subr.mxu0 0.0
    %1281 = vmatpush1.msra.mxu0 0.0
    %1282 = vmatprep.subr.mxu0 0.0
    %1283 = vmatpush1.msra.mxu0 0.0
    %1284 = vmatprep.subr.mxu0 0.0
    %1285 = vmatpush1.msra.mxu0 0.0
    %1286 = vmatprep.mubr.f32.mxu0 0.0
    %1287 = vmatmul.mubr.f32.gmra.mrb[0].mxu0 %v1219
    %v1288 = vpop.f32.mrb[0].mxu0
    %v1289 = vadd.f32 0.0, %v1288
    %v1290 = vpop.f32.mrb[0].mxu0
    %1291 = vdwg.mxu0
    %v1292 = vadd.f32 %v1221, %v1289
    %v1293 = vmax.f32 %v1292, 0.0
    %s1294 = scalar_lea.vmem [#allocation3], 96
    %v1295 = vld [vmem:[%s1294] sm:$0xff]
    %1296 = vmatprep.subr.mxu0 0.0
    %1297 = vmatpush1.msra.mxu0 %v392
    %1298 = vmatprep.subr.mxu0 0.0
    %1299 = vmatpush1.msra.mxu0 %v393
    %1300 = vmatprep.subr.mxu0 0.0
    %1301 = vmatpush1.msra.mxu0 %v394
    %1302 = vmatprep.subr.mxu0 0.0
    %1303 = vmatpush1.msra.mxu0 %v395
    %1304 = vmatprep.subr.mxu0 0.0
    %1305 = vmatpush1.msra.mxu0 %v396
    %1306 = vmatprep.subr.mxu0 0.0
    %1307 = vmatpush1.msra.mxu0 %v397
    %1308 = vmatprep.subr.mxu0 0.0
    %1309 = vmatpush1.msra.mxu0 %v398
    %1310 = vmatprep.subr.mxu0 0.0
    %1311 = vmatpush1.msra.mxu0 %v399
    %1312 = vmatprep.subr.mxu0 0.0
    %1313 = vmatpush1.msra.mxu0 %v400
    %1314 = vmatprep.subr.mxu0 0.0
    %1315 = vmatpush1.msra.mxu0 %v401
    %1316 = vmatprep.subr.mxu0 0.0
    %1317 = vmatpush1.msra.mxu0 %v402
    %1318 = vmatprep.subr.mxu0 0.0
    %1319 = vmatpush1.msra.mxu0 %v403
    %1320 = vmatprep.subr.mxu0 0.0
    %1321 = vmatpush1.msra.mxu0 %v404
    %1322 = vmatprep.subr.mxu0 0.0
    %1323 = vmatpush1.msra.mxu0 %v405
    %1324 = vmatprep.subr.mxu0 0.0
    %1325 = vmatpush1.msra.mxu0 %v406
    %1326 = vmatprep.subr.mxu0 0.0
    %1327 = vmatpush1.msra.mxu0 %v407
    %1328 = vmatprep.subr.mxu0 0.0
    %1329 = vmatpush1.msra.mxu0 0.0
    %1330 = vmatprep.subr.mxu0 0.0
    %1331 = vmatpush1.msra.mxu0 0.0
    %1332 = vmatprep.subr.mxu0 0.0
    %1333 = vmatpush1.msra.mxu0 0.0
    %1334 = vmatprep.subr.mxu0 0.0
    %1335 = vmatpush1.msra.mxu0 0.0
    %1336 = vmatprep.subr.mxu0 0.0
    %1337 = vmatpush1.msra.mxu0 0.0
    %1338 = vmatprep.subr.mxu0 0.0
    %1339 = vmatpush1.msra.mxu0 0.0
    %1340 = vmatprep.subr.mxu0 0.0
    %1341 = vmatpush1.msra.mxu0 0.0
    %1342 = vmatprep.subr.mxu0 0.0
    %1343 = vmatpush1.msra.mxu0 0.0
    %1344 = vmatprep.subr.mxu0 0.0
    %1345 = vmatpush1.msra.mxu0 0.0
    %1346 = vmatprep.subr.mxu0 0.0
    %1347 = vmatpush1.msra.mxu0 0.0
    %1348 = vmatprep.subr.mxu0 0.0
    %1349 = vmatpush1.msra.mxu0 0.0
    %1350 = vmatprep.subr.mxu0 0.0
    %1351 = vmatpush1.msra.mxu0 0.0
    %1352 = vmatprep.subr.mxu0 0.0
    %1353 = vmatpush1.msra.mxu0 0.0
    %1354 = vmatprep.subr.mxu0 0.0
    %1355 = vmatpush1.msra.mxu0 0.0
    %1356 = vmatprep.subr.mxu0 0.0
    %1357 = vmatpush1.msra.mxu0 0.0
    %1358 = vmatprep.subr.mxu0 0.0
    %1359 = vmatpush1.msra.mxu0 0.0
    %1360 = vmatprep.mubr.f32.mxu0 0.0
    %1361 = vmatmul.mubr.f32.gmra.mrb[0].mxu0 %v1293
    %v1362 = vpop.f32.mrb[0].mxu0
    %v1363 = vadd.f32 0.0, %v1362
    %v1364 = vpop.f32.mrb[0].mxu0
    %1365 = vdwg.mxu0
    %v1366 = vadd.f32 %v1295, %v1363
    %v1367 = vmax.f32 %v1366, 0.0
    %s1368 = scalar_lea.vmem [#allocation3], 104
    %v1369 = vld [vmem:[%s1368] sm:$0xff]
    %1370 = vmatprep.subr.mxu0 0.0
    %1371 = vmatpush1.msra.mxu0 %v392
    %1372 = vmatprep.subr.mxu0 0.0
    %1373 = vmatpush1.msra.mxu0 %v393
    %1374 = vmatprep.subr.mxu0 0.0
    %1375 = vmatpush1.msra.mxu0 %v394
    %1376 = vmatprep.subr.mxu0 0.0
    %1377 = vmatpush1.msra.mxu0 %v395
    %1378 = vmatprep.subr.mxu0 0.0
    %1379 = vmatpush1.msra.mxu0 %v396
    %1380 = vmatprep.subr.mxu0 0.0
    %1381 = vmatpush1.msra.mxu0 %v397
    %1382 = vmatprep.subr.mxu0 0.0
    %1383 = vmatpush1.msra.mxu0 %v398
    %1384 = vmatprep.subr.mxu0 0.0
    %1385 = vmatpush1.msra.mxu0 %v399
    %1386 = vmatprep.subr.mxu0 0.0
    %1387 = vmatpush1.msra.mxu0 %v400
    %1388 = vmatprep.subr.mxu0 0.0
    %1389 = vmatpush1.msra.mxu0 %v401
    %1390 = vmatprep.subr.mxu0 0.0
    %1391 = vmatpush1.msra.mxu0 %v402
    %1392 = vmatprep.subr.mxu0 0.0
    %1393 = vmatpush1.msra.mxu0 %v403
    %1394 = vmatprep.subr.mxu0 0.0
    %1395 = vmatpush1.msra.mxu0 %v404
    %1396 = vmatprep.subr.mxu0 0.0
    %1397 = vmatpush1.msra.mxu0 %v405
    %1398 = vmatprep.subr.mxu0 0.0
    %1399 = vmatpush1.msra.mxu0 %v406
    %1400 = vmatprep.subr.mxu0 0.0
    %1401 = vmatpush1.msra.mxu0 %v407
    %1402 = vmatprep.subr.mxu0 0.0
    %1403 = vmatpush1.msra.mxu0 0.0
    %1404 = vmatprep.subr.mxu0 0.0
    %1405 = vmatpush1.msra.mxu0 0.0
    %1406 = vmatprep.subr.mxu0 0.0
    %1407 = vmatpush1.msra.mxu0 0.0
    %1408 = vmatprep.subr.mxu0 0.0
    %1409 = vmatpush1.msra.mxu0 0.0
    %1410 = vmatprep.subr.mxu0 0.0
    %1411 = vmatpush1.msra.mxu0 0.0
    %1412 = vmatprep.subr.mxu0 0.0
    %1413 = vmatpush1.msra.mxu0 0.0
    %1414 = vmatprep.subr.mxu0 0.0
    %1415 = vmatpush1.msra.mxu0 0.0
    %1416 = vmatprep.subr.mxu0 0.0
    %1417 = vmatpush1.msra.mxu0 0.0
    %1418 = vmatprep.subr.mxu0 0.0
    %1419 = vmatpush1.msra.mxu0 0.0
    %1420 = vmatprep.subr.mxu0 0.0
    %1421 = vmatpush1.msra.mxu0 0.0
    %1422 = vmatprep.subr.mxu0 0.0
    %1423 = vmatpush1.msra.mxu0 0.0
    %1424 = vmatprep.subr.mxu0 0.0
    %1425 = vmatpush1.msra.mxu0 0.0
    %1426 = vmatprep.subr.mxu0 0.0
    %1427 = vmatpush1.msra.mxu0 0.0
    %1428 = vmatprep.subr.mxu0 0.0
    %1429 = vmatpush1.msra.mxu0 0.0
    %1430 = vmatprep.subr.mxu0 0.0
    %1431 = vmatpush1.msra.mxu0 0.0
    %1432 = vmatprep.subr.mxu0 0.0
    %1433 = vmatpush1.msra.mxu0 0.0
    %1434 = vmatprep.mubr.f32.mxu0 0.0
    %1435 = vmatmul.mubr.f32.gmra.mrb[0].mxu0 %v1367
    %v1436 = vpop.f32.mrb[0].mxu0
    %v1437 = vadd.f32 0.0, %v1436
    %v1438 = vpop.f32.mrb[0].mxu0
    %1439 = vdwg.mxu0
    %v1440 = vadd.f32 %v1369, %v1437
    %v1441 = vmax.f32 %v1440, 0.0
    %s1442 = scalar_lea.vmem [#allocation3], 112
    %v1443 = vld [vmem:[%s1442] sm:$0xff]
    %1444 = vmatprep.subr.mxu0 0.0
    %1445 = vmatpush1.msra.mxu0 %v392
    %1446 = vmatprep.subr.mxu0 0.0
    %1447 = vmatpush1.msra.mxu0 %v393
    %1448 = vmatprep.subr.mxu0 0.0
    %1449 = vmatpush1.msra.mxu0 %v394
    %1450 = vmatprep.subr.mxu0 0.0
    %1451 = vmatpush1.msra.mxu0 %v395
    %1452 = vmatprep.subr.mxu0 0.0
    %1453 = vmatpush1.msra.mxu0 %v396
    %1454 = vmatprep.subr.mxu0 0.0
    %1455 = vmatpush1.msra.mxu0 %v397
    %1456 = vmatprep.subr.mxu0 0.0
    %1457 = vmatpush1.msra.mxu0 %v398
    %1458 = vmatprep.subr.mxu0 0.0
    %1459 = vmatpush1.msra.mxu0 %v399
    %1460 = vmatprep.subr.mxu0 0.0
    %1461 = vmatpush1.msra.mxu0 %v400
    %1462 = vmatprep.subr.mxu0 0.0
    %1463 = vmatpush1.msra.mxu0 %v401
    %1464 = vmatprep.subr.mxu0 0.0
    %1465 = vmatpush1.msra.mxu0 %v402
    %1466 = vmatprep.subr.mxu0 0.0
    %1467 = vmatpush1.msra.mxu0 %v403
    %1468 = vmatprep.subr.mxu0 0.0
    %1469 = vmatpush1.msra.mxu0 %v404
    %1470 = vmatprep.subr.mxu0 0.0
    %1471 = vmatpush1.msra.mxu0 %v405
    %1472 = vmatprep.subr.mxu0 0.0
    %1473 = vmatpush1.msra.mxu0 %v406
    %1474 = vmatprep.subr.mxu0 0.0
    %1475 = vmatpush1.msra.mxu0 %v407
    %1476 = vmatprep.subr.mxu0 0.0
    %1477 = vmatpush1.msra.mxu0 0.0
    %1478 = vmatprep.subr.mxu0 0.0
    %1479 = vmatpush1.msra.mxu0 0.0
    %1480 = vmatprep.subr.mxu0 0.0
    %1481 = vmatpush1.msra.mxu0 0.0
    %1482 = vmatprep.subr.mxu0 0.0
    %1483 = vmatpush1.msra.mxu0 0.0
    %1484 = vmatprep.subr.mxu0 0.0
    %1485 = vmatpush1.msra.mxu0 0.0
    %1486 = vmatprep.subr.mxu0 0.0
    %1487 = vmatpush1.msra.mxu0 0.0
    %1488 = vmatprep.subr.mxu0 0.0
    %1489 = vmatpush1.msra.mxu0 0.0
    %1490 = vmatprep.subr.mxu0 0.0
    %1491 = vmatpush1.msra.mxu0 0.0
    %1492 = vmatprep.subr.mxu0 0.0
    %1493 = vmatpush1.msra.mxu0 0.0
    %1494 = vmatprep.subr.mxu0 0.0
    %1495 = vmatpush1.msra.mxu0 0.0
    %1496 = vmatprep.subr.mxu0 0.0
    %1497 = vmatpush1.msra.mxu0 0.0
    %1498 = vmatprep.subr.mxu0 0.0
    %1499 = vmatpush1.msra.mxu0 0.0
    %1500 = vmatprep.subr.mxu0 0.0
    %1501 = vmatpush1.msra.mxu0 0.0
    %1502 = vmatprep.subr.mxu0 0.0
    %1503 = vmatpush1.msra.mxu0 0.0
    %1504 = vmatprep.subr.mxu0 0.0
    %1505 = vmatpush1.msra.mxu0 0.0
    %1506 = vmatprep.subr.mxu0 0.0
    %1507 = vmatpush1.msra.mxu0 0.0
    %1508 = vmatprep.mubr.f32.mxu0 0.0
    %1509 = vmatmul.mubr.f32.gmra.mrb[0].mxu0 %v1441
    %v1510 = vpop.f32.mrb[0].mxu0
    %v1511 = vadd.f32 0.0, %v1510
    %v1512 = vpop.f32.mrb[0].mxu0
    %1513 = vdwg.mxu0
    %v1514 = vadd.f32 %v1443, %v1511
    %v1515 = vmax.f32 %v1514, 0.0
    %s1516 = scalar_lea.vmem [#allocation3], 120
    %v1517 = vld [vmem:[%s1516] sm:$0xff]
    %1518 = vmatprep.subr.mxu0 0.0
    %1519 = vmatpush1.msra.mxu0 %v392
    %1520 = vmatprep.subr.mxu0 0.0
    %1521 = vmatpush1.msra.mxu0 %v393
    %1522 = vmatprep.subr.mxu0 0.0
    %1523 = vmatpush1.msra.mxu0 %v394
    %1524 = vmatprep.subr.mxu0 0.0
    %1525 = vmatpush1.msra.mxu0 %v395
    %1526 = vmatprep.subr.mxu0 0.0
    %1527 = vmatpush1.msra.mxu0 %v396
    %1528 = vmatprep.subr.mxu0 0.0
    %1529 = vmatpush1.msra.mxu0 %v397
    %1530 = vmatprep.subr.mxu0 0.0
    %1531 = vmatpush1.msra.mxu0 %v398
    %1532 = vmatprep.subr.mxu0 0.0
    %1533 = vmatpush1.msra.mxu0 %v399
    %1534 = vmatprep.subr.mxu0 0.0
    %1535 = vmatpush1.msra.mxu0 %v400
    %1536 = vmatprep.subr.mxu0 0.0
    %1537 = vmatpush1.msra.mxu0 %v401
    %1538 = vmatprep.subr.mxu0 0.0
    %1539 = vmatpush1.msra.mxu0 %v402
    %1540 = vmatprep.subr.mxu0 0.0
    %1541 = vmatpush1.msra.mxu0 %v403
    %1542 = vmatprep.subr.mxu0 0.0
    %1543 = vmatpush1.msra.mxu0 %v404
    %1544 = vmatprep.subr.mxu0 0.0
    %1545 = vmatpush1.msra.mxu0 %v405
    %1546 = vmatprep.subr.mxu0 0.0
    %1547 = vmatpush1.msra.mxu0 %v406
    %1548 = vmatprep.subr.mxu0 0.0
    %1549 = vmatpush1.msra.mxu0 %v407
    %1550 = vmatprep.subr.mxu0 0.0
    %1551 = vmatpush1.msra.mxu0 0.0
    %1552 = vmatprep.subr.mxu0 0.0
    %1553 = vmatpush1.msra.mxu0 0.0
    %1554 = vmatprep.subr.mxu0 0.0
    %1555 = vmatpush1.msra.mxu0 0.0
    %1556 = vmatprep.subr.mxu0 0.0
    %1557 = vmatpush1.msra.mxu0 0.0
    %1558 = vmatprep.subr.mxu0 0.0
    %1559 = vmatpush1.msra.mxu0 0.0
    %1560 = vmatprep.subr.mxu0 0.0
    %1561 = vmatpush1.msra.mxu0 0.0
    %1562 = vmatprep.subr.mxu0 0.0
    %1563 = vmatpush1.msra.mxu0 0.0
    %1564 = vmatprep.subr.mxu0 0.0
    %1565 = vmatpush1.msra.mxu0 0.0
    %1566 = vmatprep.subr.mxu0 0.0
    %1567 = vmatpush1.msra.mxu0 0.0
    %1568 = vmatprep.subr.mxu0 0.0
    %1569 = vmatpush1.msra.mxu0 0.0
    %1570 = vmatprep.subr.mxu0 0.0
    %1571 = vmatpush1.msra.mxu0 0.0
    %1572 = vmatprep.subr.mxu0 0.0
    %1573 = vmatpush1.msra.mxu0 0.0
    %1574 = vmatprep.subr.mxu0 0.0
    %1575 = vmatpush1.msra.mxu0 0.0
    %1576 = vmatprep.subr.mxu0 0.0
    %1577 = vmatpush1.msra.mxu0 0.0
    %1578 = vmatprep.subr.mxu0 0.0
    %1579 = vmatpush1.msra.mxu0 0.0
    %1580 = vmatprep.subr.mxu0 0.0
    %1581 = vmatpush1.msra.mxu0 0.0
    %1582 = vmatprep.mubr.f32.mxu0 0.0
    %1583 = vmatmul.mubr.f32.gmra.mrb[0].mxu0 %v1515
    %v1584 = vpop.f32.mrb[0].mxu0
    %v1585 = vadd.f32 0.0, %v1584
    %v1586 = vpop.f32.mrb[0].mxu0
    %1587 = vdwg.mxu0
    %v1588 = vadd.f32 %v1517, %v1585
    %v1589 = vmax.f32 %v1588, 0.0
    %s1590 = scalar_lea.vmem [#allocation3], 128
    %v1591 = vld [vmem:[%s1590] sm:$0xff]
    %1592 = vmatprep.subr.mxu0 0.0
    %1593 = vmatpush1.msra.mxu0 %v392
    %1594 = vmatprep.subr.mxu0 0.0
    %1595 = vmatpush1.msra.mxu0 %v393
    %1596 = vmatprep.subr.mxu0 0.0
    %1597 = vmatpush1.msra.mxu0 %v394
    %1598 = vmatprep.subr.mxu0 0.0
    %1599 = vmatpush1.msra.mxu0 %v395
    %1600 = vmatprep.subr.mxu0 0.0
    %1601 = vmatpush1.msra.mxu0 %v396
    %1602 = vmatprep.subr.mxu0 0.0
    %1603 = vmatpush1.msra.mxu0 %v397
    %1604 = vmatprep.subr.mxu0 0.0
    %1605 = vmatpush1.msra.mxu0 %v398
    %1606 = vmatprep.subr.mxu0 0.0
    %1607 = vmatpush1.msra.mxu0 %v399
    %1608 = vmatprep.subr.mxu0 0.0
    %1609 = vmatpush1.msra.mxu0 %v400
    %1610 = vmatprep.subr.mxu0 0.0
    %1611 = vmatpush1.msra.mxu0 %v401
    %1612 = vmatprep.subr.mxu0 0.0
    %1613 = vmatpush1.msra.mxu0 %v402
    %1614 = vmatprep.subr.mxu0 0.0
    %1615 = vmatpush1.msra.mxu0 %v403
    %1616 = vmatprep.subr.mxu0 0.0
    %1617 = vmatpush1.msra.mxu0 %v404
    %1618 = vmatprep.subr.mxu0 0.0
    %1619 = vmatpush1.msra.mxu0 %v405
    %1620 = vmatprep.subr.mxu0 0.0
    %1621 = vmatpush1.msra.mxu0 %v406
    %1622 = vmatprep.subr.mxu0 0.0
    %1623 = vmatpush1.msra.mxu0 %v407
    %1624 = vmatprep.subr.mxu0 0.0
    %1625 = vmatpush1.msra.mxu0 0.0
    %1626 = vmatprep.subr.mxu0 0.0
    %1627 = vmatpush1.msra.mxu0 0.0
    %1628 = vmatprep.subr.mxu0 0.0
    %1629 = vmatpush1.msra.mxu0 0.0
    %1630 = vmatprep.subr.mxu0 0.0
    %1631 = vmatpush1.msra.mxu0 0.0
    %1632 = vmatprep.subr.mxu0 0.0
    %1633 = vmatpush1.msra.mxu0 0.0
    %1634 = vmatprep.subr.mxu0 0.0
    %1635 = vmatpush1.msra.mxu0 0.0
    %1636 = vmatprep.subr.mxu0 0.0
    %1637 = vmatpush1.msra.mxu0 0.0
    %1638 = vmatprep.subr.mxu0 0.0
    %1639 = vmatpush1.msra.mxu0 0.0
    %1640 = vmatprep.subr.mxu0 0.0
    %1641 = vmatpush1.msra.mxu0 0.0
    %1642 = vmatprep.subr.mxu0 0.0
    %1643 = vmatpush1.msra.mxu0 0.0
    %1644 = vmatprep.subr.mxu0 0.0
    %1645 = vmatpush1.msra.mxu0 0.0
    %1646 = vmatprep.subr.mxu0 0.0
    %1647 = vmatpush1.msra.mxu0 0.0
    %1648 = vmatprep.subr.mxu0 0.0
    %1649 = vmatpush1.msra.mxu0 0.0
    %1650 = vmatprep.subr.mxu0 0.0
    %1651 = vmatpush1.msra.mxu0 0.0
    %1652 = vmatprep.subr.mxu0 0.0
    %1653 = vmatpush1.msra.mxu0 0.0
    %1654 = vmatprep.subr.mxu0 0.0
    %1655 = vmatpush1.msra.mxu0 0.0
    %1656 = vmatprep.mubr.f32.mxu0 0.0
    %1657 = vmatmul.mubr.f32.gmra.mrb[0].mxu0 %v1589
    %v1658 = vpop.f32.mrb[0].mxu0
    %v1659 = vadd.f32 0.0, %v1658
    %v1660 = vpop.f32.mrb[0].mxu0
    %1661 = vdwg.mxu0
    %v1662 = vadd.f32 %v1591, %v1659
    %v1663 = vmax.f32 %v1662, 0.0
    %s1664 = scalar_lea.vmem [#allocation3], 136
    %v1665 = vld [vmem:[%s1664] sm:$0xff]
    %1666 = vmatprep.subr.mxu0 0.0
    %1667 = vmatpush1.msra.mxu0 %v392
    %1668 = vmatprep.subr.mxu0 0.0
    %1669 = vmatpush1.msra.mxu0 %v393
    %1670 = vmatprep.subr.mxu0 0.0
    %1671 = vmatpush1.msra.mxu0 %v394
    %1672 = vmatprep.subr.mxu0 0.0
    %1673 = vmatpush1.msra.mxu0 %v395
    %1674 = vmatprep.subr.mxu0 0.0
    %1675 = vmatpush1.msra.mxu0 %v396
    %1676 = vmatprep.subr.mxu0 0.0
    %1677 = vmatpush1.msra.mxu0 %v397
    %1678 = vmatprep.subr.mxu0 0.0
    %1679 = vmatpush1.msra.mxu0 %v398
    %1680 = vmatprep.subr.mxu0 0.0
    %1681 = vmatpush1.msra.mxu0 %v399
    %1682 = vmatprep.subr.mxu0 0.0
    %1683 = vmatpush1.msra.mxu0 %v400
    %1684 = vmatprep.subr.mxu0 0.0
    %1685 = vmatpush1.msra.mxu0 %v401
    %1686 = vmatprep.subr.mxu0 0.0
    %1687 = vmatpush1.msra.mxu0 %v402
    %1688 = vmatprep.subr.mxu0 0.0
    %1689 = vmatpush1.msra.mxu0 %v403
    %1690 = vmatprep.subr.mxu0 0.0
    %1691 = vmatpush1.msra.mxu0 %v404
    %1692 = vmatprep.subr.mxu0 0.0
    %1693 = vmatpush1.msra.mxu0 %v405
    %1694 = vmatprep.subr.mxu0 0.0
    %1695 = vmatpush1.msra.mxu0 %v406
    %1696 = vmatprep.subr.mxu0 0.0
    %1697 = vmatpush1.msra.mxu0 %v407
    %1698 = vmatprep.subr.mxu0 0.0
    %1699 = vmatpush1.msra.mxu0 0.0
    %1700 = vmatprep.subr.mxu0 0.0
    %1701 = vmatpush1.msra.mxu0 0.0
    %1702 = vmatprep.subr.mxu0 0.0
    %1703 = vmatpush1.msra.mxu0 0.0
    %1704 = vmatprep.subr.mxu0 0.0
    %1705 = vmatpush1.msra.mxu0 0.0
    %1706 = vmatprep.subr.mxu0 0.0
    %1707 = vmatpush1.msra.mxu0 0.0
    %1708 = vmatprep.subr.mxu0 0.0
    %1709 = vmatpush1.msra.mxu0 0.0
    %1710 = vmatprep.subr.mxu0 0.0
    %1711 = vmatpush1.msra.mxu0 0.0
    %1712 = vmatprep.subr.mxu0 0.0
    %1713 = vmatpush1.msra.mxu0 0.0
    %1714 = vmatprep.subr.mxu0 0.0
    %1715 = vmatpush1.msra.mxu0 0.0
    %1716 = vmatprep.subr.mxu0 0.0
    %1717 = vmatpush1.msra.mxu0 0.0
    %1718 = vmatprep.subr.mxu0 0.0
    %1719 = vmatpush1.msra.mxu0 0.0
    %1720 = vmatprep.subr.mxu0 0.0
    %1721 = vmatpush1.msra.mxu0 0.0
    %1722 = vmatprep.subr.mxu0 0.0
    %1723 = vmatpush1.msra.mxu0 0.0
    %1724 = vmatprep.subr.mxu0 0.0
    %1725 = vmatpush1.msra.mxu0 0.0
    %1726 = vmatprep.subr.mxu0 0.0
    %1727 = vmatpush1.msra.mxu0 0.0
    %1728 = vmatprep.subr.mxu0 0.0
    %1729 = vmatpush1.msra.mxu0 0.0
    %1730 = vmatprep.mubr.f32.mxu0 0.0
    %1731 = vmatmul.mubr.f32.gmra.mrb[0].mxu0 %v1663
    %v1732 = vpop.f32.mrb[0].mxu0
    %v1733 = vadd.f32 0.0, %v1732
    %v1734 = vpop.f32.mrb[0].mxu0
    %1735 = vdwg.mxu0
    %v1736 = vadd.f32 %v1665, %v1733
    %v1737 = vmax.f32 %v1736, 0.0
    %s1738 = scalar_lea.vmem [#allocation3], 144
    %v1739 = vld [vmem:[%s1738] sm:$0xff]
    %1740 = vmatprep.subr.mxu0 0.0
    %1741 = vmatpush1.msra.mxu0 %v392
    %1742 = vmatprep.subr.mxu0 0.0
    %1743 = vmatpush1.msra.mxu0 %v393
    %1744 = vmatprep.subr.mxu0 0.0
    %1745 = vmatpush1.msra.mxu0 %v394
    %1746 = vmatprep.subr.mxu0 0.0
    %1747 = vmatpush1.msra.mxu0 %v395
    %1748 = vmatprep.subr.mxu0 0.0
    %1749 = vmatpush1.msra.mxu0 %v396
    %1750 = vmatprep.subr.mxu0 0.0
    %1751 = vmatpush1.msra.mxu0 %v397
    %1752 = vmatprep.subr.mxu0 0.0
    %1753 = vmatpush1.msra.mxu0 %v398
    %1754 = vmatprep.subr.mxu0 0.0
    %1755 = vmatpush1.msra.mxu0 %v399
    %1756 = vmatprep.subr.mxu0 0.0
    %1757 = vmatpush1.msra.mxu0 %v400
    %1758 = vmatprep.subr.mxu0 0.0
    %1759 = vmatpush1.msra.mxu0 %v401
    %1760 = vmatprep.subr.mxu0 0.0
    %1761 = vmatpush1.msra.mxu0 %v402
    %1762 = vmatprep.subr.mxu0 0.0
    %1763 = vmatpush1.msra.mxu0 %v403
    %1764 = vmatprep.subr.mxu0 0.0
    %1765 = vmatpush1.msra.mxu0 %v404
    %1766 = vmatprep.subr.mxu0 0.0
    %1767 = vmatpush1.msra.mxu0 %v405
    %1768 = vmatprep.subr.mxu0 0.0
    %1769 = vmatpush1.msra.mxu0 %v406
    %1770 = vmatprep.subr.mxu0 0.0
    %1771 = vmatpush1.msra.mxu0 %v407
    %1772 = vmatprep.subr.mxu0 0.0
    %1773 = vmatpush1.msra.mxu0 0.0
    %1774 = vmatprep.subr.mxu0 0.0
    %1775 = vmatpush1.msra.mxu0 0.0
    %1776 = vmatprep.subr.mxu0 0.0
    %1777 = vmatpush1.msra.mxu0 0.0
    %1778 = vmatprep.subr.mxu0 0.0
    %1779 = vmatpush1.msra.mxu0 0.0
    %1780 = vmatprep.subr.mxu0 0.0
    %1781 = vmatpush1.msra.mxu0 0.0
    %1782 = vmatprep.subr.mxu0 0.0
    %1783 = vmatpush1.msra.mxu0 0.0
    %1784 = vmatprep.subr.mxu0 0.0
    %1785 = vmatpush1.msra.mxu0 0.0
    %1786 = vmatprep.subr.mxu0 0.0
    %1787 = vmatpush1.msra.mxu0 0.0
    %1788 = vmatprep.subr.mxu0 0.0
    %1789 = vmatpush1.msra.mxu0 0.0
    %1790 = vmatprep.subr.mxu0 0.0
    %1791 = vmatpush1.msra.mxu0 0.0
    %1792 = vmatprep.subr.mxu0 0.0
    %1793 = vmatpush1.msra.mxu0 0.0
    %1794 = vmatprep.subr.mxu0 0.0
    %1795 = vmatpush1.msra.mxu0 0.0
    %1796 = vmatprep.subr.mxu0 0.0
    %1797 = vmatpush1.msra.mxu0 0.0
    %1798 = vmatprep.subr.mxu0 0.0
    %1799 = vmatpush1.msra.mxu0 0.0
    %1800 = vmatprep.subr.mxu0 0.0
    %1801 = vmatpush1.msra.mxu0 0.0
    %1802 = vmatprep.subr.mxu0 0.0
    %1803 = vmatpush1.msra.mxu0 0.0
    %1804 = vmatprep.mubr.f32.mxu0 0.0
    %1805 = vmatmul.mubr.f32.gmra.mrb[0].mxu0 %v1737
    %v1806 = vpop.f32.mrb[0].mxu0
    %v1807 = vadd.f32 0.0, %v1806
    %v1808 = vpop.f32.mrb[0].mxu0
    %1809 = vdwg.mxu0
    %v1810 = vadd.f32 %v1739, %v1807
    %v1811 = vmax.f32 %v1810, 0.0
    %s1812 = scalar_lea.vmem [#allocation3], 152
    %v1813 = vld [vmem:[%s1812] sm:$0xff]
    %1814 = vmatprep.subr.mxu0 0.0
    %1815 = vmatpush1.msra.mxu0 %v392
    %1816 = vmatprep.subr.mxu0 0.0
    %1817 = vmatpush1.msra.mxu0 %v393
    %1818 = vmatprep.subr.mxu0 0.0
    %1819 = vmatpush1.msra.mxu0 %v394
    %1820 = vmatprep.subr.mxu0 0.0
    %1821 = vmatpush1.msra.mxu0 %v395
    %1822 = vmatprep.subr.mxu0 0.0
    %1823 = vmatpush1.msra.mxu0 %v396
    %1824 = vmatprep.subr.mxu0 0.0
    %1825 = vmatpush1.msra.mxu0 %v397
    %1826 = vmatprep.subr.mxu0 0.0
    %1827 = vmatpush1.msra.mxu0 %v398
    %1828 = vmatprep.subr.mxu0 0.0
    %1829 = vmatpush1.msra.mxu0 %v399
    %1830 = vmatprep.subr.mxu0 0.0
    %1831 = vmatpush1.msra.mxu0 %v400
    %1832 = vmatprep.subr.mxu0 0.0
    %1833 = vmatpush1.msra.mxu0 %v401
    %1834 = vmatprep.subr.mxu0 0.0
    %1835 = vmatpush1.msra.mxu0 %v402
    %1836 = vmatprep.subr.mxu0 0.0
    %1837 = vmatpush1.msra.mxu0 %v403
    %1838 = vmatprep.subr.mxu0 0.0
    %1839 = vmatpush1.msra.mxu0 %v404
    %1840 = vmatprep.subr.mxu0 0.0
    %1841 = vmatpush1.msra.mxu0 %v405
    %1842 = vmatprep.subr.mxu0 0.0
    %1843 = vmatpush1.msra.mxu0 %v406
    %1844 = vmatprep.subr.mxu0 0.0
    %1845 = vmatpush1.msra.mxu0 %v407
    %1846 = vmatprep.subr.mxu0 0.0
    %1847 = vmatpush1.msra.mxu0 0.0
    %1848 = vmatprep.subr.mxu0 0.0
    %1849 = vmatpush1.msra.mxu0 0.0
    %1850 = vmatprep.subr.mxu0 0.0
    %1851 = vmatpush1.msra.mxu0 0.0
    %1852 = vmatprep.subr.mxu0 0.0
    %1853 = vmatpush1.msra.mxu0 0.0
    %1854 = vmatprep.subr.mxu0 0.0
    %1855 = vmatpush1.msra.mxu0 0.0
    %1856 = vmatprep.subr.mxu0 0.0
    %1857 = vmatpush1.msra.mxu0 0.0
    %1858 = vmatprep.subr.mxu0 0.0
    %1859 = vmatpush1.msra.mxu0 0.0
    %1860 = vmatprep.subr.mxu0 0.0
    %1861 = vmatpush1.msra.mxu0 0.0
    %1862 = vmatprep.subr.mxu0 0.0
    %1863 = vmatpush1.msra.mxu0 0.0
    %1864 = vmatprep.subr.mxu0 0.0
    %1865 = vmatpush1.msra.mxu0 0.0
    %1866 = vmatprep.subr.mxu0 0.0
    %1867 = vmatpush1.msra.mxu0 0.0
    %1868 = vmatprep.subr.mxu0 0.0
    %1869 = vmatpush1.msra.mxu0 0.0
    %1870 = vmatprep.subr.mxu0 0.0
    %1871 = vmatpush1.msra.mxu0 0.0
    %1872 = vmatprep.subr.mxu0 0.0
    %1873 = vmatpush1.msra.mxu0 0.0
    %1874 = vmatprep.subr.mxu0 0.0
    %1875 = vmatpush1.msra.mxu0 0.0
    %1876 = vmatprep.subr.mxu0 0.0
    %1877 = vmatpush1.msra.mxu0 0.0
    %1878 = vmatprep.mubr.f32.mxu0 0.0
    %1879 = vmatmul.mubr.f32.gmra.mrb[0].mxu0 %v1811
    %v1880 = vpop.f32.mrb[0].mxu0
    %v1881 = vadd.f32 0.0, %v1880
    %v1882 = vpop.f32.mrb[0].mxu0
    %1883 = vdwg.mxu0
    %v1884 = vadd.f32 %v1813, %v1881
    %v1885 = vmax.f32 %v1884, 0.0
    %s1886 = scalar_lea.vmem [#allocation3], 160
    %v1887 = vld [vmem:[%s1886] sm:$0xff]
    %1888 = vmatprep.subr.mxu0 0.0
    %1889 = vmatpush1.msra.mxu0 %v392
    %1890 = vmatprep.subr.mxu0 0.0
    %1891 = vmatpush1.msra.mxu0 %v393
    %1892 = vmatprep.subr.mxu0 0.0
    %1893 = vmatpush1.msra.mxu0 %v394
    %1894 = vmatprep.subr.mxu0 0.0
    %1895 = vmatpush1.msra.mxu0 %v395
    %1896 = vmatprep.subr.mxu0 0.0
    %1897 = vmatpush1.msra.mxu0 %v396
    %1898 = vmatprep.subr.mxu0 0.0
    %1899 = vmatpush1.msra.mxu0 %v397
    %1900 = vmatprep.subr.mxu0 0.0
    %1901 = vmatpush1.msra.mxu0 %v398
    %1902 = vmatprep.subr.mxu0 0.0
    %1903 = vmatpush1.msra.mxu0 %v399
    %1904 = vmatprep.subr.mxu0 0.0
    %1905 = vmatpush1.msra.mxu0 %v400
    %1906 = vmatprep.subr.mxu0 0.0
    %1907 = vmatpush1.msra.mxu0 %v401
    %1908 = vmatprep.subr.mxu0 0.0
    %1909 = vmatpush1.msra.mxu0 %v402
    %1910 = vmatprep.subr.mxu0 0.0
    %1911 = vmatpush1.msra.mxu0 %v403
    %1912 = vmatprep.subr.mxu0 0.0
    %1913 = vmatpush1.msra.mxu0 %v404
    %1914 = vmatprep.subr.mxu0 0.0
    %1915 = vmatpush1.msra.mxu0 %v405
    %1916 = vmatprep.subr.mxu0 0.0
    %1917 = vmatpush1.msra.mxu0 %v406
    %1918 = vmatprep.subr.mxu0 0.0
    %1919 = vmatpush1.msra.mxu0 %v407
    %1920 = vmatprep.subr.mxu0 0.0
    %1921 = vmatpush1.msra.mxu0 0.0
    %1922 = vmatprep.subr.mxu0 0.0
    %1923 = vmatpush1.msra.mxu0 0.0
    %1924 = vmatprep.subr.mxu0 0.0
    %1925 = vmatpush1.msra.mxu0 0.0
    %1926 = vmatprep.subr.mxu0 0.0
    %1927 = vmatpush1.msra.mxu0 0.0
    %1928 = vmatprep.subr.mxu0 0.0
    %1929 = vmatpush1.msra.mxu0 0.0
    %1930 = vmatprep.subr.mxu0 0.0
    %1931 = vmatpush1.msra.mxu0 0.0
    %1932 = vmatprep.subr.mxu0 0.0
    %1933 = vmatpush1.msra.mxu0 0.0
    %1934 = vmatprep.subr.mxu0 0.0
    %1935 = vmatpush1.msra.mxu0 0.0
    %1936 = vmatprep.subr.mxu0 0.0
    %1937 = vmatpush1.msra.mxu0 0.0
    %1938 = vmatprep.subr.mxu0 0.0
    %1939 = vmatpush1.msra.mxu0 0.0
    %1940 = vmatprep.subr.mxu0 0.0
    %1941 = vmatpush1.msra.mxu0 0.0
    %1942 = vmatprep.subr.mxu0 0.0
    %1943 = vmatpush1.msra.mxu0 0.0
    %1944 = vmatprep.subr.mxu0 0.0
    %1945 = vmatpush1.msra.mxu0 0.0
    %1946 = vmatprep.subr.mxu0 0.0
    %1947 = vmatpush1.msra.mxu0 0.0
    %1948 = vmatprep.subr.mxu0 0.0
    %1949 = vmatpush1.msra.mxu0 0.0
    %1950 = vmatprep.subr.mxu0 0.0
    %1951 = vmatpush1.msra.mxu0 0.0
    %1952 = vmatprep.mubr.f32.mxu0 0.0
    %1953 = vmatmul.mubr.f32.gmra.mrb[0].mxu0 %v1885
    %v1954 = vpop.f32.mrb[0].mxu0
    %v1955 = vadd.f32 0.0, %v1954
    %v1956 = vpop.f32.mrb[0].mxu0
    %1957 = vdwg.mxu0
    %v1958 = vadd.f32 %v1887, %v1955
    %v1959 = vmax.f32 %v1958, 0.0
    %s1960 = scalar_lea.vmem [#allocation3], 168
    %v1961 = vld [vmem:[%s1960] sm:$0xff]
    %1962 = vmatprep.subr.mxu0 0.0
    %1963 = vmatpush1.msra.mxu0 %v392
    %1964 = vmatprep.subr.mxu0 0.0
    %1965 = vmatpush1.msra.mxu0 %v393
    %1966 = vmatprep.subr.mxu0 0.0
    %1967 = vmatpush1.msra.mxu0 %v394
    %1968 = vmatprep.subr.mxu0 0.0
    %1969 = vmatpush1.msra.mxu0 %v395
    %1970 = vmatprep.subr.mxu0 0.0
    %1971 = vmatpush1.msra.mxu0 %v396
    %1972 = vmatprep.subr.mxu0 0.0
    %1973 = vmatpush1.msra.mxu0 %v397
    %1974 = vmatprep.subr.mxu0 0.0
    %1975 = vmatpush1.msra.mxu0 %v398
    %1976 = vmatprep.subr.mxu0 0.0
    %1977 = vmatpush1.msra.mxu0 %v399
    %1978 = vmatprep.subr.mxu0 0.0
    %1979 = vmatpush1.msra.mxu0 %v400
    %1980 = vmatprep.subr.mxu0 0.0
    %1981 = vmatpush1.msra.mxu0 %v401
    %1982 = vmatprep.subr.mxu0 0.0
    %1983 = vmatpush1.msra.mxu0 %v402
    %1984 = vmatprep.subr.mxu0 0.0
    %1985 = vmatpush1.msra.mxu0 %v403
    %1986 = vmatprep.subr.mxu0 0.0
    %1987 = vmatpush1.msra.mxu0 %v404
    %1988 = vmatprep.subr.mxu0 0.0
    %1989 = vmatpush1.msra.mxu0 %v405
    %1990 = vmatprep.subr.mxu0 0.0
    %1991 = vmatpush1.msra.mxu0 %v406
    %1992 = vmatprep.subr.mxu0 0.0
    %1993 = vmatpush1.msra.mxu0 %v407
    %1994 = vmatprep.subr.mxu0 0.0
    %1995 = vmatpush1.msra.mxu0 0.0
    %1996 = vmatprep.subr.mxu0 0.0
    %1997 = vmatpush1.msra.mxu0 0.0
    %1998 = vmatprep.subr.mxu0 0.0
    %1999 = vmatpush1.msra.mxu0 0.0
    %2000 = vmatprep.subr.mxu0 0.0
    %2001 = vmatpush1.msra.mxu0 0.0
    %2002 = vmatprep.subr.mxu0 0.0
    %2003 = vmatpush1.msra.mxu0 0.0
    %2004 = vmatprep.subr.mxu0 0.0
    %2005 = vmatpush1.msra.mxu0 0.0
    %2006 = vmatprep.subr.mxu0 0.0
    %2007 = vmatpush1.msra.mxu0 0.0
    %2008 = vmatprep.subr.mxu0 0.0
    %2009 = vmatpush1.msra.mxu0 0.0
    %2010 = vmatprep.subr.mxu0 0.0
    %2011 = vmatpush1.msra.mxu0 0.0
    %2012 = vmatprep.subr.mxu0 0.0
    %2013 = vmatpush1.msra.mxu0 0.0
    %2014 = vmatprep.subr.mxu0 0.0
    %2015 = vmatpush1.msra.mxu0 0.0
    %2016 = vmatprep.subr.mxu0 0.0
    %2017 = vmatpush1.msra.mxu0 0.0
    %2018 = vmatprep.subr.mxu0 0.0
    %2019 = vmatpush1.msra.mxu0 0.0
    %2020 = vmatprep.subr.mxu0 0.0
    %2021 = vmatpush1.msra.mxu0 0.0
    %2022 = vmatprep.subr.mxu0 0.0
    %2023 = vmatpush1.msra.mxu0 0.0
    %2024 = vmatprep.subr.mxu0 0.0
    %2025 = vmatpush1.msra.mxu0 0.0
    %2026 = vmatprep.mubr.f32.mxu0 0.0
    %2027 = vmatmul.mubr.f32.gmra.mrb[0].mxu0 %v1959
    %v2028 = vpop.f32.mrb[0].mxu0
    %v2029 = vadd.f32 0.0, %v2028
    %v2030 = vpop.f32.mrb[0].mxu0
    %2031 = vdwg.mxu0
    %v2032 = vadd.f32 %v1961, %v2029
    %v2033 = vmax.f32 %v2032, 0.0
    %s2034 = scalar_lea.vmem [#allocation3], 176
    %v2035 = vld [vmem:[%s2034] sm:$0xff]
    %2036 = vmatprep.subr.mxu0 0.0
    %2037 = vmatpush1.msra.mxu0 %v392
    %2038 = vmatprep.subr.mxu0 0.0
    %2039 = vmatpush1.msra.mxu0 %v393
    %2040 = vmatprep.subr.mxu0 0.0
    %2041 = vmatpush1.msra.mxu0 %v394
    %2042 = vmatprep.subr.mxu0 0.0
    %2043 = vmatpush1.msra.mxu0 %v395
    %2044 = vmatprep.subr.mxu0 0.0
    %2045 = vmatpush1.msra.mxu0 %v396
    %2046 = vmatprep.subr.mxu0 0.0
    %2047 = vmatpush1.msra.mxu0 %v397
    %2048 = vmatprep.subr.mxu0 0.0
    %2049 = vmatpush1.msra.mxu0 %v398
    %2050 = vmatprep.subr.mxu0 0.0
    %2051 = vmatpush1.msra.mxu0 %v399
    %2052 = vmatprep.subr.mxu0 0.0
    %2053 = vmatpush1.msra.mxu0 %v400
    %2054 = vmatprep.subr.mxu0 0.0
    %2055 = vmatpush1.msra.mxu0 %v401
    %2056 = vmatprep.subr.mxu0 0.0
    %2057 = vmatpush1.msra.mxu0 %v402
    %2058 = vmatprep.subr.mxu0 0.0
    %2059 = vmatpush1.msra.mxu0 %v403
    %2060 = vmatprep.subr.mxu0 0.0
    %2061 = vmatpush1.msra.mxu0 %v404
    %2062 = vmatprep.subr.mxu0 0.0
    %2063 = vmatpush1.msra.mxu0 %v405
    %2064 = vmatprep.subr.mxu0 0.0
    %2065 = vmatpush1.msra.mxu0 %v406
    %2066 = vmatprep.subr.mxu0 0.0
    %2067 = vmatpush1.msra.mxu0 %v407
    %2068 = vmatprep.subr.mxu0 0.0
    %2069 = vmatpush1.msra.mxu0 0.0
    %2070 = vmatprep.subr.mxu0 0.0
    %2071 = vmatpush1.msra.mxu0 0.0
    %2072 = vmatprep.subr.mxu0 0.0
    %2073 = vmatpush1.msra.mxu0 0.0
    %2074 = vmatprep.subr.mxu0 0.0
    %2075 = vmatpush1.msra.mxu0 0.0
    %2076 = vmatprep.subr.mxu0 0.0
    %2077 = vmatpush1.msra.mxu0 0.0
    %2078 = vmatprep.subr.mxu0 0.0
    %2079 = vmatpush1.msra.mxu0 0.0
    %2080 = vmatprep.subr.mxu0 0.0
    %2081 = vmatpush1.msra.mxu0 0.0
    %2082 = vmatprep.subr.mxu0 0.0
    %2083 = vmatpush1.msra.mxu0 0.0
    %2084 = vmatprep.subr.mxu0 0.0
    %2085 = vmatpush1.msra.mxu0 0.0
    %2086 = vmatprep.subr.mxu0 0.0
    %2087 = vmatpush1.msra.mxu0 0.0
    %2088 = vmatprep.subr.mxu0 0.0
    %2089 = vmatpush1.msra.mxu0 0.0
    %2090 = vmatprep.subr.mxu0 0.0
    %2091 = vmatpush1.msra.mxu0 0.0
    %2092 = vmatprep.subr.mxu0 0.0
    %2093 = vmatpush1.msra.mxu0 0.0
    %2094 = vmatprep.subr.mxu0 0.0
    %2095 = vmatpush1.msra.mxu0 0.0
    %2096 = vmatprep.subr.mxu0 0.0
    %2097 = vmatpush1.msra.mxu0 0.0
    %2098 = vmatprep.subr.mxu0 0.0
    %2099 = vmatpush1.msra.mxu0 0.0
    %2100 = vmatprep.mubr.f32.mxu0 0.0
    %2101 = vmatmul.mubr.f32.gmra.mrb[0].mxu0 %v2033
    %v2102 = vpop.f32.mrb[0].mxu0
    %v2103 = vadd.f32 0.0, %v2102
    %v2104 = vpop.f32.mrb[0].mxu0
    %2105 = vdwg.mxu0
    %v2106 = vadd.f32 %v2035, %v2103
    %v2107 = vmax.f32 %v2106, 0.0
    %s2108 = scalar_lea.vmem [#allocation3], 184
    %v2109 = vld [vmem:[%s2108] sm:$0xff]
    %2110 = vmatprep.subr.mxu0 0.0
    %2111 = vmatpush1.msra.mxu0 %v392
    %2112 = vmatprep.subr.mxu0 0.0
    %2113 = vmatpush1.msra.mxu0 %v393
    %2114 = vmatprep.subr.mxu0 0.0
    %2115 = vmatpush1.msra.mxu0 %v394
    %2116 = vmatprep.subr.mxu0 0.0
    %2117 = vmatpush1.msra.mxu0 %v395
    %2118 = vmatprep.subr.mxu0 0.0
    %2119 = vmatpush1.msra.mxu0 %v396
    %2120 = vmatprep.subr.mxu0 0.0
    %2121 = vmatpush1.msra.mxu0 %v397
    %2122 = vmatprep.subr.mxu0 0.0
    %2123 = vmatpush1.msra.mxu0 %v398
    %2124 = vmatprep.subr.mxu0 0.0
    %2125 = vmatpush1.msra.mxu0 %v399
    %2126 = vmatprep.subr.mxu0 0.0
    %2127 = vmatpush1.msra.mxu0 %v400
    %2128 = vmatprep.subr.mxu0 0.0
    %2129 = vmatpush1.msra.mxu0 %v401
    %2130 = vmatprep.subr.mxu0 0.0
    %2131 = vmatpush1.msra.mxu0 %v402
    %2132 = vmatprep.subr.mxu0 0.0
    %2133 = vmatpush1.msra.mxu0 %v403
    %2134 = vmatprep.subr.mxu0 0.0
    %2135 = vmatpush1.msra.mxu0 %v404
    %2136 = vmatprep.subr.mxu0 0.0
    %2137 = vmatpush1.msra.mxu0 %v405
    %2138 = vmatprep.subr.mxu0 0.0
    %2139 = vmatpush1.msra.mxu0 %v406
    %2140 = vmatprep.subr.mxu0 0.0
    %2141 = vmatpush1.msra.mxu0 %v407
    %2142 = vmatprep.subr.mxu0 0.0
    %2143 = vmatpush1.msra.mxu0 0.0
    %2144 = vmatprep.subr.mxu0 0.0
    %2145 = vmatpush1.msra.mxu0 0.0
    %2146 = vmatprep.subr.mxu0 0.0
    %2147 = vmatpush1.msra.mxu0 0.0
    %2148 = vmatprep.subr.mxu0 0.0
    %2149 = vmatpush1.msra.mxu0 0.0
    %2150 = vmatprep.subr.mxu0 0.0
    %2151 = vmatpush1.msra.mxu0 0.0
    %2152 = vmatprep.subr.mxu0 0.0
    %2153 = vmatpush1.msra.mxu0 0.0
    %2154 = vmatprep.subr.mxu0 0.0
    %2155 = vmatpush1.msra.mxu0 0.0
    %2156 = vmatprep.subr.mxu0 0.0
    %2157 = vmatpush1.msra.mxu0 0.0
    %2158 = vmatprep.subr.mxu0 0.0
    %2159 = vmatpush1.msra.mxu0 0.0
    %2160 = vmatprep.subr.mxu0 0.0
    %2161 = vmatpush1.msra.mxu0 0.0
    %2162 = vmatprep.subr.mxu0 0.0
    %2163 = vmatpush1.msra.mxu0 0.0
    %2164 = vmatprep.subr.mxu0 0.0
    %2165 = vmatpush1.msra.mxu0 0.0
    %2166 = vmatprep.subr.mxu0 0.0
    %2167 = vmatpush1.msra.mxu0 0.0
    %2168 = vmatprep.subr.mxu0 0.0
    %2169 = vmatpush1.msra.mxu0 0.0
    %2170 = vmatprep.subr.mxu0 0.0
    %2171 = vmatpush1.msra.mxu0 0.0
    %2172 = vmatprep.subr.mxu0 0.0
    %2173 = vmatpush1.msra.mxu0 0.0
    %2174 = vmatprep.mubr.f32.mxu0 0.0
    %2175 = vmatmul.mubr.f32.gmra.mrb[0].mxu0 %v2107
    %v2176 = vpop.f32.mrb[0].mxu0
    %v2177 = vadd.f32 0.0, %v2176
    %v2178 = vpop.f32.mrb[0].mxu0
    %2179 = vdwg.mxu0
    %v2180 = vadd.f32 %v2109, %v2177
    %v2181 = vmax.f32 %v2180, 0.0
    %s2182 = scalar_lea.vmem [#allocation3], 192
    %v2183 = vld [vmem:[%s2182] sm:$0xff]
    %2184 = vmatprep.subr.mxu0 0.0
    %2185 = vmatpush1.msra.mxu0 %v392
    %2186 = vmatprep.subr.mxu0 0.0
    %2187 = vmatpush1.msra.mxu0 %v393
    %2188 = vmatprep.subr.mxu0 0.0
    %2189 = vmatpush1.msra.mxu0 %v394
    %2190 = vmatprep.subr.mxu0 0.0
    %2191 = vmatpush1.msra.mxu0 %v395
    %2192 = vmatprep.subr.mxu0 0.0
    %2193 = vmatpush1.msra.mxu0 %v396
    %2194 = vmatprep.subr.mxu0 0.0
    %2195 = vmatpush1.msra.mxu0 %v397
    %2196 = vmatprep.subr.mxu0 0.0
    %2197 = vmatpush1.msra.mxu0 %v398
    %2198 = vmatprep.subr.mxu0 0.0
    %2199 = vmatpush1.msra.mxu0 %v399
    %2200 = vmatprep.subr.mxu0 0.0
    %2201 = vmatpush1.msra.mxu0 %v400
    %2202 = vmatprep.subr.mxu0 0.0
    %2203 = vmatpush1.msra.mxu0 %v401
    %2204 = vmatprep.subr.mxu0 0.0
    %2205 = vmatpush1.msra.mxu0 %v402
    %2206 = vmatprep.subr.mxu0 0.0
    %2207 = vmatpush1.msra.mxu0 %v403
    %2208 = vmatprep.subr.mxu0 0.0
    %2209 = vmatpush1.msra.mxu0 %v404
    %2210 = vmatprep.subr.mxu0 0.0
    %2211 = vmatpush1.msra.mxu0 %v405
    %2212 = vmatprep.subr.mxu0 0.0
    %2213 = vmatpush1.msra.mxu0 %v406
    %2214 = vmatprep.subr.mxu0 0.0
    %2215 = vmatpush1.msra.mxu0 %v407
    %2216 = vmatprep.subr.mxu0 0.0
    %2217 = vmatpush1.msra.mxu0 0.0
    %2218 = vmatprep.subr.mxu0 0.0
    %2219 = vmatpush1.msra.mxu0 0.0
    %2220 = vmatprep.subr.mxu0 0.0
    %2221 = vmatpush1.msra.mxu0 0.0
    %2222 = vmatprep.subr.mxu0 0.0
    %2223 = vmatpush1.msra.mxu0 0.0
    %2224 = vmatprep.subr.mxu0 0.0
    %2225 = vmatpush1.msra.mxu0 0.0
    %2226 = vmatprep.subr.mxu0 0.0
    %2227 = vmatpush1.msra.mxu0 0.0
    %2228 = vmatprep.subr.mxu0 0.0
    %2229 = vmatpush1.msra.mxu0 0.0
    %2230 = vmatprep.subr.mxu0 0.0
    %2231 = vmatpush1.msra.mxu0 0.0
    %2232 = vmatprep.subr.mxu0 0.0
    %2233 = vmatpush1.msra.mxu0 0.0
    %2234 = vmatprep.subr.mxu0 0.0
    %2235 = vmatpush1.msra.mxu0 0.0
    %2236 = vmatprep.subr.mxu0 0.0
    %2237 = vmatpush1.msra.mxu0 0.0
    %2238 = vmatprep.subr.mxu0 0.0
    %2239 = vmatpush1.msra.mxu0 0.0
    %2240 = vmatprep.subr.mxu0 0.0
    %2241 = vmatpush1.msra.mxu0 0.0
    %2242 = vmatprep.subr.mxu0 0.0
    %2243 = vmatpush1.msra.mxu0 0.0
    %2244 = vmatprep.subr.mxu0 0.0
    %2245 = vmatpush1.msra.mxu0 0.0
    %2246 = vmatprep.subr.mxu0 0.0
    %2247 = vmatpush1.msra.mxu0 0.0
    %2248 = vmatprep.mubr.f32.mxu0 0.0
    %2249 = vmatmul.mubr.f32.gmra.mrb[0].mxu0 %v2181
    %v2250 = vpop.f32.mrb[0].mxu0
    %v2251 = vadd.f32 0.0, %v2250
    %v2252 = vpop.f32.mrb[0].mxu0
    %2253 = vdwg.mxu0
    %v2254 = vadd.f32 %v2183, %v2251
    %v2255 = vmax.f32 %v2254, 0.0
    %s2256 = scalar_lea.vmem [#allocation3], 200
    %v2257 = vld [vmem:[%s2256] sm:$0xff]
    %2258 = vmatprep.subr.mxu0 0.0
    %2259 = vmatpush1.msra.mxu0 %v392
    %2260 = vmatprep.subr.mxu0 0.0
    %2261 = vmatpush1.msra.mxu0 %v393
    %2262 = vmatprep.subr.mxu0 0.0
    %2263 = vmatpush1.msra.mxu0 %v394
    %2264 = vmatprep.subr.mxu0 0.0
    %2265 = vmatpush1.msra.mxu0 %v395
    %2266 = vmatprep.subr.mxu0 0.0
    %2267 = vmatpush1.msra.mxu0 %v396
    %2268 = vmatprep.subr.mxu0 0.0
    %2269 = vmatpush1.msra.mxu0 %v397
    %2270 = vmatprep.subr.mxu0 0.0
    %2271 = vmatpush1.msra.mxu0 %v398
    %2272 = vmatprep.subr.mxu0 0.0
    %2273 = vmatpush1.msra.mxu0 %v399
    %2274 = vmatprep.subr.mxu0 0.0
    %2275 = vmatpush1.msra.mxu0 %v400
    %2276 = vmatprep.subr.mxu0 0.0
    %2277 = vmatpush1.msra.mxu0 %v401
    %2278 = vmatprep.subr.mxu0 0.0
    %2279 = vmatpush1.msra.mxu0 %v402
    %2280 = vmatprep.subr.mxu0 0.0
    %2281 = vmatpush1.msra.mxu0 %v403
    %2282 = vmatprep.subr.mxu0 0.0
    %2283 = vmatpush1.msra.mxu0 %v404
    %2284 = vmatprep.subr.mxu0 0.0
    %2285 = vmatpush1.msra.mxu0 %v405
    %2286 = vmatprep.subr.mxu0 0.0
    %2287 = vmatpush1.msra.mxu0 %v406
    %2288 = vmatprep.subr.mxu0 0.0
    %2289 = vmatpush1.msra.mxu0 %v407
    %2290 = vmatprep.subr.mxu0 0.0
    %2291 = vmatpush1.msra.mxu0 0.0
    %2292 = vmatprep.subr.mxu0 0.0
    %2293 = vmatpush1.msra.mxu0 0.0
    %2294 = vmatprep.subr.mxu0 0.0
    %2295 = vmatpush1.msra.mxu0 0.0
    %2296 = vmatprep.subr.mxu0 0.0
    %2297 = vmatpush1.msra.mxu0 0.0
    %2298 = vmatprep.subr.mxu0 0.0
    %2299 = vmatpush1.msra.mxu0 0.0
    %2300 = vmatprep.subr.mxu0 0.0
    %2301 = vmatpush1.msra.mxu0 0.0
    %2302 = vmatprep.subr.mxu0 0.0
    %2303 = vmatpush1.msra.mxu0 0.0
    %2304 = vmatprep.subr.mxu0 0.0
    %2305 = vmatpush1.msra.mxu0 0.0
    %2306 = vmatprep.subr.mxu0 0.0
    %2307 = vmatpush1.msra.mxu0 0.0
    %2308 = vmatprep.subr.mxu0 0.0
    %2309 = vmatpush1.msra.mxu0 0.0
    %2310 = vmatprep.subr.mxu0 0.0
    %2311 = vmatpush1.msra.mxu0 0.0
    %2312 = vmatprep.subr.mxu0 0.0
    %2313 = vmatpush1.msra.mxu0 0.0
    %2314 = vmatprep.subr.mxu0 0.0
    %2315 = vmatpush1.msra.mxu0 0.0
    %2316 = vmatprep.subr.mxu0 0.0
    %2317 = vmatpush1.msra.mxu0 0.0
    %2318 = vmatprep.subr.mxu0 0.0
    %2319 = vmatpush1.msra.mxu0 0.0
    %2320 = vmatprep.subr.mxu0 0.0
    %2321 = vmatpush1.msra.mxu0 0.0
    %2322 = vmatprep.mubr.f32.mxu0 0.0
    %2323 = vmatmul.mubr.f32.gmra.mrb[0].mxu0 %v2255
    %v2324 = vpop.f32.mrb[0].mxu0
    %v2325 = vadd.f32 0.0, %v2324
    %v2326 = vpop.f32.mrb[0].mxu0
    %2327 = vdwg.mxu0
    %v2328 = vadd.f32 %v2257, %v2325
    %v2329 = vmax.f32 %v2328, 0.0
    %s2330 = scalar_lea.vmem [#allocation3], 208
    %v2331 = vld [vmem:[%s2330] sm:$0xff]
    %2332 = vmatprep.subr.mxu0 0.0
    %2333 = vmatpush1.msra.mxu0 %v392
    %2334 = vmatprep.subr.mxu0 0.0
    %2335 = vmatpush1.msra.mxu0 %v393
    %2336 = vmatprep.subr.mxu0 0.0
    %2337 = vmatpush1.msra.mxu0 %v394
    %2338 = vmatprep.subr.mxu0 0.0
    %2339 = vmatpush1.msra.mxu0 %v395
    %2340 = vmatprep.subr.mxu0 0.0
    %2341 = vmatpush1.msra.mxu0 %v396
    %2342 = vmatprep.subr.mxu0 0.0
    %2343 = vmatpush1.msra.mxu0 %v397
    %2344 = vmatprep.subr.mxu0 0.0
    %2345 = vmatpush1.msra.mxu0 %v398
    %2346 = vmatprep.subr.mxu0 0.0
    %2347 = vmatpush1.msra.mxu0 %v399
    %2348 = vmatprep.subr.mxu0 0.0
    %2349 = vmatpush1.msra.mxu0 %v400
    %2350 = vmatprep.subr.mxu0 0.0
    %2351 = vmatpush1.msra.mxu0 %v401
    %2352 = vmatprep.subr.mxu0 0.0
    %2353 = vmatpush1.msra.mxu0 %v402
    %2354 = vmatprep.subr.mxu0 0.0
    %2355 = vmatpush1.msra.mxu0 %v403
    %2356 = vmatprep.subr.mxu0 0.0
    %2357 = vmatpush1.msra.mxu0 %v404
    %2358 = vmatprep.subr.mxu0 0.0
    %2359 = vmatpush1.msra.mxu0 %v405
    %2360 = vmatprep.subr.mxu0 0.0
    %2361 = vmatpush1.msra.mxu0 %v406
    %2362 = vmatprep.subr.mxu0 0.0
    %2363 = vmatpush1.msra.mxu0 %v407
    %2364 = vmatprep.subr.mxu0 0.0
    %2365 = vmatpush1.msra.mxu0 0.0
    %2366 = vmatprep.subr.mxu0 0.0
    %2367 = vmatpush1.msra.mxu0 0.0
    %2368 = vmatprep.subr.mxu0 0.0
    %2369 = vmatpush1.msra.mxu0 0.0
    %2370 = vmatprep.subr.mxu0 0.0
    %2371 = vmatpush1.msra.mxu0 0.0
    %2372 = vmatprep.subr.mxu0 0.0
    %2373 = vmatpush1.msra.mxu0 0.0
    %2374 = vmatprep.subr.mxu0 0.0
    %2375 = vmatpush1.msra.mxu0 0.0
    %2376 = vmatprep.subr.mxu0 0.0
    %2377 = vmatpush1.msra.mxu0 0.0
    %2378 = vmatprep.subr.mxu0 0.0
    %2379 = vmatpush1.msra.mxu0 0.0
    %2380 = vmatprep.subr.mxu0 0.0
    %2381 = vmatpush1.msra.mxu0 0.0
    %2382 = vmatprep.subr.mxu0 0.0
    %2383 = vmatpush1.msra.mxu0 0.0
    %2384 = vmatprep.subr.mxu0 0.0
    %2385 = vmatpush1.msra.mxu0 0.0
    %2386 = vmatprep.subr.mxu0 0.0
    %2387 = vmatpush1.msra.mxu0 0.0
    %2388 = vmatprep.subr.mxu0 0.0
    %2389 = vmatpush1.msra.mxu0 0.0
    %2390 = vmatprep.subr.mxu0 0.0
    %2391 = vmatpush1.msra.mxu0 0.0
    %2392 = vmatprep.subr.mxu0 0.0
    %2393 = vmatpush1.msra.mxu0 0.0
    %2394 = vmatprep.subr.mxu0 0.0
    %2395 = vmatpush1.msra.mxu0 0.0
    %2396 = vmatprep.mubr.f32.mxu0 0.0
    %2397 = vmatmul.mubr.f32.gmra.mrb[0].mxu0 %v2329
    %v2398 = vpop.f32.mrb[0].mxu0
    %v2399 = vadd.f32 0.0, %v2398
    %v2400 = vpop.f32.mrb[0].mxu0
    %2401 = vdwg.mxu0
    %v2402 = vadd.f32 %v2331, %v2399
    %v2403 = vmax.f32 %v2402, 0.0
    %s2404 = scalar_lea.vmem [#allocation3], 216
    %v2405 = vld [vmem:[%s2404] sm:$0xff]
    %2406 = vmatprep.subr.mxu0 0.0
    %2407 = vmatpush1.msra.mxu0 %v392
    %2408 = vmatprep.subr.mxu0 0.0
    %2409 = vmatpush1.msra.mxu0 %v393
    %2410 = vmatprep.subr.mxu0 0.0
    %2411 = vmatpush1.msra.mxu0 %v394
    %2412 = vmatprep.subr.mxu0 0.0
    %2413 = vmatpush1.msra.mxu0 %v395
    %2414 = vmatprep.subr.mxu0 0.0
    %2415 = vmatpush1.msra.mxu0 %v396
    %2416 = vmatprep.subr.mxu0 0.0
    %2417 = vmatpush1.msra.mxu0 %v397
    %2418 = vmatprep.subr.mxu0 0.0
    %2419 = vmatpush1.msra.mxu0 %v398
    %2420 = vmatprep.subr.mxu0 0.0
    %2421 = vmatpush1.msra.mxu0 %v399
    %2422 = vmatprep.subr.mxu0 0.0
    %2423 = vmatpush1.msra.mxu0 %v400
    %2424 = vmatprep.subr.mxu0 0.0
    %2425 = vmatpush1.msra.mxu0 %v401
    %2426 = vmatprep.subr.mxu0 0.0
    %2427 = vmatpush1.msra.mxu0 %v402
    %2428 = vmatprep.subr.mxu0 0.0
    %2429 = vmatpush1.msra.mxu0 %v403
    %2430 = vmatprep.subr.mxu0 0.0
    %2431 = vmatpush1.msra.mxu0 %v404
    %2432 = vmatprep.subr.mxu0 0.0
    %2433 = vmatpush1.msra.mxu0 %v405
    %2434 = vmatprep.subr.mxu0 0.0
    %2435 = vmatpush1.msra.mxu0 %v406
    %2436 = vmatprep.subr.mxu0 0.0
    %2437 = vmatpush1.msra.mxu0 %v407
    %2438 = vmatprep.subr.mxu0 0.0
    %2439 = vmatpush1.msra.mxu0 0.0
    %2440 = vmatprep.subr.mxu0 0.0
    %2441 = vmatpush1.msra.mxu0 0.0
    %2442 = vmatprep.subr.mxu0 0.0
    %2443 = vmatpush1.msra.mxu0 0.0
    %2444 = vmatprep.subr.mxu0 0.0
    %2445 = vmatpush1.msra.mxu0 0.0
    %2446 = vmatprep.subr.mxu0 0.0
    %2447 = vmatpush1.msra.mxu0 0.0
    %2448 = vmatprep.subr.mxu0 0.0
    %2449 = vmatpush1.msra.mxu0 0.0
    %2450 = vmatprep.subr.mxu0 0.0
    %2451 = vmatpush1.msra.mxu0 0.0
    %2452 = vmatprep.subr.mxu0 0.0
    %2453 = vmatpush1.msra.mxu0 0.0
    %2454 = vmatprep.subr.mxu0 0.0
    %2455 = vmatpush1.msra.mxu0 0.0
    %2456 = vmatprep.subr.mxu0 0.0
    %2457 = vmatpush1.msra.mxu0 0.0
    %2458 = vmatprep.subr.mxu0 0.0
    %2459 = vmatpush1.msra.mxu0 0.0
    %2460 = vmatprep.subr.mxu0 0.0
    %2461 = vmatpush1.msra.mxu0 0.0
    %2462 = vmatprep.subr.mxu0 0.0
    %2463 = vmatpush1.msra.mxu0 0.0
    %2464 = vmatprep.subr.mxu0 0.0
    %2465 = vmatpush1.msra.mxu0 0.0
    %2466 = vmatprep.subr.mxu0 0.0
    %2467 = vmatpush1.msra.mxu0 0.0
    %2468 = vmatprep.subr.mxu0 0.0
    %2469 = vmatpush1.msra.mxu0 0.0
    %2470 = vmatprep.mubr.f32.mxu0 0.0
    %2471 = vmatmul.mubr.f32.gmra.mrb[0].mxu0 %v2403
    %v2472 = vpop.f32.mrb[0].mxu0
    %v2473 = vadd.f32 0.0, %v2472
    %v2474 = vpop.f32.mrb[0].mxu0
    %2475 = vdwg.mxu0
    %v2476 = vadd.f32 %v2405, %v2473
    %v2477 = vmax.f32 %v2476, 0.0
    %2478 = vst [vmem:[#allocation2] sm:$0xff] %v2477
    // Predicated region
    $region30: #{tpu_custom_call.1} parent=1 // pred_check
      %p2479 = pneg %p24
    $region31: #{tpu_custom_call.1} parent=1 // pred_check_branch
      %2481 = sbr.rel (%p2479) target = $region33
    $region32: #{tpu_custom_call.1} parent=1 // pred_region
      %v2482 = vld [vmem:[#allocation2] sm:$0xff]
      %v2483 = vld [vmem:[%s4] sm:$0xff]
      %v2484 = vld [vmem:[%s4 + $0x8] sm:$0xff]
      %v2485 = vld [vmem:[%s4 + $0x10] sm:$0xff]
      %v2486 = vld [vmem:[%s4 + $0x18] sm:$0xff]
      %v2487 = vld [vmem:[%s4 + $0x20] sm:$0xff]
      %v2488 = vld [vmem:[%s4 + $0x28] sm:$0xff]
      %v2489 = vld [vmem:[%s4 + $0x30] sm:$0xff]
      %v2490 = vld [vmem:[%s4 + $0x38] sm:$0xff]
      %v2491 = vld [vmem:[%s4 + $0x40] sm:$0xff]
      %v2492 = vld [vmem:[%s4 + $0x48] sm:$0xff]
      %v2493 = vld [vmem:[%s4 + $0x50] sm:$0xff]
      %v2494 = vld [vmem:[%s4 + $0x58] sm:$0xff]
      %v2495 = vld [vmem:[%s4 + $0x60] sm:$0xff]
      %v2496 = vld [vmem:[%s4 + $0x68] sm:$0xff]
      %v2497 = vld [vmem:[%s4 + $0x70] sm:$0xff]
      %v2498 = vld [vmem:[%s4 + $0x78] sm:$0xff]
      %v2499 = vld [vmem:[%s5] sm:$0x1]
      %v2501 = vlaneseq
      %v2502 = vshrl.u32 %v2501, 7
      %v2503 = vsub.s32 0, %v2502
      %v2504 = vrot.slane %v2499, %v2503
      %2506 = vmatprep.subr.mxu0 0.0
      %2507 = vmatpush1.msra.mxu0 %v2483
      %2508 = vmatprep.subr.mxu0 0.0
      %2509 = vmatpush1.msra.mxu0 %v2484
      %2510 = vmatprep.subr.mxu0 0.0
      %2511 = vmatpush1.msra.mxu0 %v2485
      %2512 = vmatprep.subr.mxu0 0.0
      %2513 = vmatpush1.msra.mxu0 %v2486
      %2514 = vmatprep.subr.mxu0 0.0
      %2515 = vmatpush1.msra.mxu0 %v2487
      %2516 = vmatprep.subr.mxu0 0.0
      %2517 = vmatpush1.msra.mxu0 %v2488
      %2518 = vmatprep.subr.mxu0 0.0
      %2519 = vmatpush1.msra.mxu0 %v2489
      %2520 = vmatprep.subr.mxu0 0.0
      %2521 = vmatpush1.msra.mxu0 %v2490
      %2522 = vmatprep.subr.mxu0 0.0
      %2523 = vmatpush1.msra.mxu0 %v2491
      %2524 = vmatprep.subr.mxu0 0.0
      %2525 = vmatpush1.msra.mxu0 %v2492
      %2526 = vmatprep.subr.mxu0 0.0
      %2527 = vmatpush1.msra.mxu0 %v2493
      %2528 = vmatprep.subr.mxu0 0.0
      %2529 = vmatpush1.msra.mxu0 %v2494
      %2530 = vmatprep.subr.mxu0 0.0
      %2531 = vmatpush1.msra.mxu0 %v2495
      %2532 = vmatprep.subr.mxu0 0.0
      %2533 = vmatpush1.msra.mxu0 %v2496
      %2534 = vmatprep.subr.mxu0 0.0
      %2535 = vmatpush1.msra.mxu0 %v2497
      %2536 = vmatprep.subr.mxu0 0.0
      %2537 = vmatpush1.msra.mxu0 %v2498
      %2538 = vmatprep.subr.mxu0 0.0
      %2539 = vmatpush1.msra.mxu0 0.0
      %2540 = vmatprep.subr.mxu0 0.0
      %2541 = vmatpush1.msra.mxu0 0.0
      %2542 = vmatprep.subr.mxu0 0.0
      %2543 = vmatpush1.msra.mxu0 0.0
      %2544 = vmatprep.subr.mxu0 0.0
      %2545 = vmatpush1.msra.mxu0 0.0
      %2546 = vmatprep.subr.mxu0 0.0
      %2547 = vmatpush1.msra.mxu0 0.0
      %2548 = vmatprep.subr.mxu0 0.0
      %2549 = vmatpush1.msra.mxu0 0.0
      %2550 = vmatprep.subr.mxu0 0.0
      %2551 = vmatpush1.msra.mxu0 0.0
      %2552 = vmatprep.subr.mxu0 0.0
      %2553 = vmatpush1.msra.mxu0 0.0
      %2554 = vmatprep.subr.mxu0 0.0
      %2555 = vmatpush1.msra.mxu0 0.0
      %2556 = vmatprep.subr.mxu0 0.0
      %2557 = vmatpush1.msra.mxu0 0.0
      %2558 = vmatprep.subr.mxu0 0.0
      %2559 = vmatpush1.msra.mxu0 0.0
      %2560 = vmatprep.subr.mxu0 0.0
      %2561 = vmatpush1.msra.mxu0 0.0
      %2562 = vmatprep.subr.mxu0 0.0
      %2563 = vmatpush1.msra.mxu0 0.0
      %2564 = vmatprep.subr.mxu0 0.0
      %2565 = vmatpush1.msra.mxu0 0.0
      %2566 = vmatprep.subr.mxu0 0.0
      %2567 = vmatpush1.msra.mxu0 0.0
      %2568 = vmatprep.subr.mxu0 0.0
      %2569 = vmatpush1.msra.mxu0 0.0
      %2570 = vmatprep.mubr.f32.mxu0 0.0
      %2571 = vmatmul.mubr.f32.gmra.mrb[0].mxu0 %v2482
      %v2572 = vpop.f32.mrb[0].mxu0
      %v2573 = vadd.f32 %v2504, %v2572
      %v2574 = vpop.f32.mrb[0].mxu0
      %2575 = vdwg.mxu0
      %vm2576 = vcmask 80896
      %2577 = vst.msk [vmem:[#allocation4] sm:$0xff] %vm2576, %v2573
    $region33: #{tpu_custom_call.1} parent=1 // pred_fallthru
      _
    // Predicated region
    $region34: #{tpu_custom_call.1} parent=1 // pred_check
      _
    $region35: #{tpu_custom_call.1} parent=1 // pred_check_branch
      %2579 = sbr.rel (0) target = $region37
    $region36: #{tpu_custom_call.1} parent=1 // pred_region
      %s2581 = ssub.s32 128, 128
      %2582 = vsyncadd [#allocation5], %s2581
      %s2584 = sshll.u32 [#allocation4], 4
      %s2585 = int_to_ptr.vmem [resolvable:$true] %s2584
      %2587 = dma.vmem_to_hbm [thread:$0]  %s2585, 128, %s6, [#allocation5]
    $region37: #{tpu_custom_call.1} parent=1 // pred_fallthru
      _
    // Predicated region
    $region38: #{tpu_custom_call.1} parent=1 // pred_check
      _
    $region39: #{tpu_custom_call.1} parent=1 // pred_check_branch
      %2589 = sbr.rel (0) target = $region41
    $region40: #{tpu_custom_call.1} parent=1 // pred_region
      %2590 = dma.done [#allocation5], 128
    $region41: #{tpu_custom_call.1} parent=1 // pred_fallthru
      _
    %2591 = vsyncpa [#allocation5], 1

</llo_original>
